<compile_context>
chip_gen: v7x
topology: tpu7x:2x2x1
jax: 0.10.0
libtpu: 0.0.40
codegen_flags: <defaults>
</compile_context>

<pallas_src>
import jax
import jax.numpy as jnp
from jax import lax
from jax.experimental import pallas as pl
from jax.experimental.pallas import tpu as pltpu


def _round_up(a: int, m: int) -> int:
    return ((a + m - 1) // m) * m


def basic_conv3d(x, weight, *, tile_n=768):
    """Forward of BasicConv3d: Conv3d(k=3, stride=1, pad=1, bias=False).

    x:      [n, c_in, s, h, w]     float32
    weight: [c_out, c_in, 3, 3, 3] float32
    returns [n, c_out, s, h, w]    float32
    """
    n, c_in, s, h, w = x.shape
    c_out = weight.shape[0]
    assert weight.shape == (c_out, c_in, 3, 3, 3)

    sp, hp, wp = s + 2, h + 2, w + 2          # zero-padded spatial extents
    p_flat = sp * hp * wp                     # flattened padded volume length
    max_off = 2 * hp * wp + 2 * wp + 2        # largest tap offset (kd=kh=kw=2)

    # Lane tile: multiple of 128, at least as wide as the halo, small enough
    # that each batch element gets several pipelined grid steps.
    tn = max(_round_up(tile_n, 128), _round_up(max_off, 128))
    n_tiles = pl.cdiv(p_flat, tn)
    # One extra zero block so the "j + 1" (halo) BlockSpec never runs off the end.
    l_pad = (n_tiles + 1) * tn

    # ---- layout plumbing in XLA (O(1x) input bytes, no 27x expansion) -------
    xp = jnp.pad(x, ((0, 0), (0, 0), (1, 1), (1, 1), (1, 1)))
    xflat = xp.reshape(n, c_in, p_flat).astype(jnp.bfloat16)
    xflat = jnp.pad(xflat, ((0, 0), (0, 0), (0, l_pad - p_flat)))

    # weight -> [27, c_out, c_in], tap-major in (kd, kh, kw) row-major order.
    w_taps = jnp.transpose(
        weight.reshape(c_out, c_in, 27), (2, 0, 1)).astype(jnp.bfloat16)

    def conv_kernel(xa_ref, xb_ref, w_ref, o_ref, xwin_ref):
        # xa_ref: (1, c_in, tn)   flat-input tile j          (bf16)
        # xb_ref: (1, c_in, tn)   flat-input tile j+1 (halo) (bf16)
        # w_ref : (27, c_out, c_in)                          (bf16, resident)
        # o_ref : (1, c_out, tn)                             (f32, lane-dense)
        # xwin  : (c_in, tn + max_off) VMEM scratch          (bf16)
        xwin_ref[:, :tn] = xa_ref[0]
        xwin_ref[:, tn:] = xb_ref[0, :, :max_off]

        acc = jnp.zeros((c_out, tn), jnp.float32)
        t = 0
        for kd in range(3):                      # statically unrolled taps
            for kh in range(3):
                for kw in range(3):
                    off = kd * hp * wp + kh * wp + kw
                    rhs = xwin_ref[:, off:off + tn]          # (c_in, tn) bf16
                    acc = acc + jnp.dot(
                        w_ref[t], rhs, preferred_element_type=jnp.float32)
                    t += 1
        o_ref[0] = acc.astype(o_ref.dtype)

    out_flat = pl.pallas_call(
        conv_kernel,
        out_shape=jax.ShapeDtypeStruct((n, c_out, n_tiles * tn), jnp.float32),
        grid_spec=pltpu.PrefetchScalarGridSpec(
            num_scalar_prefetch=0,
            grid=(n, n_tiles),
            in_specs=[
                pl.BlockSpec((1, c_in, tn), lambda i, j: (i, 0, j)),       # tile j
                pl.BlockSpec((1, c_in, tn), lambda i, j: (i, 0, j + 1)),   # halo
                pl.BlockSpec((27, c_out, c_in), lambda i, j: (0, 0, 0)),   # weight
            ],
            out_specs=pl.BlockSpec((1, c_out, tn), lambda i, j: (i, 0, j)),
            scratch_shapes=[pltpu.VMEM((c_in, tn + max_off), jnp.bfloat16)],
        ),
        compiler_params=pltpu.CompilerParams(
            dimension_semantics=("parallel", "parallel"),
            vmem_limit_bytes=32 * 1024 * 1024,   # tiny footprint; safe on v5e/v6e/v7x
        ),
    )(xflat, xflat, w_taps)

    # Discard the padded-border / tail garbage positions.
    out = out_flat[:, :, :p_flat].reshape(n, c_out, sp, hp, wp)
    return out[:, :, :s, :h, :w]


if __name__ == "__main__":
    key = jax.random.PRNGKey(0)
    kx, kw = jax.random.split(key)

    # Small shapes consistent with the module: [n, c, s, h, w].
    n, c_in, c_out = 2, 4, 8
    s, h, w = 8, 16, 16

    x = jax.random.normal(kx, (n, c_in, s, h, w), dtype=jnp.float32)

    # Deterministic kaiming-uniform-style init like nn.Conv3d's default.
    fan_in = c_in * 27
    bound = (1.0 / fan_in) ** 0.5
    weight = jax.random.uniform(
        kw, (c_out, c_in, 3, 3, 3), minval=-bound, maxval=bound,
        dtype=jnp.float32)

    out = basic_conv3d(x, weight)
    jax.block_until_ready(out)

    # Pure-JAX reference: same cross-correlation, stride 1, padding 1 (f32).
    ref = lax.conv_general_dilated(
        x, weight,
        window_strides=(1, 1, 1),
        padding=((1, 1), (1, 1), (1, 1)),
        dimension_numbers=("NCDHW", "OIDHW", "NCDHW"),
        precision=lax.Precision.HIGHEST,
    )

    assert out.shape == (n, c_out, s, h, w)
    err = jnp.max(jnp.abs(out - ref)) / jnp.maximum(jnp.max(jnp.abs(ref)), 1e-6)
    assert err < 2e-2, f"normalized max error too large: {err}"
    print("KERNEL_OK")
</pallas_src>

<mosaic_0001>
module attributes {stable_mosaic.version = 11 : i64} {
  func.func @conv_kernel(%arg0: i32, %arg1: i32, %arg2: memref<1x4x768xbf16, #tpu.memory_space<vmem>>, %arg3: memref<1x4x768xbf16, #tpu.memory_space<vmem>>, %arg4: memref<27x8x4xbf16, #tpu.memory_space<vmem>>, %arg5: memref<1x8x768xf32, #tpu.memory_space<vmem>>, %arg6: memref<4x1454xbf16, #tpu.memory_space<vmem>>) attributes {dimension_semantics = [#tpu.dimension_semantics<parallel>, #tpu.dimension_semantics<parallel>], iteration_bounds = array<i64: 2, 5>, scalar_prefetch = 0 : i64, scratch_operands = 1 : i64, tpu.core_type = #tpu.core_type<tc>, window_params = [{transform_indices = @transform_0, window_bounds = array<i64: 1, 4, 768>}, {transform_indices = @transform_1, window_bounds = array<i64: 1, 4, 768>}, {pipeline_mode = #tpu.pipeline_mode<synchronous>, transform_indices = @transform_2, window_bounds = array<i64: 27, 8, 4>}, {transform_indices = @transform_3, window_bounds = array<i64: 1, 8, 768>}]} {
    %c0 = arith.constant 0 : index
    %c0_0 = arith.constant 0 : index
    %c0_1 = arith.constant 0 : index
    %0 = vector.load %arg2[%c0, %c0_0, %c0_1] : memref<1x4x768xbf16, #tpu.memory_space<vmem>>, vector<1x4x768xbf16>
    %1 = vector.shape_cast %0 : vector<1x4x768xbf16> to vector<4x768xbf16>
    %c0_2 = arith.constant 0 : index
    %c0_3 = arith.constant 0 : index
    %2 = vector.load %arg6[%c0_2, %c0_3] : memref<4x1454xbf16, #tpu.memory_space<vmem>>, vector<4x768xbf16>
    tpu.vector_store %arg6[%c0_2, %c0_3], %1 {strides = array<i32>} : memref<4x1454xbf16, #tpu.memory_space<vmem>>, vector<4x768xbf16>,
    %c0_4 = arith.constant 0 : index
    %c0_5 = arith.constant 0 : index
    %c0_6 = arith.constant 0 : index
    %3 = vector.load %arg3[%c0_4, %c0_5, %c0_6] : memref<1x4x768xbf16, #tpu.memory_space<vmem>>, vector<1x4x686xbf16>
    %4 = vector.shape_cast %3 : vector<1x4x686xbf16> to vector<4x686xbf16>
    %c0_7 = arith.constant 0 : index
    %c768 = arith.constant 768 : index
    %5 = vector.load %arg6[%c0_7, %c768] : memref<4x1454xbf16, #tpu.memory_space<vmem>>, vector<4x686xbf16>
    tpu.vector_store %arg6[%c0_7, %c768], %4 {strides = array<i32>} : memref<4x1454xbf16, #tpu.memory_space<vmem>>, vector<4x686xbf16>,
    %cst = arith.constant 0.000000e+00 : f32
    %6 = vector.broadcast %cst : f32 to vector<8x768xf32>
    %c0_8 = arith.constant 0 : index
    %c0_9 = arith.constant 0 : index
    %7 = vector.load %arg6[%c0_8, %c0_9] : memref<4x1454xbf16, #tpu.memory_space<vmem>>, vector<4x768xbf16>
    %c0_10 = arith.constant 0 : index
    %c0_11 = arith.constant 0 : index
    %c0_12 = arith.constant 0 : index
    %8 = vector.load %arg4[%c0_10, %c0_11, %c0_12] : memref<27x8x4xbf16, #tpu.memory_space<vmem>>, vector<1x8x4xbf16>
    %9 = vector.shape_cast %8 : vector<1x8x4xbf16> to vector<8x4xbf16>
    %cst_13 = arith.constant dense<0.000000e+00> : vector<8x768xf32>
    %10 = tpu.matmul %9, %7, %cst_13 {dimension_numbers = #tpu.dot_dimension_numbers<[1], [0], [0], [1], [0, 0, 1, 1], [], []>} : vector<8x4xbf16>, vector<4x768xbf16>, vector<8x768xf32> -> vector<8x768xf32>
    %11 = arith.addf %6, %10 : vector<8x768xf32>
    %c0_14 = arith.constant 0 : index
    %c1 = arith.constant 1 : index
    %12 = vector.load %arg6[%c0_14, %c1] : memref<4x1454xbf16, #tpu.memory_space<vmem>>, vector<4x768xbf16>
    %c1_15 = arith.constant 1 : index
    %c0_16 = arith.constant 0 : index
    %c0_17 = arith.constant 0 : index
    %13 = vector.load %arg4[%c1_15, %c0_16, %c0_17] : memref<27x8x4xbf16, #tpu.memory_space<vmem>>, vector<1x8x4xbf16>
    %14 = vector.shape_cast %13 : vector<1x8x4xbf16> to vector<8x4xbf16>
    %cst_18 = arith.constant dense<0.000000e+00> : vector<8x768xf32>
    %15 = tpu.matmul %14, %12, %cst_18 {dimension_numbers = #tpu.dot_dimension_numbers<[1], [0], [0], [1], [0, 0, 1, 1], [], []>} : vector<8x4xbf16>, vector<4x768xbf16>, vector<8x768xf32> -> vector<8x768xf32>
    %16 = arith.addf %11, %15 : vector<8x768xf32>
    %c0_19 = arith.constant 0 : index
    %c2 = arith.constant 2 : index
    %17 = vector.load %arg6[%c0_19, %c2] : memref<4x1454xbf16, #tpu.memory_space<vmem>>, vector<4x768xbf16>
    %c2_20 = arith.constant 2 : index
    %c0_21 = arith.constant 0 : index
    %c0_22 = arith.constant 0 : index
    %18 = vector.load %arg4[%c2_20, %c0_21, %c0_22] : memref<27x8x4xbf16, #tpu.memory_space<vmem>>, vector<1x8x4xbf16>
    %19 = vector.shape_cast %18 : vector<1x8x4xbf16> to vector<8x4xbf16>
    %cst_23 = arith.constant dense<0.000000e+00> : vector<8x768xf32>
    %20 = tpu.matmul %19, %17, %cst_23 {dimension_numbers = #tpu.dot_dimension_numbers<[1], [0], [0], [1], [0, 0, 1, 1], [], []>} : vector<8x4xbf16>, vector<4x768xbf16>, vector<8x768xf32> -> vector<8x768xf32>
    %21 = arith.addf %16, %20 : vector<8x768xf32>
    %c0_24 = arith.constant 0 : index
    %c18 = arith.constant 18 : index
    %22 = vector.load %arg6[%c0_24, %c18] : memref<4x1454xbf16, #tpu.memory_space<vmem>>, vector<4x768xbf16>
    %c3 = arith.constant 3 : index
    %c0_25 = arith.constant 0 : index
    %c0_26 = arith.constant 0 : index
    %23 = vector.load %arg4[%c3, %c0_25, %c0_26] : memref<27x8x4xbf16, #tpu.memory_space<vmem>>, vector<1x8x4xbf16>
    %24 = vector.shape_cast %23 : vector<1x8x4xbf16> to vector<8x4xbf16>
    %cst_27 = arith.constant dense<0.000000e+00> : vector<8x768xf32>
    %25 = tpu.matmul %24, %22, %cst_27 {dimension_numbers = #tpu.dot_dimension_numbers<[1], [0], [0], [1], [0, 0, 1, 1], [], []>} : vector<8x4xbf16>, vector<4x768xbf16>, vector<8x768xf32> -> vector<8x768xf32>
    %26 = arith.addf %21, %25 : vector<8x768xf32>
    %c0_28 = arith.constant 0 : index
    %c19 = arith.constant 19 : index
    %27 = vector.load %arg6[%c0_28, %c19] : memref<4x1454xbf16, #tpu.memory_space<vmem>>, vector<4x768xbf16>
    %c4 = arith.constant 4 : index
    %c0_29 = arith.constant 0 : index
    %c0_30 = arith.constant 0 : index
    %28 = vector.load %arg4[%c4, %c0_29, %c0_30] : memref<27x8x4xbf16, #tpu.memory_space<vmem>>, vector<1x8x4xbf16>
    %29 = vector.shape_cast %28 : vector<1x8x4xbf16> to vector<8x4xbf16>
    %cst_31 = arith.constant dense<0.000000e+00> : vector<8x768xf32>
    %30 = tpu.matmul %29, %27, %cst_31 {dimension_numbers = #tpu.dot_dimension_numbers<[1], [0], [0], [1], [0, 0, 1, 1], [], []>} : vector<8x4xbf16>, vector<4x768xbf16>, vector<8x768xf32> -> vector<8x768xf32>
    %31 = arith.addf %26, %30 : vector<8x768xf32>
    %c0_32 = arith.constant 0 : index
    %c20 = arith.constant 20 : index
    %32 = vector.load %arg6[%c0_32, %c20] : memref<4x1454xbf16, #tpu.memory_space<vmem>>, vector<4x768xbf16>
    %c5 = arith.constant 5 : index
    %c0_33 = arith.constant 0 : index
    %c0_34 = arith.constant 0 : index
    %33 = vector.load %arg4[%c5, %c0_33, %c0_34] : memref<27x8x4xbf16, #tpu.memory_space<vmem>>, vector<1x8x4xbf16>
    %34 = vector.shape_cast %33 : vector<1x8x4xbf16> to vector<8x4xbf16>
    %cst_35 = arith.constant dense<0.000000e+00> : vector<8x768xf32>
    %35 = tpu.matmul %34, %32, %cst_35 {dimension_numbers = #tpu.dot_dimension_numbers<[1], [0], [0], [1], [0, 0, 1, 1], [], []>} : vector<8x4xbf16>, vector<4x768xbf16>, vector<8x768xf32> -> vector<8x768xf32>
    %36 = arith.addf %31, %35 : vector<8x768xf32>
    %c0_36 = arith.constant 0 : index
    %c36 = arith.constant 36 : index
    %37 = vector.load %arg6[%c0_36, %c36] : memref<4x1454xbf16, #tpu.memory_space<vmem>>, vector<4x768xbf16>
    %c6 = arith.constant 6 : index
    %c0_37 = arith.constant 0 : index
    %c0_38 = arith.constant 0 : index
    %38 = vector.load %arg4[%c6, %c0_37, %c0_38] : memref<27x8x4xbf16, #tpu.memory_space<vmem>>, vector<1x8x4xbf16>
    %39 = vector.shape_cast %38 : vector<1x8x4xbf16> to vector<8x4xbf16>
    %cst_39 = arith.constant dense<0.000000e+00> : vector<8x768xf32>
    %40 = tpu.matmul %39, %37, %cst_39 {dimension_numbers = #tpu.dot_dimension_numbers<[1], [0], [0], [1], [0, 0, 1, 1], [], []>} : vector<8x4xbf16>, vector<4x768xbf16>, vector<8x768xf32> -> vector<8x768xf32>
    %41 = arith.addf %36, %40 : vector<8x768xf32>
    %c0_40 = arith.constant 0 : index
    %c37 = arith.constant 37 : index
    %42 = vector.load %arg6[%c0_40, %c37] : memref<4x1454xbf16, #tpu.memory_space<vmem>>, vector<4x768xbf16>
    %c7 = arith.constant 7 : index
    %c0_41 = arith.constant 0 : index
    %c0_42 = arith.constant 0 : index
    %43 = vector.load %arg4[%c7, %c0_41, %c0_42] : memref<27x8x4xbf16, #tpu.memory_space<vmem>>, vector<1x8x4xbf16>
    %44 = vector.shape_cast %43 : vector<1x8x4xbf16> to vector<8x4xbf16>
    %cst_43 = arith.constant dense<0.000000e+00> : vector<8x768xf32>
    %45 = tpu.matmul %44, %42, %cst_43 {dimension_numbers = #tpu.dot_dimension_numbers<[1], [0], [0], [1], [0, 0, 1, 1], [], []>} : vector<8x4xbf16>, vector<4x768xbf16>, vector<8x768xf32> -> vector<8x768xf32>
    %46 = arith.addf %41, %45 : vector<8x768xf32>
    %c0_44 = arith.constant 0 : index
    %c38 = arith.constant 38 : index
    %47 = vector.load %arg6[%c0_44, %c38] : memref<4x1454xbf16, #tpu.memory_space<vmem>>, vector<4x768xbf16>
    %c8 = arith.constant 8 : index
    %c0_45 = arith.constant 0 : index
    %c0_46 = arith.constant 0 : index
    %48 = vector.load %arg4[%c8, %c0_45, %c0_46] : memref<27x8x4xbf16, #tpu.memory_space<vmem>>, vector<1x8x4xbf16>
    %49 = vector.shape_cast %48 : vector<1x8x4xbf16> to vector<8x4xbf16>
    %cst_47 = arith.constant dense<0.000000e+00> : vector<8x768xf32>
    %50 = tpu.matmul %49, %47, %cst_47 {dimension_numbers = #tpu.dot_dimension_numbers<[1], [0], [0], [1], [0, 0, 1, 1], [], []>} : vector<8x4xbf16>, vector<4x768xbf16>, vector<8x768xf32> -> vector<8x768xf32>
    %51 = arith.addf %46, %50 : vector<8x768xf32>
    %c0_48 = arith.constant 0 : index
    %c324 = arith.constant 324 : index
    %52 = vector.load %arg6[%c0_48, %c324] : memref<4x1454xbf16, #tpu.memory_space<vmem>>, vector<4x768xbf16>
    %c9 = arith.constant 9 : index
    %c0_49 = arith.constant 0 : index
    %c0_50 = arith.constant 0 : index
    %53 = vector.load %arg4[%c9, %c0_49, %c0_50] : memref<27x8x4xbf16, #tpu.memory_space<vmem>>, vector<1x8x4xbf16>
    %54 = vector.shape_cast %53 : vector<1x8x4xbf16> to vector<8x4xbf16>
    %cst_51 = arith.constant dense<0.000000e+00> : vector<8x768xf32>
    %55 = tpu.matmul %54, %52, %cst_51 {dimension_numbers = #tpu.dot_dimension_numbers<[1], [0], [0], [1], [0, 0, 1, 1], [], []>} : vector<8x4xbf16>, vector<4x768xbf16>, vector<8x768xf32> -> vector<8x768xf32>
    %56 = arith.addf %51, %55 : vector<8x768xf32>
    %c0_52 = arith.constant 0 : index
    %c325 = arith.constant 325 : index
    %57 = vector.load %arg6[%c0_52, %c325] : memref<4x1454xbf16, #tpu.memory_space<vmem>>, vector<4x768xbf16>
    %c10 = arith.constant 10 : index
    %c0_53 = arith.constant 0 : index
    %c0_54 = arith.constant 0 : index
    %58 = vector.load %arg4[%c10, %c0_53, %c0_54] : memref<27x8x4xbf16, #tpu.memory_space<vmem>>, vector<1x8x4xbf16>
    %59 = vector.shape_cast %58 : vector<1x8x4xbf16> to vector<8x4xbf16>
    %cst_55 = arith.constant dense<0.000000e+00> : vector<8x768xf32>
    %60 = tpu.matmul %59, %57, %cst_55 {dimension_numbers = #tpu.dot_dimension_numbers<[1], [0], [0], [1], [0, 0, 1, 1], [], []>} : vector<8x4xbf16>, vector<4x768xbf16>, vector<8x768xf32> -> vector<8x768xf32>
    %61 = arith.addf %56, %60 : vector<8x768xf32>
    %c0_56 = arith.constant 0 : index
    %c326 = arith.constant 326 : index
    %62 = vector.load %arg6[%c0_56, %c326] : memref<4x1454xbf16, #tpu.memory_space<vmem>>, vector<4x768xbf16>
    %c11 = arith.constant 11 : index
    %c0_57 = arith.constant 0 : index
    %c0_58 = arith.constant 0 : index
    %63 = vector.load %arg4[%c11, %c0_57, %c0_58] : memref<27x8x4xbf16, #tpu.memory_space<vmem>>, vector<1x8x4xbf16>
    %64 = vector.shape_cast %63 : vector<1x8x4xbf16> to vector<8x4xbf16>
    %cst_59 = arith.constant dense<0.000000e+00> : vector<8x768xf32>
    %65 = tpu.matmul %64, %62, %cst_59 {dimension_numbers = #tpu.dot_dimension_numbers<[1], [0], [0], [1], [0, 0, 1, 1], [], []>} : vector<8x4xbf16>, vector<4x768xbf16>, vector<8x768xf32> -> vector<8x768xf32>
    %66 = arith.addf %61, %65 : vector<8x768xf32>
    %c0_60 = arith.constant 0 : index
    %c342 = arith.constant 342 : index
    %67 = vector.load %arg6[%c0_60, %c342] : memref<4x1454xbf16, #tpu.memory_space<vmem>>, vector<4x768xbf16>
    %c12 = arith.constant 12 : index
    %c0_61 = arith.constant 0 : index
    %c0_62 = arith.constant 0 : index
    %68 = vector.load %arg4[%c12, %c0_61, %c0_62] : memref<27x8x4xbf16, #tpu.memory_space<vmem>>, vector<1x8x4xbf16>
    %69 = vector.shape_cast %68 : vector<1x8x4xbf16> to vector<8x4xbf16>
    %cst_63 = arith.constant dense<0.000000e+00> : vector<8x768xf32>
    %70 = tpu.matmul %69, %67, %cst_63 {dimension_numbers = #tpu.dot_dimension_numbers<[1], [0], [0], [1], [0, 0, 1, 1], [], []>} : vector<8x4xbf16>, vector<4x768xbf16>, vector<8x768xf32> -> vector<8x768xf32>
    %71 = arith.addf %66, %70 : vector<8x768xf32>
    %c0_64 = arith.constant 0 : index
    %c343 = arith.constant 343 : index
    %72 = vector.load %arg6[%c0_64, %c343] : memref<4x1454xbf16, #tpu.memory_space<vmem>>, vector<4x768xbf16>
    %c13 = arith.constant 13 : index
    %c0_65 = arith.constant 0 : index
    %c0_66 = arith.constant 0 : index
    %73 = vector.load %arg4[%c13, %c0_65, %c0_66] : memref<27x8x4xbf16, #tpu.memory_space<vmem>>, vector<1x8x4xbf16>
    %74 = vector.shape_cast %73 : vector<1x8x4xbf16> to vector<8x4xbf16>
    %cst_67 = arith.constant dense<0.000000e+00> : vector<8x768xf32>
    %75 = tpu.matmul %74, %72, %cst_67 {dimension_numbers = #tpu.dot_dimension_numbers<[1], [0], [0], [1], [0, 0, 1, 1], [], []>} : vector<8x4xbf16>, vector<4x768xbf16>, vector<8x768xf32> -> vector<8x768xf32>
    %76 = arith.addf %71, %75 : vector<8x768xf32>
    %c0_68 = arith.constant 0 : index
    %c344 = arith.constant 344 : index
    %77 = vector.load %arg6[%c0_68, %c344] : memref<4x1454xbf16, #tpu.memory_space<vmem>>, vector<4x768xbf16>
    %c14 = arith.constant 14 : index
    %c0_69 = arith.constant 0 : index
    %c0_70 = arith.constant 0 : index
    %78 = vector.load %arg4[%c14, %c0_69, %c0_70] : memref<27x8x4xbf16, #tpu.memory_space<vmem>>, vector<1x8x4xbf16>
    %79 = vector.shape_cast %78 : vector<1x8x4xbf16> to vector<8x4xbf16>
    %cst_71 = arith.constant dense<0.000000e+00> : vector<8x768xf32>
    %80 = tpu.matmul %79, %77, %cst_71 {dimension_numbers = #tpu.dot_dimension_numbers<[1], [0], [0], [1], [0, 0, 1, 1], [], []>} : vector<8x4xbf16>, vector<4x768xbf16>, vector<8x768xf32> -> vector<8x768xf32>
    %81 = arith.addf %76, %80 : vector<8x768xf32>
    %c0_72 = arith.constant 0 : index
    %c360 = arith.constant 360 : index
    %82 = vector.load %arg6[%c0_72, %c360] : memref<4x1454xbf16, #tpu.memory_space<vmem>>, vector<4x768xbf16>
    %c15 = arith.constant 15 : index
    %c0_73 = arith.constant 0 : index
    %c0_74 = arith.constant 0 : index
    %83 = vector.load %arg4[%c15, %c0_73, %c0_74] : memref<27x8x4xbf16, #tpu.memory_space<vmem>>, vector<1x8x4xbf16>
    %84 = vector.shape_cast %83 : vector<1x8x4xbf16> to vector<8x4xbf16>
    %cst_75 = arith.constant dense<0.000000e+00> : vector<8x768xf32>
    %85 = tpu.matmul %84, %82, %cst_75 {dimension_numbers = #tpu.dot_dimension_numbers<[1], [0], [0], [1], [0, 0, 1, 1], [], []>} : vector<8x4xbf16>, vector<4x768xbf16>, vector<8x768xf32> -> vector<8x768xf32>
    %86 = arith.addf %81, %85 : vector<8x768xf32>
    %c0_76 = arith.constant 0 : index
    %c361 = arith.constant 361 : index
    %87 = vector.load %arg6[%c0_76, %c361] : memref<4x1454xbf16, #tpu.memory_space<vmem>>, vector<4x768xbf16>
    %c16 = arith.constant 16 : index
    %c0_77 = arith.constant 0 : index
    %c0_78 = arith.constant 0 : index
    %88 = vector.load %arg4[%c16, %c0_77, %c0_78] : memref<27x8x4xbf16, #tpu.memory_space<vmem>>, vector<1x8x4xbf16>
    %89 = vector.shape_cast %88 : vector<1x8x4xbf16> to vector<8x4xbf16>
    %cst_79 = arith.constant dense<0.000000e+00> : vector<8x768xf32>
    %90 = tpu.matmul %89, %87, %cst_79 {dimension_numbers = #tpu.dot_dimension_numbers<[1], [0], [0], [1], [0, 0, 1, 1], [], []>} : vector<8x4xbf16>, vector<4x768xbf16>, vector<8x768xf32> -> vector<8x768xf32>
    %91 = arith.addf %86, %90 : vector<8x768xf32>
    %c0_80 = arith.constant 0 : index
    %c362 = arith.constant 362 : index
    %92 = vector.load %arg6[%c0_80, %c362] : memref<4x1454xbf16, #tpu.memory_space<vmem>>, vector<4x768xbf16>
    %c17 = arith.constant 17 : index
    %c0_81 = arith.constant 0 : index
    %c0_82 = arith.constant 0 : index
    %93 = vector.load %arg4[%c17, %c0_81, %c0_82] : memref<27x8x4xbf16, #tpu.memory_space<vmem>>, vector<1x8x4xbf16>
    %94 = vector.shape_cast %93 : vector<1x8x4xbf16> to vector<8x4xbf16>
    %cst_83 = arith.constant dense<0.000000e+00> : vector<8x768xf32>
    %95 = tpu.matmul %94, %92, %cst_83 {dimension_numbers = #tpu.dot_dimension_numbers<[1], [0], [0], [1], [0, 0, 1, 1], [], []>} : vector<8x4xbf16>, vector<4x768xbf16>, vector<8x768xf32> -> vector<8x768xf32>
    %96 = arith.addf %91, %95 : vector<8x768xf32>
    %c0_84 = arith.constant 0 : index
    %c648 = arith.constant 648 : index
    %97 = vector.load %arg6[%c0_84, %c648] : memref<4x1454xbf16, #tpu.memory_space<vmem>>, vector<4x768xbf16>
    %c18_85 = arith.constant 18 : index
    %c0_86 = arith.constant 0 : index
    %c0_87 = arith.constant 0 : index
    %98 = vector.load %arg4[%c18_85, %c0_86, %c0_87] : memref<27x8x4xbf16, #tpu.memory_space<vmem>>, vector<1x8x4xbf16>
    %99 = vector.shape_cast %98 : vector<1x8x4xbf16> to vector<8x4xbf16>
    %cst_88 = arith.constant dense<0.000000e+00> : vector<8x768xf32>
    %100 = tpu.matmul %99, %97, %cst_88 {dimension_numbers = #tpu.dot_dimension_numbers<[1], [0], [0], [1], [0, 0, 1, 1], [], []>} : vector<8x4xbf16>, vector<4x768xbf16>, vector<8x768xf32> -> vector<8x768xf32>
    %101 = arith.addf %96, %100 : vector<8x768xf32>
    %c0_89 = arith.constant 0 : index
    %c649 = arith.constant 649 : index
    %102 = vector.load %arg6[%c0_89, %c649] : memref<4x1454xbf16, #tpu.memory_space<vmem>>, vector<4x768xbf16>
    %c19_90 = arith.constant 19 : index
    %c0_91 = arith.constant 0 : index
    %c0_92 = arith.constant 0 : index
    %103 = vector.load %arg4[%c19_90, %c0_91, %c0_92] : memref<27x8x4xbf16, #tpu.memory_space<vmem>>, vector<1x8x4xbf16>
    %104 = vector.shape_cast %103 : vector<1x8x4xbf16> to vector<8x4xbf16>
    %cst_93 = arith.constant dense<0.000000e+00> : vector<8x768xf32>
    %105 = tpu.matmul %104, %102, %cst_93 {dimension_numbers = #tpu.dot_dimension_numbers<[1], [0], [0], [1], [0, 0, 1, 1], [], []>} : vector<8x4xbf16>, vector<4x768xbf16>, vector<8x768xf32> -> vector<8x768xf32>
    %106 = arith.addf %101, %105 : vector<8x768xf32>
    %c0_94 = arith.constant 0 : index
    %c650 = arith.constant 650 : index
    %107 = vector.load %arg6[%c0_94, %c650] : memref<4x1454xbf16, #tpu.memory_space<vmem>>, vector<4x768xbf16>
    %c20_95 = arith.constant 20 : index
    %c0_96 = arith.constant 0 : index
    %c0_97 = arith.constant 0 : index
    %108 = vector.load %arg4[%c20_95, %c0_96, %c0_97] : memref<27x8x4xbf16, #tpu.memory_space<vmem>>, vector<1x8x4xbf16>
    %109 = vector.shape_cast %108 : vector<1x8x4xbf16> to vector<8x4xbf16>
    %cst_98 = arith.constant dense<0.000000e+00> : vector<8x768xf32>
    %110 = tpu.matmul %109, %107, %cst_98 {dimension_numbers = #tpu.dot_dimension_numbers<[1], [0], [0], [1], [0, 0, 1, 1], [], []>} : vector<8x4xbf16>, vector<4x768xbf16>, vector<8x768xf32> -> vector<8x768xf32>
    %111 = arith.addf %106, %110 : vector<8x768xf32>
    %c0_99 = arith.constant 0 : index
    %c666 = arith.constant 666 : index
    %112 = vector.load %arg6[%c0_99, %c666] : memref<4x1454xbf16, #tpu.memory_space<vmem>>, vector<4x768xbf16>
    %c21 = arith.constant 21 : index
    %c0_100 = arith.constant 0 : index
    %c0_101 = arith.constant 0 : index
    %113 = vector.load %arg4[%c21, %c0_100, %c0_101] : memref<27x8x4xbf16, #tpu.memory_space<vmem>>, vector<1x8x4xbf16>
    %114 = vector.shape_cast %113 : vector<1x8x4xbf16> to vector<8x4xbf16>
    %cst_102 = arith.constant dense<0.000000e+00> : vector<8x768xf32>
    %115 = tpu.matmul %114, %112, %cst_102 {dimension_numbers = #tpu.dot_dimension_numbers<[1], [0], [0], [1], [0, 0, 1, 1], [], []>} : vector<8x4xbf16>, vector<4x768xbf16>, vector<8x768xf32> -> vector<8x768xf32>
    %116 = arith.addf %111, %115 : vector<8x768xf32>
    %c0_103 = arith.constant 0 : index
    %c667 = arith.constant 667 : index
    %117 = vector.load %arg6[%c0_103, %c667] : memref<4x1454xbf16, #tpu.memory_space<vmem>>, vector<4x768xbf16>
    %c22 = arith.constant 22 : index
    %c0_104 = arith.constant 0 : index
    %c0_105 = arith.constant 0 : index
    %118 = vector.load %arg4[%c22, %c0_104, %c0_105] : memref<27x8x4xbf16, #tpu.memory_space<vmem>>, vector<1x8x4xbf16>
    %119 = vector.shape_cast %118 : vector<1x8x4xbf16> to vector<8x4xbf16>
    %cst_106 = arith.constant dense<0.000000e+00> : vector<8x768xf32>
    %120 = tpu.matmul %119, %117, %cst_106 {dimension_numbers = #tpu.dot_dimension_numbers<[1], [0], [0], [1], [0, 0, 1, 1], [], []>} : vector<8x4xbf16>, vector<4x768xbf16>, vector<8x768xf32> -> vector<8x768xf32>
    %121 = arith.addf %116, %120 : vector<8x768xf32>
    %c0_107 = arith.constant 0 : index
    %c668 = arith.constant 668 : index
    %122 = vector.load %arg6[%c0_107, %c668] : memref<4x1454xbf16, #tpu.memory_space<vmem>>, vector<4x768xbf16>
    %c23 = arith.constant 23 : index
    %c0_108 = arith.constant 0 : index
    %c0_109 = arith.constant 0 : index
    %123 = vector.load %arg4[%c23, %c0_108, %c0_109] : memref<27x8x4xbf16, #tpu.memory_space<vmem>>, vector<1x8x4xbf16>
    %124 = vector.shape_cast %123 : vector<1x8x4xbf16> to vector<8x4xbf16>
    %cst_110 = arith.constant dense<0.000000e+00> : vector<8x768xf32>
    %125 = tpu.matmul %124, %122, %cst_110 {dimension_numbers = #tpu.dot_dimension_numbers<[1], [0], [0], [1], [0, 0, 1, 1], [], []>} : vector<8x4xbf16>, vector<4x768xbf16>, vector<8x768xf32> -> vector<8x768xf32>
    %126 = arith.addf %121, %125 : vector<8x768xf32>
    %c0_111 = arith.constant 0 : index
    %c684 = arith.constant 684 : index
    %127 = vector.load %arg6[%c0_111, %c684] : memref<4x1454xbf16, #tpu.memory_space<vmem>>, vector<4x768xbf16>
    %c24 = arith.constant 24 : index
    %c0_112 = arith.constant 0 : index
    %c0_113 = arith.constant 0 : index
    %128 = vector.load %arg4[%c24, %c0_112, %c0_113] : memref<27x8x4xbf16, #tpu.memory_space<vmem>>, vector<1x8x4xbf16>
    %129 = vector.shape_cast %128 : vector<1x8x4xbf16> to vector<8x4xbf16>
    %cst_114 = arith.constant dense<0.000000e+00> : vector<8x768xf32>
    %130 = tpu.matmul %129, %127, %cst_114 {dimension_numbers = #tpu.dot_dimension_numbers<[1], [0], [0], [1], [0, 0, 1, 1], [], []>} : vector<8x4xbf16>, vector<4x768xbf16>, vector<8x768xf32> -> vector<8x768xf32>
    %131 = arith.addf %126, %130 : vector<8x768xf32>
    %c0_115 = arith.constant 0 : index
    %c685 = arith.constant 685 : index
    %132 = vector.load %arg6[%c0_115, %c685] : memref<4x1454xbf16, #tpu.memory_space<vmem>>, vector<4x768xbf16>
    %c25 = arith.constant 25 : index
    %c0_116 = arith.constant 0 : index
    %c0_117 = arith.constant 0 : index
    %133 = vector.load %arg4[%c25, %c0_116, %c0_117] : memref<27x8x4xbf16, #tpu.memory_space<vmem>>, vector<1x8x4xbf16>
    %134 = vector.shape_cast %133 : vector<1x8x4xbf16> to vector<8x4xbf16>
    %cst_118 = arith.constant dense<0.000000e+00> : vector<8x768xf32>
    %135 = tpu.matmul %134, %132, %cst_118 {dimension_numbers = #tpu.dot_dimension_numbers<[1], [0], [0], [1], [0, 0, 1, 1], [], []>} : vector<8x4xbf16>, vector<4x768xbf16>, vector<8x768xf32> -> vector<8x768xf32>
    %136 = arith.addf %131, %135 : vector<8x768xf32>
    %c0_119 = arith.constant 0 : index
    %c686 = arith.constant 686 : index
    %137 = vector.load %arg6[%c0_119, %c686] : memref<4x1454xbf16, #tpu.memory_space<vmem>>, vector<4x768xbf16>
    %c26 = arith.constant 26 : index
    %c0_120 = arith.constant 0 : index
    %c0_121 = arith.constant 0 : index
    %138 = vector.load %arg4[%c26, %c0_120, %c0_121] : memref<27x8x4xbf16, #tpu.memory_space<vmem>>, vector<1x8x4xbf16>
    %139 = vector.shape_cast %138 : vector<1x8x4xbf16> to vector<8x4xbf16>
    %cst_122 = arith.constant dense<0.000000e+00> : vector<8x768xf32>
    %140 = tpu.matmul %139, %137, %cst_122 {dimension_numbers = #tpu.dot_dimension_numbers<[1], [0], [0], [1], [0, 0, 1, 1], [], []>} : vector<8x4xbf16>, vector<4x768xbf16>, vector<8x768xf32> -> vector<8x768xf32>
    %141 = arith.addf %136, %140 : vector<8x768xf32>
    %c0_123 = arith.constant 0 : index
    %c0_124 = arith.constant 0 : index
    %c0_125 = arith.constant 0 : index
    %142 = vector.load %arg5[%c0_123, %c0_124, %c0_125] : memref<1x8x768xf32, #tpu.memory_space<vmem>>, vector<1x8x768xf32>
    %143 = vector.shape_cast %142 : vector<1x8x768xf32> to vector<8x768xf32>
    %144 = vector.shape_cast %141 : vector<8x768xf32> to vector<1x8x768xf32>
    tpu.vector_store %arg5[%c0_123, %c0_124, %c0_125], %144 {strides = array<i32>} : memref<1x8x768xf32, #tpu.memory_space<vmem>>, vector<1x8x768xf32>,
    return
  }
  func.func @transform_0(%arg0: i32, %arg1: i32) -> (i32, i32, i32) {
    %c0_i32 = arith.constant 0 : i32
    %c0_i32_0 = arith.constant 0 : i32
    return %arg0, %c0_i32, %arg1 : i32, i32, i32
  }
  func.func @transform_1(%arg0: i32, %arg1: i32) -> (i32, i32, i32) {
    %c1_i32 = arith.constant 1 : i32
    %0 = arith.addi %arg1, %c1_i32 : i32
    %c0_i32 = arith.constant 0 : i32
    %c0_i32_0 = arith.constant 0 : i32
    return %arg0, %c0_i32, %0 : i32, i32, i32
  }
  func.func @transform_2(%arg0: i32, %arg1: i32) -> (i32, i32, i32) {
    %c0_i32 = arith.constant 0 : i32
    %c0_i32_0 = arith.constant 0 : i32
    %c0_i32_1 = arith.constant 0 : i32
    %c0_i32_2 = arith.constant 0 : i32
    return %c0_i32, %c0_i32_0, %c0_i32_1 : i32, i32, i32
  }
  func.func @transform_3(%arg0: i32, %arg1: i32) -> (i32, i32, i32) {
    %c0_i32 = arith.constant 0 : i32
    %c0_i32_0 = arith.constant 0 : i32
    return %arg0, %c0_i32, %arg1 : i32, i32, i32
  }
}

</mosaic_0001>

<llo_original>
// kernel: tpu_custom_call.1
$region0: #{tpu_custom_call.1}
  #allocation0 [shape = 'u32[]', space=smem, size = 0x4, offset = 0x4, fixed_abs, tag = 'smem constant byte address 0x4 - core index']
  #allocation1 [shape = 'u32[144,128]{1,0:T(1,128)}', space=vmem, size = 0x12000, scoped, tag = 'internal scratch']
  #allocation2 [shape = 'bf16[4,1454]{1,0:T(4,128)(2,1)}', space=vmem, size = 0x3000, scoped, tag = 'scratch operand']
  %s0 = inlined_call_operand.hbm [shape: bf16[2,4,4608], index: 0, kind: input, shape index: {}]
  %s1 = inlined_call_operand.hbm [shape: bf16[2,4,4608], index: 1, kind: input, shape index: {}]
  %s2 = inlined_call_operand.vmem [shape: bf16[27,8,4], index: 2, kind: input, shape index: {}]
  %s3 = inlined_call_operand.hbm [shape: f32[2,8,3840], index: 3, kind: output, shape index: {}]
  %s4 = sld [smem:[#allocation0]]
  $region53: #{tpu_custom_call.1} parent=0
    _
  %s6 = ssub.s32 1, %s4
  %s7 = scalar_select 0, %s6, %s4
  $region1: #{tpu_custom_call.1} parent=0
    #allocation3 [shape = 'u8[12288]{0}', space=vmem, size = 0x3000, scoped, tag = 'input window, operand 0']
    #allocation4 [shape = 's32[2]{0}', space=sflag, size = 0x8, scoped, tag = 'scoped memory for tpu_custom_call.1']
    #allocation5 [shape = 's32[2]{0}', space=sflag, size = 0x8, scoped, tag = 'scoped memory for tpu_custom_call.1']
    #allocation6 [shape = 'u8[12288]{0}', space=vmem, size = 0x3000, scoped, tag = 'input window, operand 1']
    #allocation7 [shape = 's32[2]{0}', space=sflag, size = 0x8, scoped, tag = 'scoped memory for tpu_custom_call.1']
    #allocation8 [shape = 'u8[49152]{0}', space=vmem, size = 0xc000, scoped, tag = 'output window, operand 0']
    %8 = vsyncpa [#allocation4], 0
    %s9 = scalar_lea.sflag [#allocation4], 1
    %10 = vsyncpa %s9, 0
    %11 = vsyncpa [#allocation7], 0
    %s12 = scalar_lea.sflag [#allocation7], 1
    %13 = vsyncpa %s12, 0
    %14 = vsyncpa [#allocation5], 0
    %s15 = scalar_lea.sflag [#allocation5], 1
    %16 = vsyncpa %s15, 0
    loop: start=0, step=1, limit=12
    $region2: #{tpu_custom_call.1} parent=1 // loop_pre_header
      _
    $region3: #{tpu_custom_call.1} parent=1 // loop_header
      %s18 = sphi 0, %s22
      %p19 = scmp.ge.s32.totalorder %s18, 12
      %s25 = sphi 0, %s37
      %s26 = sphi 0, %s33
      %s27 = sphi 0, %s25
      %s28 = sphi 0, %s26
      %s29 = sphi 0, %s27
      %s30 = sphi 0, %s28
      %s42 = sphi 0, %s44
      %s45 = sphi 0, %s42
      %s46 = sphi 0, %s45
      %s62 = sphi 0, %s46
      %s72 = sphi 0, %s74
      %s75 = sphi 0, %s72
      %s76 = sphi 0, %s75
      %s92 = sphi 0, %s76
      %s96 = sphi 0, %s96
      %s98 = sphi 0, %s96
      %s99 = sphi 0, %s98
      %s113 = sphi 0, %s99
      %s121 = sphi 0, %s123
      %s124 = sphi 0, %s121
      %s125 = sphi 0, %s124
      %s141 = sphi 0, %s125
    $region4: #{tpu_custom_call.1} parent=1 // loop_header_branch
      %21 = sbr.rel (%p19) target = $region8
    $region5: #{tpu_custom_call.1} parent=1 // loop_body
      %s23 = ssub.s32 %s18, 1
      %s24 = ssub.s32 %s18, 2
      %s31 = sadd.s32 1, %s26
      %p32 = scmp.ge.s32.totalorder %s31, 5
      %s33 = scalar_select %p32, 0, %s31
      %s34 = sadd.s32 1, %s25
      %s35 = scalar_select %p32, %s34, %s25
      %p36 = scmp.ge.s32.totalorder %s35, 2
      %s37 = scalar_select %p36, 0, %s35
      %s38 = ssub.s32 %s25, %s37
      %s39 = ssub.s32 %s26, %s33
      %s40 = sor.u32 %s38, %s39
      %p41 = scmp.eq.s32.totalorder %s40, 0
      %s43 = sadd.s32 %s42, 1
      %s44 = scalar_select %p41, %s42, %s43
      %p47 = pneg %p41
      %p48 = scmp.eq.s32.totalorder %s18, 9
      %p49 = por %p47, %p48
      %p50 = scmp.ne.s32.totalorder %s42, %s45
      %p51 = scmp.eq.s32.totalorder %s18, 0
      %p52 = por %p50, %p51
      %p53 = scmp.ne.s32.totalorder %s42, %s45
      %p54 = scmp.eq.s32.totalorder %s23, 9
      %p55 = por %p53, %p54
      %p56 = scmp.ne.s32.totalorder %s45, %s46
      %p57 = scmp.eq.s32.totalorder %s23, 0
      %p58 = por %p56, %p57
      %p59 = scmp.ne.s32.totalorder %s45, %s46
      %p60 = scmp.eq.s32.totalorder %s24, 9
      %p61 = por %p59, %p60
      %p63 = scmp.ne.s32.totalorder %s46, %s62
      %p64 = scmp.eq.s32.totalorder %s24, 0
      %p65 = por %p63, %p64
      %s66 = sadd.s32 %s26, 1
      %s67 = sadd.s32 %s33, 1
      %s68 = ssub.s32 %s25, %s37
      %s69 = ssub.s32 %s66, %s67
      %s70 = sor.u32 %s68, %s69
      %p71 = scmp.eq.s32.totalorder %s70, 0
      %s73 = sadd.s32 %s72, 1
      %s74 = scalar_select %p71, %s72, %s73
      %p77 = pneg %p71
      %p78 = scmp.eq.s32.totalorder %s18, 9
      %p79 = por %p77, %p78
      %p80 = scmp.ne.s32.totalorder %s72, %s75
      %p81 = scmp.eq.s32.totalorder %s18, 0
      %p82 = por %p80, %p81
      %p83 = scmp.ne.s32.totalorder %s72, %s75
      %p84 = scmp.eq.s32.totalorder %s23, 9
      %p85 = por %p83, %p84
      %p86 = scmp.ne.s32.totalorder %s75, %s76
      %p87 = scmp.eq.s32.totalorder %s23, 0
      %p88 = por %p86, %p87
      %p89 = scmp.ne.s32.totalorder %s75, %s76
      %p90 = scmp.eq.s32.totalorder %s24, 9
      %p91 = por %p89, %p90
      %p93 = scmp.ne.s32.totalorder %s76, %s92
      %p94 = scmp.eq.s32.totalorder %s24, 0
      %p95 = por %p93, %p94
      %s97 = sadd.s32 %s96, 1
      %p100 = scmp.eq.s32.totalorder %s18, 9
      %p101 = scmp.ne.s32.totalorder %s96, %s98
      %p102 = scmp.eq.s32.totalorder %s18, 0
      %p103 = por %p101, %p102
      %p104 = scmp.ne.s32.totalorder %s96, %s98
      %p105 = scmp.eq.s32.totalorder %s23, 9
      %p106 = por %p104, %p105
      %p107 = scmp.ne.s32.totalorder %s98, %s99
      %p108 = scmp.eq.s32.totalorder %s23, 0
      %p109 = por %p107, %p108
      %p110 = scmp.ne.s32.totalorder %s98, %s99
      %p111 = scmp.eq.s32.totalorder %s24, 9
      %p112 = por %p110, %p111
      %p114 = scmp.ne.s32.totalorder %s99, %s113
      %p115 = scmp.eq.s32.totalorder %s24, 0
      %p116 = por %p114, %p115
      %s117 = ssub.s32 %s25, %s37
      %s118 = ssub.s32 %s26, %s33
      %s119 = sor.u32 %s117, %s118
      %p120 = scmp.eq.s32.totalorder %s119, 0
      %s122 = sadd.s32 %s121, 1
      %s123 = scalar_select %p120, %s121, %s122
      %p126 = pneg %p120
      %p127 = scmp.eq.s32.totalorder %s18, 9
      %p128 = por %p126, %p127
      %p129 = scmp.ne.s32.totalorder %s121, %s124
      %p130 = scmp.eq.s32.totalorder %s18, 0
      %p131 = por %p129, %p130
      %p132 = scmp.ne.s32.totalorder %s121, %s124
      %p133 = scmp.eq.s32.totalorder %s23, 9
      %p134 = por %p132, %p133
      %p135 = scmp.ne.s32.totalorder %s124, %s125
      %p136 = scmp.eq.s32.totalorder %s23, 0
      %p137 = por %p135, %p136
      %p138 = scmp.ne.s32.totalorder %s124, %s125
      %p139 = scmp.eq.s32.totalorder %s24, 9
      %p140 = por %p138, %p139
      %p142 = scmp.ne.s32.totalorder %s125, %s141
      %p143 = scmp.eq.s32.totalorder %s24, 0
      %p144 = por %p142, %p143
      %p145 = scmp.le.s32.totalorder 1, %s18
      %p146 = scmp.lt.s32.totalorder %s18, 11
      %p147 = pnand %p145, %p146
      %p148 = pneg %p147
      // Predicated region
      $region9: #{tpu_custom_call.1} parent=5 // pred_check
        _
      $region10: #{tpu_custom_call.1} parent=5 // pred_check_branch
        %150 = sbr.rel (%p147) target = $region12
      $region11: #{tpu_custom_call.1} parent=5 // pred_region
        %s151 = ssub.s32 %s18, 1
        // Predicated region
        $region13: #{tpu_custom_call.1} parent=11 // pred_check
          %p152 = pneg %p109
        $region14: #{tpu_custom_call.1} parent=11 // pred_check_branch
          %154 = sbr.rel (%p152) target = $region16
        $region15: #{tpu_custom_call.1} parent=11 // pred_region
          _
        $region16: #{tpu_custom_call.1} parent=11 // pred_fallthru
          _
      $region12: #{tpu_custom_call.1} parent=5 // pred_fallthru
        _
      %p155 = scmp.lt.s32.totalorder %s18, 10
      // Predicated region
      $region17: #{tpu_custom_call.1} parent=5 // pred_check
        %p156 = pneg %p155
      $region18: #{tpu_custom_call.1} parent=5 // pred_check_branch
        %158 = sbr.rel (%p156) target = $region20
      $region19: #{tpu_custom_call.1} parent=5 // pred_region
        // Predicated region
        $region21: #{tpu_custom_call.1} parent=19 // pred_check
          %p159 = pneg %p52
        $region22: #{tpu_custom_call.1} parent=19 // pred_check_branch
          %161 = sbr.rel (%p159) target = $region24
        $region23: #{tpu_custom_call.1} parent=19 // pred_region
          %s162 = sand.u32 %s42, 1
          %s163 = scalar_lea.sflag [#allocation4], %s162
          %s164 = sand.u32 %s42, 1
          %s165 = smul.addr %s164, 12
          %s166 = scalar_lea.vmem [#allocation3], %s165
          %s167 = smul.u32 6, %s26
          %s169 = ssub.s32 192, 192
          %170 = vsyncadd %s163, %s169
          %s171 = smul.addr %s25, 36
          %s172 = sadd.s32 %s167, %s171
          %s173 = smul.addr %s172, 32
          %s174 = scalar_lea.hbm %s0, %s173
          %s176 = sshll.u32 %s166, 4
          %s177 = int_to_ptr.vmem [resolvable:$true] %s176
          %179 = dma.hbm_to_vmem [thread:$0]  %s174, 192, %s177, %s163
        $region24: #{tpu_custom_call.1} parent=19 // pred_fallthru
          _
        // Predicated region
        $region25: #{tpu_custom_call.1} parent=19 // pred_check
          %p180 = pneg %p82
        $region26: #{tpu_custom_call.1} parent=19 // pred_check_branch
          %182 = sbr.rel (%p180) target = $region28
        $region27: #{tpu_custom_call.1} parent=19 // pred_region
          %s183 = sand.u32 %s72, 1
          %s184 = scalar_lea.sflag [#allocation7], %s183
          %s185 = sand.u32 %s72, 1
          %s186 = smul.addr %s185, 12
          %s187 = scalar_lea.vmem [#allocation6], %s186
          %s188 = sadd.s32 %s26, 1
          %s189 = smul.u32 6, %s188
          %s191 = ssub.s32 192, 192
          %192 = vsyncadd %s184, %s191
          %s193 = smul.addr %s25, 36
          %s194 = sadd.s32 %s189, %s193
          %s195 = smul.addr %s194, 32
          %s196 = scalar_lea.hbm %s1, %s195
          %s198 = sshll.u32 %s187, 4
          %s199 = int_to_ptr.vmem [resolvable:$true] %s198
          %201 = dma.hbm_to_vmem [thread:$0]  %s196, 192, %s199, %s184
        $region28: #{tpu_custom_call.1} parent=19 // pred_fallthru
          _
      $region20: #{tpu_custom_call.1} parent=5 // pred_fallthru
        _
      %p202 = scmp.le.s32.totalorder 1, %s18
      %p203 = scmp.lt.s32.totalorder %s18, 11
      %p204 = pnand %p202, %p203
      %p205 = pneg %p204
      // Predicated region
      $region29: #{tpu_custom_call.1} parent=5 // pred_check
        _
      $region30: #{tpu_custom_call.1} parent=5 // pred_check_branch
        %207 = sbr.rel (%p204) target = $region32
      $region31: #{tpu_custom_call.1} parent=5 // pred_region
        %s208 = ssub.s32 %s18, 1
        %s209 = sand.u32 %s45, 1
        %s210 = scalar_lea.sflag [#allocation4], %s209
        %s211 = sand.u32 %s45, 1
        %s212 = smul.addr %s211, 12
        %s213 = scalar_lea.vmem [#allocation3], %s212
        // Predicated region
        $region33: #{tpu_custom_call.1} parent=31 // pred_check
          %p214 = pneg %p58
        $region34: #{tpu_custom_call.1} parent=31 // pred_check_branch
          %216 = sbr.rel (%p214) target = $region36
        $region35: #{tpu_custom_call.1} parent=31 // pred_region
          %217 = dma.done %s210, 192
        $region36: #{tpu_custom_call.1} parent=31 // pred_fallthru
          _
        %s218 = sand.u32 %s75, 1
        %s219 = scalar_lea.sflag [#allocation7], %s218
        %s220 = sand.u32 %s75, 1
        %s221 = smul.addr %s220, 12
        %s222 = scalar_lea.vmem [#allocation6], %s221
        // Predicated region
        $region37: #{tpu_custom_call.1} parent=31 // pred_check
          %p223 = pneg %p88
        $region38: #{tpu_custom_call.1} parent=31 // pred_check_branch
          %225 = sbr.rel (%p223) target = $region40
        $region39: #{tpu_custom_call.1} parent=31 // pred_region
          %226 = dma.done %s219, 192
        $region40: #{tpu_custom_call.1} parent=31 // pred_fallthru
          _
        %s227 = sand.u32 %s45, 1
        %s228 = scalar_lea.sflag [#allocation4], %s227
        %s229 = sand.u32 %s45, 1
        %s230 = smul.addr %s229, 12
        %s231 = scalar_lea.vmem [#allocation3], %s230
        %p232 = pneg %p58
        %p233 = pneg %p55
        %s234 = sand.u32 %s75, 1
        %s235 = scalar_lea.sflag [#allocation7], %s234
        %s236 = sand.u32 %s75, 1
        %s237 = smul.addr %s236, 12
        %s238 = scalar_lea.vmem [#allocation6], %s237
        %p239 = pneg %p88
        %p240 = pneg %p85
        %p241 = pneg %p109
        %p242 = pneg %p106
        %p243 = pneg %p137
        %p244 = pneg %p134
        %s245 = sand.u32 %s124, 1
        %s246 = scalar_lea.sflag [#allocation5], %s245
        %s247 = sand.u32 %s124, 1
        %s248 = smul.addr %s247, 48
        %s249 = scalar_lea.vmem [#allocation8], %s248
        %s250 = smul.u32 6, %s28
        %s251 = sadd.s32 %s28, 1
        %s252 = smul.u32 6, %s251
        %s253 = smul.u32 6, %s28
        %v255 = vld [vmem:[%s213] sm:$0xff]
        %v256 = vld [vmem:[%s213 + $0x8] sm:$0xf]
        %257 = vst [vmem:[#allocation2] sm:$0xff] %v255
        %258 = vst [vmem:[#allocation2 + $0x8] sm:$0xf] %v256
        %v259 = vld [vmem:[%s222] sm:$0xff]
        %v260 = vld [vmem:[%s222 + $0x8] sm:$0xf]
        %261 = vst [vmem:[#allocation2 + $0xc] sm:$0xff] %v259
        %vm262 = vcmask 1041408
        %vm263 = vcmask 371714
        %vm264 = vmor %vm263, %vm262
        %265 = vst.msk [vmem:[#allocation2 + $0x14] sm:$0xf] %vm264, %v260
        %v266 = vld [vmem:[#allocation2] sm:$0xff]
        %v267 = vld [vmem:[#allocation2 + $0x8] sm:$0xf]
        %v268 = vld [vmem:[%s2] sm:$0xf]
        %v269 = vld [vmem:[#allocation2 + $0x8] sm:$0x3f]
        %s270 = scalar_lea.vmem %s2, 4
        %v271 = vld [vmem:[%s270] sm:$0xf]
        %v274 = vcombine.high %v266, %v266
        %v276 = vunpack.c.l.s4 1983009808
        %v277 = vunpack.c.0.s8 %v276
        %v278 = vlaneseq
        %v279 = vshrl.u32 %v278, 7
        %v280 = vsub.s32 %v277, %v279
        %v281 = vrot.slane %v266, %v280
        %v283 = vunpack.c.l.s4 1983009808
        %v284 = vunpack.c.0.s8 %v283
        %v285 = vlaneseq
        %v286 = vshrl.u32 %v285, 7
        %v287 = vsub.s32 %v284, %v286
        %v288 = vrot.slane %v274, %v287
        %v289 = vcombine.high %v281, %v281
        %v290 = vcombine.high %v288, %v288
        %v291 = vcombine.high %v269, %v269
        %v293 = vunpack.c.l.s4 1983009808
        %v294 = vunpack.c.0.s8 %v293
        %v295 = vlaneseq
        %v296 = vshrl.u32 %v295, 7
        %v297 = vsub.s32 %v294, %v296
        %v298 = vrot.slane %v269, %v297
        %v300 = vunpack.c.l.s4 1983009808
        %v301 = vunpack.c.0.s8 %v300
        %v302 = vlaneseq
        %v303 = vshrl.u32 %v302, 7
        %v304 = vsub.s32 %v301, %v303
        %v305 = vrot.slane %v291, %v304
        %v306 = vcombine.high %v298, %v298
        %307 = vrot.lane.b32.xlu0 %v281, 127
        %v308 = vpop.permute.xlu0 %307
        %309 = vrot.lane.b32.xlu0 %v289, 127
        %v310 = vpop.permute.xlu0 %309
        %311 = vrot.lane.b32.xlu0 %v288, 127
        %v312 = vpop.permute.xlu0 %311
        %313 = vrot.lane.b32.xlu0 %v290, 127
        %v314 = vpop.permute.xlu0 %313
        %315 = vrot.lane.b32.xlu0 %v298, 127
        %v316 = vpop.permute.xlu0 %315
        %317 = vrot.lane.b32.xlu0 %v306, 127
        %v318 = vpop.permute.xlu0 %317
        %319 = vrot.lane.b32.xlu0 %v305, 127
        %v320 = vpop.permute.xlu0 %319
        %vm321 = vcmask 1039360
        %v322 = vsel %vm321, %v308, %v310
        %v323 = vsel %vm321, %v310, %v312
        %v324 = vsel %vm321, %v312, %v314
        %v325 = vsel %vm321, %v314, %v316
        %v326 = vsel %vm321, %v316, %v318
        %v327 = vsel %vm321, %v318, %v320
        %vm328 = vcmask 31744
        %v330 = vsel %vm328, %v271, 0
        %v333 = vsel %vm262, %v322, 0
        %v336 = vsel %vm262, %v323, 0
        %v339 = vsel %vm262, %v324, 0
        %v342 = vsel %vm262, %v325, 0
        %v345 = vsel %vm262, %v326, 0
        %v348 = vsel %vm262, %v327, 0
        %350 = vmatprep.subr.bf16.mxu0 %v336
        %351 = vmatpush1.bf16.msra.mxu0 %v333
        %352 = vmatprep.subr.bf16.mxu0 0
        %353 = vmatpush1.bf16.msra.mxu0 0
        %354 = vmatprep.subr.bf16.mxu0 0
        %355 = vmatpush1.bf16.msra.mxu0 0
        %356 = vmatprep.subr.bf16.mxu0 0
        %357 = vmatpush1.bf16.msra.mxu0 0
        %358 = vmatprep.subr.bf16.mxu0 0
        %359 = vmatpush1.bf16.msra.mxu0 0
        %360 = vmatprep.subr.bf16.mxu0 0
        %361 = vmatpush1.bf16.msra.mxu0 0
        %362 = vmatprep.subr.bf16.mxu0 0
        %363 = vmatpush1.bf16.msra.mxu0 0
        %364 = vmatprep.subr.bf16.mxu0 0
        %365 = vmatpush1.bf16.msra.mxu0 0
        %366 = vmatprep.subr.bf16.mxu0 0
        %367 = vmatpush1.bf16.msra.mxu0 0
        %368 = vmatprep.subr.bf16.mxu0 0
        %369 = vmatpush1.bf16.msra.mxu0 0
        %370 = vmatprep.subr.bf16.mxu0 0
        %371 = vmatpush1.bf16.msra.mxu0 0
        %372 = vmatprep.subr.bf16.mxu0 0
        %373 = vmatpush1.bf16.msra.mxu0 0
        %374 = vmatprep.subr.bf16.mxu0 0
        %375 = vmatpush1.bf16.msra.mxu0 0
        %376 = vmatprep.subr.bf16.mxu0 0
        %377 = vmatpush1.bf16.msra.mxu0 0
        %378 = vmatprep.subr.bf16.mxu0 0
        %379 = vmatpush1.bf16.msra.mxu0 0
        %380 = vmatprep.subr.bf16.mxu0 0
        %381 = vmatpush1.bf16.msra.mxu0 0
        %382 = vmatprep.mubr.bf16.mxu0 0
        %383 = vmatmul.mubr.bf16.gmra.mrb[0].mxu0 %v330
        %v384 = vpop.f32.mrb[0].mxu0
        %v385 = vadd.f32 0.0, %v384
        %v386 = vpop.f32.mrb[0].mxu0
        %v387 = vadd.f32 0.0, %v386
        %v388 = vpop.f32.mrb[0].mxu0
        %v389 = vpop.f32.mrb[0].mxu0
        %390 = vdwg.mxu0
        %391 = vmatprep.subr.bf16.mxu0 %v342
        %392 = vmatpush1.bf16.msra.mxu0 %v339
        %393 = vmatprep.subr.bf16.mxu0 0
        %394 = vmatpush1.bf16.msra.mxu0 0
        %395 = vmatprep.subr.bf16.mxu0 0
        %396 = vmatpush1.bf16.msra.mxu0 0
        %397 = vmatprep.subr.bf16.mxu0 0
        %398 = vmatpush1.bf16.msra.mxu0 0
        %399 = vmatprep.subr.bf16.mxu0 0
        %400 = vmatpush1.bf16.msra.mxu0 0
        %401 = vmatprep.subr.bf16.mxu0 0
        %402 = vmatpush1.bf16.msra.mxu0 0
        %403 = vmatprep.subr.bf16.mxu0 0
        %404 = vmatpush1.bf16.msra.mxu0 0
        %405 = vmatprep.subr.bf16.mxu0 0
        %406 = vmatpush1.bf16.msra.mxu0 0
        %407 = vmatprep.subr.bf16.mxu0 0
        %408 = vmatpush1.bf16.msra.mxu0 0
        %409 = vmatprep.subr.bf16.mxu0 0
        %410 = vmatpush1.bf16.msra.mxu0 0
        %411 = vmatprep.subr.bf16.mxu0 0
        %412 = vmatpush1.bf16.msra.mxu0 0
        %413 = vmatprep.subr.bf16.mxu0 0
        %414 = vmatpush1.bf16.msra.mxu0 0
        %415 = vmatprep.subr.bf16.mxu0 0
        %416 = vmatpush1.bf16.msra.mxu0 0
        %417 = vmatprep.subr.bf16.mxu0 0
        %418 = vmatpush1.bf16.msra.mxu0 0
        %419 = vmatprep.subr.bf16.mxu0 0
        %420 = vmatpush1.bf16.msra.mxu0 0
        %421 = vmatprep.subr.bf16.mxu0 0
        %422 = vmatpush1.bf16.msra.mxu0 0
        %423 = vmatprep.mubr.bf16.mxu0 0
        %424 = vmatmul.mubr.bf16.gmra.mrb[0].mxu0 %v330
        %v425 = vpop.f32.mrb[0].mxu0
        %v426 = vadd.f32 0.0, %v425
        %v427 = vpop.f32.mrb[0].mxu0
        %v428 = vadd.f32 0.0, %v427
        %v429 = vpop.f32.mrb[0].mxu0
        %v430 = vpop.f32.mrb[0].mxu0
        %431 = vdwg.mxu0
        %432 = vmatprep.subr.bf16.mxu0 %v348
        %433 = vmatpush1.bf16.msra.mxu0 %v345
        %434 = vmatprep.subr.bf16.mxu0 0
        %435 = vmatpush1.bf16.msra.mxu0 0
        %436 = vmatprep.subr.bf16.mxu0 0
        %437 = vmatpush1.bf16.msra.mxu0 0
        %438 = vmatprep.subr.bf16.mxu0 0
        %439 = vmatpush1.bf16.msra.mxu0 0
        %440 = vmatprep.subr.bf16.mxu0 0
        %441 = vmatpush1.bf16.msra.mxu0 0
        %442 = vmatprep.subr.bf16.mxu0 0
        %443 = vmatpush1.bf16.msra.mxu0 0
        %444 = vmatprep.subr.bf16.mxu0 0
        %445 = vmatpush1.bf16.msra.mxu0 0
        %446 = vmatprep.subr.bf16.mxu0 0
        %447 = vmatpush1.bf16.msra.mxu0 0
        %448 = vmatprep.subr.bf16.mxu0 0
        %449 = vmatpush1.bf16.msra.mxu0 0
        %450 = vmatprep.subr.bf16.mxu0 0
        %451 = vmatpush1.bf16.msra.mxu0 0
        %452 = vmatprep.subr.bf16.mxu0 0
        %453 = vmatpush1.bf16.msra.mxu0 0
        %454 = vmatprep.subr.bf16.mxu0 0
        %455 = vmatpush1.bf16.msra.mxu0 0
        %456 = vmatprep.subr.bf16.mxu0 0
        %457 = vmatpush1.bf16.msra.mxu0 0
        %458 = vmatprep.subr.bf16.mxu0 0
        %459 = vmatpush1.bf16.msra.mxu0 0
        %460 = vmatprep.subr.bf16.mxu0 0
        %461 = vmatpush1.bf16.msra.mxu0 0
        %462 = vmatprep.subr.bf16.mxu0 0
        %463 = vmatpush1.bf16.msra.mxu0 0
        %464 = vmatprep.mubr.bf16.mxu0 0
        %465 = vmatmul.mubr.bf16.gmra.mrb[0].mxu0 %v330
        %v466 = vpop.f32.mrb[0].mxu0
        %v467 = vadd.f32 0.0, %v466
        %v468 = vpop.f32.mrb[0].mxu0
        %v469 = vadd.f32 0.0, %v468
        %v470 = vpop.f32.mrb[0].mxu0
        %v471 = vpop.f32.mrb[0].mxu0
        %472 = vdwg.mxu0
        %v475 = vunpack.c.l.s4 1983009808
        %v476 = vunpack.c.0.s8 %v475
        %v477 = vlaneseq
        %v478 = vshrl.u32 %v477, 7
        %v479 = vsub.s32 %v476, %v478
        %v480 = vrot.slane %v267, %v479
        %v481 = vcombine.high %v480, %v480
        %v483 = vsel %vm328, %v268, 0
        %v486 = vsel %vm262, %v281, 0
        %v489 = vsel %vm262, %v289, 0
        %v492 = vsel %vm262, %v288, 0
        %v495 = vsel %vm262, %v290, 0
        %v498 = vsel %vm262, %v480, 0
        %v501 = vsel %vm262, %v481, 0
        %503 = vmatprep.subr.bf16.mxu0 %v489
        %504 = vmatpush1.bf16.msra.mxu0 %v486
        %505 = vmatprep.subr.bf16.mxu0 0
        %506 = vmatpush1.bf16.msra.mxu0 0
        %507 = vmatprep.subr.bf16.mxu0 0
        %508 = vmatpush1.bf16.msra.mxu0 0
        %509 = vmatprep.subr.bf16.mxu0 0
        %510 = vmatpush1.bf16.msra.mxu0 0
        %511 = vmatprep.subr.bf16.mxu0 0
        %512 = vmatpush1.bf16.msra.mxu0 0
        %513 = vmatprep.subr.bf16.mxu0 0
        %514 = vmatpush1.bf16.msra.mxu0 0
        %515 = vmatprep.subr.bf16.mxu0 0
        %516 = vmatpush1.bf16.msra.mxu0 0
        %517 = vmatprep.subr.bf16.mxu0 0
        %518 = vmatpush1.bf16.msra.mxu0 0
        %519 = vmatprep.subr.bf16.mxu0 0
        %520 = vmatpush1.bf16.msra.mxu0 0
        %521 = vmatprep.subr.bf16.mxu0 0
        %522 = vmatpush1.bf16.msra.mxu0 0
        %523 = vmatprep.subr.bf16.mxu0 0
        %524 = vmatpush1.bf16.msra.mxu0 0
        %525 = vmatprep.subr.bf16.mxu0 0
        %526 = vmatpush1.bf16.msra.mxu0 0
        %527 = vmatprep.subr.bf16.mxu0 0
        %528 = vmatpush1.bf16.msra.mxu0 0
        %529 = vmatprep.subr.bf16.mxu0 0
        %530 = vmatpush1.bf16.msra.mxu0 0
        %531 = vmatprep.subr.bf16.mxu0 0
        %532 = vmatpush1.bf16.msra.mxu0 0
        %533 = vmatprep.subr.bf16.mxu0 0
        %534 = vmatpush1.bf16.msra.mxu0 0
        %535 = vmatprep.mubr.bf16.mxu0 0
        %536 = vmatmul.mubr.bf16.gmra.mrb[0].mxu0 %v483
        %v537 = vpop.f32.mrb[0].mxu0
        %v538 = vadd.f32 %v385, %v537
        %v539 = vpop.f32.mrb[0].mxu0
        %v540 = vadd.f32 %v387, %v539
        %v541 = vpop.f32.mrb[0].mxu0
        %v542 = vpop.f32.mrb[0].mxu0
        %543 = vdwg.mxu0
        %544 = vmatprep.subr.bf16.mxu0 %v495
        %545 = vmatpush1.bf16.msra.mxu0 %v492
        %546 = vmatprep.subr.bf16.mxu0 0
        %547 = vmatpush1.bf16.msra.mxu0 0
        %548 = vmatprep.subr.bf16.mxu0 0
        %549 = vmatpush1.bf16.msra.mxu0 0
        %550 = vmatprep.subr.bf16.mxu0 0
        %551 = vmatpush1.bf16.msra.mxu0 0
        %552 = vmatprep.subr.bf16.mxu0 0
        %553 = vmatpush1.bf16.msra.mxu0 0
        %554 = vmatprep.subr.bf16.mxu0 0
        %555 = vmatpush1.bf16.msra.mxu0 0
        %556 = vmatprep.subr.bf16.mxu0 0
        %557 = vmatpush1.bf16.msra.mxu0 0
        %558 = vmatprep.subr.bf16.mxu0 0
        %559 = vmatpush1.bf16.msra.mxu0 0
        %560 = vmatprep.subr.bf16.mxu0 0
        %561 = vmatpush1.bf16.msra.mxu0 0
        %562 = vmatprep.subr.bf16.mxu0 0
        %563 = vmatpush1.bf16.msra.mxu0 0
        %564 = vmatprep.subr.bf16.mxu0 0
        %565 = vmatpush1.bf16.msra.mxu0 0
        %566 = vmatprep.subr.bf16.mxu0 0
        %567 = vmatpush1.bf16.msra.mxu0 0
        %568 = vmatprep.subr.bf16.mxu0 0
        %569 = vmatpush1.bf16.msra.mxu0 0
        %570 = vmatprep.subr.bf16.mxu0 0
        %571 = vmatpush1.bf16.msra.mxu0 0
        %572 = vmatprep.subr.bf16.mxu0 0
        %573 = vmatpush1.bf16.msra.mxu0 0
        %574 = vmatprep.subr.bf16.mxu0 0
        %575 = vmatpush1.bf16.msra.mxu0 0
        %576 = vmatprep.mubr.bf16.mxu0 0
        %577 = vmatmul.mubr.bf16.gmra.mrb[0].mxu0 %v483
        %v578 = vpop.f32.mrb[0].mxu0
        %v579 = vadd.f32 %v426, %v578
        %v580 = vpop.f32.mrb[0].mxu0
        %v581 = vadd.f32 %v428, %v580
        %v582 = vpop.f32.mrb[0].mxu0
        %v583 = vpop.f32.mrb[0].mxu0
        %584 = vdwg.mxu0
        %585 = vmatprep.subr.bf16.mxu0 %v501
        %586 = vmatpush1.bf16.msra.mxu0 %v498
        %587 = vmatprep.subr.bf16.mxu0 0
        %588 = vmatpush1.bf16.msra.mxu0 0
        %589 = vmatprep.subr.bf16.mxu0 0
        %590 = vmatpush1.bf16.msra.mxu0 0
        %591 = vmatprep.subr.bf16.mxu0 0
        %592 = vmatpush1.bf16.msra.mxu0 0
        %593 = vmatprep.subr.bf16.mxu0 0
        %594 = vmatpush1.bf16.msra.mxu0 0
        %595 = vmatprep.subr.bf16.mxu0 0
        %596 = vmatpush1.bf16.msra.mxu0 0
        %597 = vmatprep.subr.bf16.mxu0 0
        %598 = vmatpush1.bf16.msra.mxu0 0
        %599 = vmatprep.subr.bf16.mxu0 0
        %600 = vmatpush1.bf16.msra.mxu0 0
        %601 = vmatprep.subr.bf16.mxu0 0
        %602 = vmatpush1.bf16.msra.mxu0 0
        %603 = vmatprep.subr.bf16.mxu0 0
        %604 = vmatpush1.bf16.msra.mxu0 0
        %605 = vmatprep.subr.bf16.mxu0 0
        %606 = vmatpush1.bf16.msra.mxu0 0
        %607 = vmatprep.subr.bf16.mxu0 0
        %608 = vmatpush1.bf16.msra.mxu0 0
        %609 = vmatprep.subr.bf16.mxu0 0
        %610 = vmatpush1.bf16.msra.mxu0 0
        %611 = vmatprep.subr.bf16.mxu0 0
        %612 = vmatpush1.bf16.msra.mxu0 0
        %613 = vmatprep.subr.bf16.mxu0 0
        %614 = vmatpush1.bf16.msra.mxu0 0
        %615 = vmatprep.subr.bf16.mxu0 0
        %616 = vmatpush1.bf16.msra.mxu0 0
        %617 = vmatprep.mubr.bf16.mxu0 0
        %618 = vmatmul.mubr.bf16.gmra.mrb[0].mxu0 %v483
        %v619 = vpop.f32.mrb[0].mxu0
        %v620 = vadd.f32 %v467, %v619
        %v621 = vpop.f32.mrb[0].mxu0
        %v622 = vadd.f32 %v469, %v621
        %v623 = vpop.f32.mrb[0].mxu0
        %v624 = vpop.f32.mrb[0].mxu0
        %625 = vdwg.mxu0
        %v626 = vld [vmem:[#allocation2] sm:$0xff]
        %v627 = vld [vmem:[#allocation2 + $0x8] sm:$0x3f]
        %s628 = scalar_lea.vmem %s2, 8
        %v629 = vld [vmem:[%s628] sm:$0xf]
        %v632 = vcombine.high %v626, %v626
        %v634 = vunpack.c.l.s4 1983009808
        %v635 = vunpack.c.0.s8 %v634
        %v636 = vlaneseq
        %v637 = vshrl.u32 %v636, 7
        %v638 = vsub.s32 %v635, %v637
        %v639 = vrot.slane %v626, %v638
        %v641 = vunpack.c.l.s4 1983009808
        %v642 = vunpack.c.0.s8 %v641
        %v643 = vlaneseq
        %v644 = vshrl.u32 %v643, 7
        %v645 = vsub.s32 %v642, %v644
        %v646 = vrot.slane %v632, %v645
        %v647 = vcombine.high %v639, %v639
        %v648 = vcombine.high %v646, %v646
        %v649 = vcombine.high %v627, %v627
        %v651 = vunpack.c.l.s4 1983009808
        %v652 = vunpack.c.0.s8 %v651
        %v653 = vlaneseq
        %v654 = vshrl.u32 %v653, 7
        %v655 = vsub.s32 %v652, %v654
        %v656 = vrot.slane %v627, %v655
        %v658 = vunpack.c.l.s4 1983009808
        %v659 = vunpack.c.0.s8 %v658
        %v660 = vlaneseq
        %v661 = vshrl.u32 %v660, 7
        %v662 = vsub.s32 %v659, %v661
        %v663 = vrot.slane %v649, %v662
        %v664 = vcombine.high %v656, %v656
        %665 = vrot.lane.b32.xlu0 %v639, 126
        %v666 = vpop.permute.xlu0 %665
        %667 = vrot.lane.b32.xlu0 %v647, 126
        %v668 = vpop.permute.xlu0 %667
        %669 = vrot.lane.b32.xlu0 %v646, 126
        %v670 = vpop.permute.xlu0 %669
        %671 = vrot.lane.b32.xlu0 %v648, 126
        %v672 = vpop.permute.xlu0 %671
        %673 = vrot.lane.b32.xlu0 %v656, 126
        %v674 = vpop.permute.xlu0 %673
        %675 = vrot.lane.b32.xlu0 %v664, 126
        %v676 = vpop.permute.xlu0 %675
        %677 = vrot.lane.b32.xlu0 %v663, 126
        %v678 = vpop.permute.xlu0 %677
        %vm679 = vcmask 1031168
        %v680 = vsel %vm679, %v666, %v668
        %v681 = vsel %vm679, %v668, %v670
        %v682 = vsel %vm679, %v670, %v672
        %v683 = vsel %vm679, %v672, %v674
        %v684 = vsel %vm679, %v674, %v676
        %v685 = vsel %vm679, %v676, %v678
        %v687 = vsel %vm328, %v629, 0
        %v690 = vsel %vm262, %v680, 0
        %v693 = vsel %vm262, %v681, 0
        %v696 = vsel %vm262, %v682, 0
        %v699 = vsel %vm262, %v683, 0
        %v702 = vsel %vm262, %v684, 0
        %v705 = vsel %vm262, %v685, 0
        %707 = vmatprep.subr.bf16.mxu0 %v693
        %708 = vmatpush1.bf16.msra.mxu0 %v690
        %709 = vmatprep.subr.bf16.mxu0 0
        %710 = vmatpush1.bf16.msra.mxu0 0
        %711 = vmatprep.subr.bf16.mxu0 0
        %712 = vmatpush1.bf16.msra.mxu0 0
        %713 = vmatprep.subr.bf16.mxu0 0
        %714 = vmatpush1.bf16.msra.mxu0 0
        %715 = vmatprep.subr.bf16.mxu0 0
        %716 = vmatpush1.bf16.msra.mxu0 0
        %717 = vmatprep.subr.bf16.mxu0 0
        %718 = vmatpush1.bf16.msra.mxu0 0
        %719 = vmatprep.subr.bf16.mxu0 0
        %720 = vmatpush1.bf16.msra.mxu0 0
        %721 = vmatprep.subr.bf16.mxu0 0
        %722 = vmatpush1.bf16.msra.mxu0 0
        %723 = vmatprep.subr.bf16.mxu0 0
        %724 = vmatpush1.bf16.msra.mxu0 0
        %725 = vmatprep.subr.bf16.mxu0 0
        %726 = vmatpush1.bf16.msra.mxu0 0
        %727 = vmatprep.subr.bf16.mxu0 0
        %728 = vmatpush1.bf16.msra.mxu0 0
        %729 = vmatprep.subr.bf16.mxu0 0
        %730 = vmatpush1.bf16.msra.mxu0 0
        %731 = vmatprep.subr.bf16.mxu0 0
        %732 = vmatpush1.bf16.msra.mxu0 0
        %733 = vmatprep.subr.bf16.mxu0 0
        %734 = vmatpush1.bf16.msra.mxu0 0
        %735 = vmatprep.subr.bf16.mxu0 0
        %736 = vmatpush1.bf16.msra.mxu0 0
        %737 = vmatprep.subr.bf16.mxu0 0
        %738 = vmatpush1.bf16.msra.mxu0 0
        %739 = vmatprep.mubr.bf16.mxu0 0
        %740 = vmatmul.mubr.bf16.gmra.mrb[0].mxu0 %v687
        %v741 = vpop.f32.mrb[0].mxu0
        %v742 = vadd.f32 0.0, %v741
        %v743 = vpop.f32.mrb[0].mxu0
        %v744 = vadd.f32 0.0, %v743
        %v745 = vpop.f32.mrb[0].mxu0
        %v746 = vpop.f32.mrb[0].mxu0
        %747 = vdwg.mxu0
        %748 = vmatprep.subr.bf16.mxu0 %v699
        %749 = vmatpush1.bf16.msra.mxu0 %v696
        %750 = vmatprep.subr.bf16.mxu0 0
        %751 = vmatpush1.bf16.msra.mxu0 0
        %752 = vmatprep.subr.bf16.mxu0 0
        %753 = vmatpush1.bf16.msra.mxu0 0
        %754 = vmatprep.subr.bf16.mxu0 0
        %755 = vmatpush1.bf16.msra.mxu0 0
        %756 = vmatprep.subr.bf16.mxu0 0
        %757 = vmatpush1.bf16.msra.mxu0 0
        %758 = vmatprep.subr.bf16.mxu0 0
        %759 = vmatpush1.bf16.msra.mxu0 0
        %760 = vmatprep.subr.bf16.mxu0 0
        %761 = vmatpush1.bf16.msra.mxu0 0
        %762 = vmatprep.subr.bf16.mxu0 0
        %763 = vmatpush1.bf16.msra.mxu0 0
        %764 = vmatprep.subr.bf16.mxu0 0
        %765 = vmatpush1.bf16.msra.mxu0 0
        %766 = vmatprep.subr.bf16.mxu0 0
        %767 = vmatpush1.bf16.msra.mxu0 0
        %768 = vmatprep.subr.bf16.mxu0 0
        %769 = vmatpush1.bf16.msra.mxu0 0
        %770 = vmatprep.subr.bf16.mxu0 0
        %771 = vmatpush1.bf16.msra.mxu0 0
        %772 = vmatprep.subr.bf16.mxu0 0
        %773 = vmatpush1.bf16.msra.mxu0 0
        %774 = vmatprep.subr.bf16.mxu0 0
        %775 = vmatpush1.bf16.msra.mxu0 0
        %776 = vmatprep.subr.bf16.mxu0 0
        %777 = vmatpush1.bf16.msra.mxu0 0
        %778 = vmatprep.subr.bf16.mxu0 0
        %779 = vmatpush1.bf16.msra.mxu0 0
        %780 = vmatprep.mubr.bf16.mxu0 0
        %781 = vmatmul.mubr.bf16.gmra.mrb[0].mxu0 %v687
        %v782 = vpop.f32.mrb[0].mxu0
        %v783 = vadd.f32 0.0, %v782
        %v784 = vpop.f32.mrb[0].mxu0
        %v785 = vadd.f32 0.0, %v784
        %v786 = vpop.f32.mrb[0].mxu0
        %v787 = vpop.f32.mrb[0].mxu0
        %788 = vdwg.mxu0
        %789 = vmatprep.subr.bf16.mxu0 %v705
        %790 = vmatpush1.bf16.msra.mxu0 %v702
        %791 = vmatprep.subr.bf16.mxu0 0
        %792 = vmatpush1.bf16.msra.mxu0 0
        %793 = vmatprep.subr.bf16.mxu0 0
        %794 = vmatpush1.bf16.msra.mxu0 0
        %795 = vmatprep.subr.bf16.mxu0 0
        %796 = vmatpush1.bf16.msra.mxu0 0
        %797 = vmatprep.subr.bf16.mxu0 0
        %798 = vmatpush1.bf16.msra.mxu0 0
        %799 = vmatprep.subr.bf16.mxu0 0
        %800 = vmatpush1.bf16.msra.mxu0 0
        %801 = vmatprep.subr.bf16.mxu0 0
        %802 = vmatpush1.bf16.msra.mxu0 0
        %803 = vmatprep.subr.bf16.mxu0 0
        %804 = vmatpush1.bf16.msra.mxu0 0
        %805 = vmatprep.subr.bf16.mxu0 0
        %806 = vmatpush1.bf16.msra.mxu0 0
        %807 = vmatprep.subr.bf16.mxu0 0
        %808 = vmatpush1.bf16.msra.mxu0 0
        %809 = vmatprep.subr.bf16.mxu0 0
        %810 = vmatpush1.bf16.msra.mxu0 0
        %811 = vmatprep.subr.bf16.mxu0 0
        %812 = vmatpush1.bf16.msra.mxu0 0
        %813 = vmatprep.subr.bf16.mxu0 0
        %814 = vmatpush1.bf16.msra.mxu0 0
        %815 = vmatprep.subr.bf16.mxu0 0
        %816 = vmatpush1.bf16.msra.mxu0 0
        %817 = vmatprep.subr.bf16.mxu0 0
        %818 = vmatpush1.bf16.msra.mxu0 0
        %819 = vmatprep.subr.bf16.mxu0 0
        %820 = vmatpush1.bf16.msra.mxu0 0
        %821 = vmatprep.mubr.bf16.mxu0 0
        %822 = vmatmul.mubr.bf16.gmra.mrb[0].mxu0 %v687
        %v823 = vpop.f32.mrb[0].mxu0
        %v824 = vadd.f32 0.0, %v823
        %v825 = vpop.f32.mrb[0].mxu0
        %v826 = vadd.f32 0.0, %v825
        %v827 = vpop.f32.mrb[0].mxu0
        %v828 = vpop.f32.mrb[0].mxu0
        %829 = vdwg.mxu0
        %v830 = vadd.f32 %v538, %v742
        %v831 = vadd.f32 %v540, %v744
        %v832 = vadd.f32 %v579, %v783
        %v833 = vadd.f32 %v581, %v785
        %v834 = vadd.f32 %v620, %v824
        %v835 = vadd.f32 %v622, %v826
        %v836 = vld [vmem:[#allocation2] sm:$0xff]
        %v837 = vld [vmem:[#allocation2 + $0x8] sm:$0x3f]
        %s838 = scalar_lea.vmem %s2, 12
        %v839 = vld [vmem:[%s838] sm:$0xf]
        %v842 = vcombine.high %v836, %v836
        %v844 = vunpack.c.l.s4 1983009808
        %v845 = vunpack.c.0.s8 %v844
        %v846 = vlaneseq
        %v847 = vshrl.u32 %v846, 7
        %v848 = vsub.s32 %v845, %v847
        %v849 = vrot.slane %v836, %v848
        %v851 = vunpack.c.l.s4 1983009808
        %v852 = vunpack.c.0.s8 %v851
        %v853 = vlaneseq
        %v854 = vshrl.u32 %v853, 7
        %v855 = vsub.s32 %v852, %v854
        %v856 = vrot.slane %v842, %v855
        %v857 = vcombine.high %v849, %v849
        %v858 = vcombine.high %v856, %v856
        %v859 = vcombine.high %v837, %v837
        %v861 = vunpack.c.l.s4 1983009808
        %v862 = vunpack.c.0.s8 %v861
        %v863 = vlaneseq
        %v864 = vshrl.u32 %v863, 7
        %v865 = vsub.s32 %v862, %v864
        %v866 = vrot.slane %v837, %v865
        %v868 = vunpack.c.l.s4 1983009808
        %v869 = vunpack.c.0.s8 %v868
        %v870 = vlaneseq
        %v871 = vshrl.u32 %v870, 7
        %v872 = vsub.s32 %v869, %v871
        %v873 = vrot.slane %v859, %v872
        %v874 = vcombine.high %v866, %v866
        %875 = vrot.lane.b32.xlu0 %v849, 110
        %v876 = vpop.permute.xlu0 %875
        %877 = vrot.lane.b32.xlu0 %v857, 110
        %v878 = vpop.permute.xlu0 %877
        %879 = vrot.lane.b32.xlu0 %v856, 110
        %v880 = vpop.permute.xlu0 %879
        %881 = vrot.lane.b32.xlu0 %v858, 110
        %v882 = vpop.permute.xlu0 %881
        %883 = vrot.lane.b32.xlu0 %v866, 110
        %v884 = vpop.permute.xlu0 %883
        %885 = vrot.lane.b32.xlu0 %v874, 110
        %v886 = vpop.permute.xlu0 %885
        %887 = vrot.lane.b32.xlu0 %v873, 110
        %v888 = vpop.permute.xlu0 %887
        %vm889 = vcmask 900096
        %v890 = vsel %vm889, %v876, %v878
        %v891 = vsel %vm889, %v878, %v880
        %v892 = vsel %vm889, %v880, %v882
        %v893 = vsel %vm889, %v882, %v884
        %v894 = vsel %vm889, %v884, %v886
        %v895 = vsel %vm889, %v886, %v888
        %v897 = vsel %vm328, %v839, 0
        %v900 = vsel %vm262, %v890, 0
        %v903 = vsel %vm262, %v891, 0
        %v906 = vsel %vm262, %v892, 0
        %v909 = vsel %vm262, %v893, 0
        %v912 = vsel %vm262, %v894, 0
        %v915 = vsel %vm262, %v895, 0
        %917 = vmatprep.subr.bf16.mxu0 %v903
        %918 = vmatpush1.bf16.msra.mxu0 %v900
        %919 = vmatprep.subr.bf16.mxu0 0
        %920 = vmatpush1.bf16.msra.mxu0 0
        %921 = vmatprep.subr.bf16.mxu0 0
        %922 = vmatpush1.bf16.msra.mxu0 0
        %923 = vmatprep.subr.bf16.mxu0 0
        %924 = vmatpush1.bf16.msra.mxu0 0
        %925 = vmatprep.subr.bf16.mxu0 0
        %926 = vmatpush1.bf16.msra.mxu0 0
        %927 = vmatprep.subr.bf16.mxu0 0
        %928 = vmatpush1.bf16.msra.mxu0 0
        %929 = vmatprep.subr.bf16.mxu0 0
        %930 = vmatpush1.bf16.msra.mxu0 0
        %931 = vmatprep.subr.bf16.mxu0 0
        %932 = vmatpush1.bf16.msra.mxu0 0
        %933 = vmatprep.subr.bf16.mxu0 0
        %934 = vmatpush1.bf16.msra.mxu0 0
        %935 = vmatprep.subr.bf16.mxu0 0
        %936 = vmatpush1.bf16.msra.mxu0 0
        %937 = vmatprep.subr.bf16.mxu0 0
        %938 = vmatpush1.bf16.msra.mxu0 0
        %939 = vmatprep.subr.bf16.mxu0 0
        %940 = vmatpush1.bf16.msra.mxu0 0
        %941 = vmatprep.subr.bf16.mxu0 0
        %942 = vmatpush1.bf16.msra.mxu0 0
        %943 = vmatprep.subr.bf16.mxu0 0
        %944 = vmatpush1.bf16.msra.mxu0 0
        %945 = vmatprep.subr.bf16.mxu0 0
        %946 = vmatpush1.bf16.msra.mxu0 0
        %947 = vmatprep.subr.bf16.mxu0 0
        %948 = vmatpush1.bf16.msra.mxu0 0
        %949 = vmatprep.mubr.bf16.mxu0 0
        %950 = vmatmul.mubr.bf16.gmra.mrb[0].mxu0 %v897
        %v951 = vpop.f32.mrb[0].mxu0
        %v952 = vadd.f32 0.0, %v951
        %v953 = vpop.f32.mrb[0].mxu0
        %v954 = vadd.f32 0.0, %v953
        %v955 = vpop.f32.mrb[0].mxu0
        %v956 = vpop.f32.mrb[0].mxu0
        %957 = vdwg.mxu0
        %958 = vmatprep.subr.bf16.mxu0 %v909
        %959 = vmatpush1.bf16.msra.mxu0 %v906
        %960 = vmatprep.subr.bf16.mxu0 0
        %961 = vmatpush1.bf16.msra.mxu0 0
        %962 = vmatprep.subr.bf16.mxu0 0
        %963 = vmatpush1.bf16.msra.mxu0 0
        %964 = vmatprep.subr.bf16.mxu0 0
        %965 = vmatpush1.bf16.msra.mxu0 0
        %966 = vmatprep.subr.bf16.mxu0 0
        %967 = vmatpush1.bf16.msra.mxu0 0
        %968 = vmatprep.subr.bf16.mxu0 0
        %969 = vmatpush1.bf16.msra.mxu0 0
        %970 = vmatprep.subr.bf16.mxu0 0
        %971 = vmatpush1.bf16.msra.mxu0 0
        %972 = vmatprep.subr.bf16.mxu0 0
        %973 = vmatpush1.bf16.msra.mxu0 0
        %974 = vmatprep.subr.bf16.mxu0 0
        %975 = vmatpush1.bf16.msra.mxu0 0
        %976 = vmatprep.subr.bf16.mxu0 0
        %977 = vmatpush1.bf16.msra.mxu0 0
        %978 = vmatprep.subr.bf16.mxu0 0
        %979 = vmatpush1.bf16.msra.mxu0 0
        %980 = vmatprep.subr.bf16.mxu0 0
        %981 = vmatpush1.bf16.msra.mxu0 0
        %982 = vmatprep.subr.bf16.mxu0 0
        %983 = vmatpush1.bf16.msra.mxu0 0
        %984 = vmatprep.subr.bf16.mxu0 0
        %985 = vmatpush1.bf16.msra.mxu0 0
        %986 = vmatprep.subr.bf16.mxu0 0
        %987 = vmatpush1.bf16.msra.mxu0 0
        %988 = vmatprep.subr.bf16.mxu0 0
        %989 = vmatpush1.bf16.msra.mxu0 0
        %990 = vmatprep.mubr.bf16.mxu0 0
        %991 = vmatmul.mubr.bf16.gmra.mrb[0].mxu0 %v897
        %v992 = vpop.f32.mrb[0].mxu0
        %v993 = vadd.f32 0.0, %v992
        %v994 = vpop.f32.mrb[0].mxu0
        %v995 = vadd.f32 0.0, %v994
        %v996 = vpop.f32.mrb[0].mxu0
        %v997 = vpop.f32.mrb[0].mxu0
        %998 = vdwg.mxu0
        %999 = vmatprep.subr.bf16.mxu0 %v915
        %1000 = vmatpush1.bf16.msra.mxu0 %v912
        %1001 = vmatprep.subr.bf16.mxu0 0
        %1002 = vmatpush1.bf16.msra.mxu0 0
        %1003 = vmatprep.subr.bf16.mxu0 0
        %1004 = vmatpush1.bf16.msra.mxu0 0
        %1005 = vmatprep.subr.bf16.mxu0 0
        %1006 = vmatpush1.bf16.msra.mxu0 0
        %1007 = vmatprep.subr.bf16.mxu0 0
        %1008 = vmatpush1.bf16.msra.mxu0 0
        %1009 = vmatprep.subr.bf16.mxu0 0
        %1010 = vmatpush1.bf16.msra.mxu0 0
        %1011 = vmatprep.subr.bf16.mxu0 0
        %1012 = vmatpush1.bf16.msra.mxu0 0
        %1013 = vmatprep.subr.bf16.mxu0 0
        %1014 = vmatpush1.bf16.msra.mxu0 0
        %1015 = vmatprep.subr.bf16.mxu0 0
        %1016 = vmatpush1.bf16.msra.mxu0 0
        %1017 = vmatprep.subr.bf16.mxu0 0
        %1018 = vmatpush1.bf16.msra.mxu0 0
        %1019 = vmatprep.subr.bf16.mxu0 0
        %1020 = vmatpush1.bf16.msra.mxu0 0
        %1021 = vmatprep.subr.bf16.mxu0 0
        %1022 = vmatpush1.bf16.msra.mxu0 0
        %1023 = vmatprep.subr.bf16.mxu0 0
        %1024 = vmatpush1.bf16.msra.mxu0 0
        %1025 = vmatprep.subr.bf16.mxu0 0
        %1026 = vmatpush1.bf16.msra.mxu0 0
        %1027 = vmatprep.subr.bf16.mxu0 0
        %1028 = vmatpush1.bf16.msra.mxu0 0
        %1029 = vmatprep.subr.bf16.mxu0 0
        %1030 = vmatpush1.bf16.msra.mxu0 0
        %1031 = vmatprep.mubr.bf16.mxu0 0
        %1032 = vmatmul.mubr.bf16.gmra.mrb[0].mxu0 %v897
        %v1033 = vpop.f32.mrb[0].mxu0
        %v1034 = vadd.f32 0.0, %v1033
        %v1035 = vpop.f32.mrb[0].mxu0
        %v1036 = vadd.f32 0.0, %v1035
        %v1037 = vpop.f32.mrb[0].mxu0
        %v1038 = vpop.f32.mrb[0].mxu0
        %1039 = vdwg.mxu0
        %v1040 = vadd.f32 %v830, %v952
        %v1041 = vadd.f32 %v831, %v954
        %v1042 = vadd.f32 %v832, %v993
        %v1043 = vadd.f32 %v833, %v995
        %v1044 = vadd.f32 %v834, %v1034
        %v1045 = vadd.f32 %v835, %v1036
        %v1046 = vld [vmem:[#allocation2] sm:$0xff]
        %v1047 = vld [vmem:[#allocation2 + $0x8] sm:$0x3f]
        %s1048 = scalar_lea.vmem %s2, 16
        %v1049 = vld [vmem:[%s1048] sm:$0xf]
        %v1052 = vcombine.high %v1046, %v1046
        %v1054 = vunpack.c.l.s4 1983009808
        %v1055 = vunpack.c.0.s8 %v1054
        %v1056 = vlaneseq
        %v1057 = vshrl.u32 %v1056, 7
        %v1058 = vsub.s32 %v1055, %v1057
        %v1059 = vrot.slane %v1046, %v1058
        %v1061 = vunpack.c.l.s4 1983009808
        %v1062 = vunpack.c.0.s8 %v1061
        %v1063 = vlaneseq
        %v1064 = vshrl.u32 %v1063, 7
        %v1065 = vsub.s32 %v1062, %v1064
        %v1066 = vrot.slane %v1052, %v1065
        %v1067 = vcombine.high %v1059, %v1059
        %v1068 = vcombine.high %v1066, %v1066
        %v1069 = vcombine.high %v1047, %v1047
        %v1071 = vunpack.c.l.s4 1983009808
        %v1072 = vunpack.c.0.s8 %v1071
        %v1073 = vlaneseq
        %v1074 = vshrl.u32 %v1073, 7
        %v1075 = vsub.s32 %v1072, %v1074
        %v1076 = vrot.slane %v1047, %v1075
        %v1078 = vunpack.c.l.s4 1983009808
        %v1079 = vunpack.c.0.s8 %v1078
        %v1080 = vlaneseq
        %v1081 = vshrl.u32 %v1080, 7
        %v1082 = vsub.s32 %v1079, %v1081
        %v1083 = vrot.slane %v1069, %v1082
        %v1084 = vcombine.high %v1076, %v1076
        %1085 = vrot.lane.b32.xlu0 %v1059, 109
        %v1086 = vpop.permute.xlu0 %1085
        %1087 = vrot.lane.b32.xlu0 %v1067, 109
        %v1088 = vpop.permute.xlu0 %1087
        %1089 = vrot.lane.b32.xlu0 %v1066, 109
        %v1090 = vpop.permute.xlu0 %1089
        %1091 = vrot.lane.b32.xlu0 %v1068, 109
        %v1092 = vpop.permute.xlu0 %1091
        %1093 = vrot.lane.b32.xlu0 %v1076, 109
        %v1094 = vpop.permute.xlu0 %1093
        %1095 = vrot.lane.b32.xlu0 %v1084, 109
        %v1096 = vpop.permute.xlu0 %1095
        %1097 = vrot.lane.b32.xlu0 %v1083, 109
        %v1098 = vpop.permute.xlu0 %1097
        %vm1099 = vcmask 891904
        %v1100 = vsel %vm1099, %v1086, %v1088
        %v1101 = vsel %vm1099, %v1088, %v1090
        %v1102 = vsel %vm1099, %v1090, %v1092
        %v1103 = vsel %vm1099, %v1092, %v1094
        %v1104 = vsel %vm1099, %v1094, %v1096
        %v1105 = vsel %vm1099, %v1096, %v1098
        %v1107 = vsel %vm328, %v1049, 0
        %v1110 = vsel %vm262, %v1100, 0
        %v1113 = vsel %vm262, %v1101, 0
        %v1116 = vsel %vm262, %v1102, 0
        %v1119 = vsel %vm262, %v1103, 0
        %v1122 = vsel %vm262, %v1104, 0
        %v1125 = vsel %vm262, %v1105, 0
        %1127 = vmatprep.subr.bf16.mxu0 %v1113
        %1128 = vmatpush1.bf16.msra.mxu0 %v1110
        %1129 = vmatprep.subr.bf16.mxu0 0
        %1130 = vmatpush1.bf16.msra.mxu0 0
        %1131 = vmatprep.subr.bf16.mxu0 0
        %1132 = vmatpush1.bf16.msra.mxu0 0
        %1133 = vmatprep.subr.bf16.mxu0 0
        %1134 = vmatpush1.bf16.msra.mxu0 0
        %1135 = vmatprep.subr.bf16.mxu0 0
        %1136 = vmatpush1.bf16.msra.mxu0 0
        %1137 = vmatprep.subr.bf16.mxu0 0
        %1138 = vmatpush1.bf16.msra.mxu0 0
        %1139 = vmatprep.subr.bf16.mxu0 0
        %1140 = vmatpush1.bf16.msra.mxu0 0
        %1141 = vmatprep.subr.bf16.mxu0 0
        %1142 = vmatpush1.bf16.msra.mxu0 0
        %1143 = vmatprep.subr.bf16.mxu0 0
        %1144 = vmatpush1.bf16.msra.mxu0 0
        %1145 = vmatprep.subr.bf16.mxu0 0
        %1146 = vmatpush1.bf16.msra.mxu0 0
        %1147 = vmatprep.subr.bf16.mxu0 0
        %1148 = vmatpush1.bf16.msra.mxu0 0
        %1149 = vmatprep.subr.bf16.mxu0 0
        %1150 = vmatpush1.bf16.msra.mxu0 0
        %1151 = vmatprep.subr.bf16.mxu0 0
        %1152 = vmatpush1.bf16.msra.mxu0 0
        %1153 = vmatprep.subr.bf16.mxu0 0
        %1154 = vmatpush1.bf16.msra.mxu0 0
        %1155 = vmatprep.subr.bf16.mxu0 0
        %1156 = vmatpush1.bf16.msra.mxu0 0
        %1157 = vmatprep.subr.bf16.mxu0 0
        %1158 = vmatpush1.bf16.msra.mxu0 0
        %1159 = vmatprep.mubr.bf16.mxu0 0
        %1160 = vmatmul.mubr.bf16.gmra.mrb[0].mxu0 %v1107
        %v1161 = vpop.f32.mrb[0].mxu0
        %v1162 = vadd.f32 0.0, %v1161
        %v1163 = vpop.f32.mrb[0].mxu0
        %v1164 = vadd.f32 0.0, %v1163
        %v1165 = vpop.f32.mrb[0].mxu0
        %v1166 = vpop.f32.mrb[0].mxu0
        %1167 = vdwg.mxu0
        %1168 = vmatprep.subr.bf16.mxu0 %v1119
        %1169 = vmatpush1.bf16.msra.mxu0 %v1116
        %1170 = vmatprep.subr.bf16.mxu0 0
        %1171 = vmatpush1.bf16.msra.mxu0 0
        %1172 = vmatprep.subr.bf16.mxu0 0
        %1173 = vmatpush1.bf16.msra.mxu0 0
        %1174 = vmatprep.subr.bf16.mxu0 0
        %1175 = vmatpush1.bf16.msra.mxu0 0
        %1176 = vmatprep.subr.bf16.mxu0 0
        %1177 = vmatpush1.bf16.msra.mxu0 0
        %1178 = vmatprep.subr.bf16.mxu0 0
        %1179 = vmatpush1.bf16.msra.mxu0 0
        %1180 = vmatprep.subr.bf16.mxu0 0
        %1181 = vmatpush1.bf16.msra.mxu0 0
        %1182 = vmatprep.subr.bf16.mxu0 0
        %1183 = vmatpush1.bf16.msra.mxu0 0
        %1184 = vmatprep.subr.bf16.mxu0 0
        %1185 = vmatpush1.bf16.msra.mxu0 0
        %1186 = vmatprep.subr.bf16.mxu0 0
        %1187 = vmatpush1.bf16.msra.mxu0 0
        %1188 = vmatprep.subr.bf16.mxu0 0
        %1189 = vmatpush1.bf16.msra.mxu0 0
        %1190 = vmatprep.subr.bf16.mxu0 0
        %1191 = vmatpush1.bf16.msra.mxu0 0
        %1192 = vmatprep.subr.bf16.mxu0 0
        %1193 = vmatpush1.bf16.msra.mxu0 0
        %1194 = vmatprep.subr.bf16.mxu0 0
        %1195 = vmatpush1.bf16.msra.mxu0 0
        %1196 = vmatprep.subr.bf16.mxu0 0
        %1197 = vmatpush1.bf16.msra.mxu0 0
        %1198 = vmatprep.subr.bf16.mxu0 0
        %1199 = vmatpush1.bf16.msra.mxu0 0
        %1200 = vmatprep.mubr.bf16.mxu0 0
        %1201 = vmatmul.mubr.bf16.gmra.mrb[0].mxu0 %v1107
        %v1202 = vpop.f32.mrb[0].mxu0
        %v1203 = vadd.f32 0.0, %v1202
        %v1204 = vpop.f32.mrb[0].mxu0
        %v1205 = vadd.f32 0.0, %v1204
        %v1206 = vpop.f32.mrb[0].mxu0
        %v1207 = vpop.f32.mrb[0].mxu0
        %1208 = vdwg.mxu0
        %1209 = vmatprep.subr.bf16.mxu0 %v1125
        %1210 = vmatpush1.bf16.msra.mxu0 %v1122
        %1211 = vmatprep.subr.bf16.mxu0 0
        %1212 = vmatpush1.bf16.msra.mxu0 0
        %1213 = vmatprep.subr.bf16.mxu0 0
        %1214 = vmatpush1.bf16.msra.mxu0 0
        %1215 = vmatprep.subr.bf16.mxu0 0
        %1216 = vmatpush1.bf16.msra.mxu0 0
        %1217 = vmatprep.subr.bf16.mxu0 0
        %1218 = vmatpush1.bf16.msra.mxu0 0
        %1219 = vmatprep.subr.bf16.mxu0 0
        %1220 = vmatpush1.bf16.msra.mxu0 0
        %1221 = vmatprep.subr.bf16.mxu0 0
        %1222 = vmatpush1.bf16.msra.mxu0 0
        %1223 = vmatprep.subr.bf16.mxu0 0
        %1224 = vmatpush1.bf16.msra.mxu0 0
        %1225 = vmatprep.subr.bf16.mxu0 0
        %1226 = vmatpush1.bf16.msra.mxu0 0
        %1227 = vmatprep.subr.bf16.mxu0 0
        %1228 = vmatpush1.bf16.msra.mxu0 0
        %1229 = vmatprep.subr.bf16.mxu0 0
        %1230 = vmatpush1.bf16.msra.mxu0 0
        %1231 = vmatprep.subr.bf16.mxu0 0
        %1232 = vmatpush1.bf16.msra.mxu0 0
        %1233 = vmatprep.subr.bf16.mxu0 0
        %1234 = vmatpush1.bf16.msra.mxu0 0
        %1235 = vmatprep.subr.bf16.mxu0 0
        %1236 = vmatpush1.bf16.msra.mxu0 0
        %1237 = vmatprep.subr.bf16.mxu0 0
        %1238 = vmatpush1.bf16.msra.mxu0 0
        %1239 = vmatprep.subr.bf16.mxu0 0
        %1240 = vmatpush1.bf16.msra.mxu0 0
        %1241 = vmatprep.mubr.bf16.mxu0 0
        %1242 = vmatmul.mubr.bf16.gmra.mrb[0].mxu0 %v1107
        %v1243 = vpop.f32.mrb[0].mxu0
        %v1244 = vadd.f32 0.0, %v1243
        %v1245 = vpop.f32.mrb[0].mxu0
        %v1246 = vadd.f32 0.0, %v1245
        %v1247 = vpop.f32.mrb[0].mxu0
        %v1248 = vpop.f32.mrb[0].mxu0
        %1249 = vdwg.mxu0
        %v1250 = vadd.f32 %v1040, %v1162
        %v1251 = vadd.f32 %v1041, %v1164
        %v1252 = vadd.f32 %v1042, %v1203
        %v1253 = vadd.f32 %v1043, %v1205
        %v1254 = vadd.f32 %v1044, %v1244
        %v1255 = vadd.f32 %v1045, %v1246
        %v1256 = vld [vmem:[#allocation2] sm:$0xff]
        %v1257 = vld [vmem:[#allocation2 + $0x8] sm:$0x3f]
        %s1258 = scalar_lea.vmem %s2, 20
        %v1259 = vld [vmem:[%s1258] sm:$0xf]
        %v1262 = vcombine.high %v1256, %v1256
        %v1264 = vunpack.c.l.s4 1983009808
        %v1265 = vunpack.c.0.s8 %v1264
        %v1266 = vlaneseq
        %v1267 = vshrl.u32 %v1266, 7
        %v1268 = vsub.s32 %v1265, %v1267
        %v1269 = vrot.slane %v1256, %v1268
        %v1271 = vunpack.c.l.s4 1983009808
        %v1272 = vunpack.c.0.s8 %v1271
        %v1273 = vlaneseq
        %v1274 = vshrl.u32 %v1273, 7
        %v1275 = vsub.s32 %v1272, %v1274
        %v1276 = vrot.slane %v1262, %v1275
        %v1277 = vcombine.high %v1269, %v1269
        %v1278 = vcombine.high %v1276, %v1276
        %v1279 = vcombine.high %v1257, %v1257
        %v1281 = vunpack.c.l.s4 1983009808
        %v1282 = vunpack.c.0.s8 %v1281
        %v1283 = vlaneseq
        %v1284 = vshrl.u32 %v1283, 7
        %v1285 = vsub.s32 %v1282, %v1284
        %v1286 = vrot.slane %v1257, %v1285
        %v1288 = vunpack.c.l.s4 1983009808
        %v1289 = vunpack.c.0.s8 %v1288
        %v1290 = vlaneseq
        %v1291 = vshrl.u32 %v1290, 7
        %v1292 = vsub.s32 %v1289, %v1291
        %v1293 = vrot.slane %v1279, %v1292
        %v1294 = vcombine.high %v1286, %v1286
        %1295 = vrot.lane.b32.xlu0 %v1269, 108
        %v1296 = vpop.permute.xlu0 %1295
        %1297 = vrot.lane.b32.xlu0 %v1277, 108
        %v1298 = vpop.permute.xlu0 %1297
        %1299 = vrot.lane.b32.xlu0 %v1276, 108
        %v1300 = vpop.permute.xlu0 %1299
        %1301 = vrot.lane.b32.xlu0 %v1278, 108
        %v1302 = vpop.permute.xlu0 %1301
        %1303 = vrot.lane.b32.xlu0 %v1286, 108
        %v1304 = vpop.permute.xlu0 %1303
        %1305 = vrot.lane.b32.xlu0 %v1294, 108
        %v1306 = vpop.permute.xlu0 %1305
        %1307 = vrot.lane.b32.xlu0 %v1293, 108
        %v1308 = vpop.permute.xlu0 %1307
        %vm1309 = vcmask 883712
        %v1310 = vsel %vm1309, %v1296, %v1298
        %v1311 = vsel %vm1309, %v1298, %v1300
        %v1312 = vsel %vm1309, %v1300, %v1302
        %v1313 = vsel %vm1309, %v1302, %v1304
        %v1314 = vsel %vm1309, %v1304, %v1306
        %v1315 = vsel %vm1309, %v1306, %v1308
        %v1317 = vsel %vm328, %v1259, 0
        %v1320 = vsel %vm262, %v1310, 0
        %v1323 = vsel %vm262, %v1311, 0
        %v1326 = vsel %vm262, %v1312, 0
        %v1329 = vsel %vm262, %v1313, 0
        %v1332 = vsel %vm262, %v1314, 0
        %v1335 = vsel %vm262, %v1315, 0
        %1337 = vmatprep.subr.bf16.mxu0 %v1323
        %1338 = vmatpush1.bf16.msra.mxu0 %v1320
        %1339 = vmatprep.subr.bf16.mxu0 0
        %1340 = vmatpush1.bf16.msra.mxu0 0
        %1341 = vmatprep.subr.bf16.mxu0 0
        %1342 = vmatpush1.bf16.msra.mxu0 0
        %1343 = vmatprep.subr.bf16.mxu0 0
        %1344 = vmatpush1.bf16.msra.mxu0 0
        %1345 = vmatprep.subr.bf16.mxu0 0
        %1346 = vmatpush1.bf16.msra.mxu0 0
        %1347 = vmatprep.subr.bf16.mxu0 0
        %1348 = vmatpush1.bf16.msra.mxu0 0
        %1349 = vmatprep.subr.bf16.mxu0 0
        %1350 = vmatpush1.bf16.msra.mxu0 0
        %1351 = vmatprep.subr.bf16.mxu0 0
        %1352 = vmatpush1.bf16.msra.mxu0 0
        %1353 = vmatprep.subr.bf16.mxu0 0
        %1354 = vmatpush1.bf16.msra.mxu0 0
        %1355 = vmatprep.subr.bf16.mxu0 0
        %1356 = vmatpush1.bf16.msra.mxu0 0
        %1357 = vmatprep.subr.bf16.mxu0 0
        %1358 = vmatpush1.bf16.msra.mxu0 0
        %1359 = vmatprep.subr.bf16.mxu0 0
        %1360 = vmatpush1.bf16.msra.mxu0 0
        %1361 = vmatprep.subr.bf16.mxu0 0
        %1362 = vmatpush1.bf16.msra.mxu0 0
        %1363 = vmatprep.subr.bf16.mxu0 0
        %1364 = vmatpush1.bf16.msra.mxu0 0
        %1365 = vmatprep.subr.bf16.mxu0 0
        %1366 = vmatpush1.bf16.msra.mxu0 0
        %1367 = vmatprep.subr.bf16.mxu0 0
        %1368 = vmatpush1.bf16.msra.mxu0 0
        %1369 = vmatprep.mubr.bf16.mxu0 0
        %1370 = vmatmul.mubr.bf16.gmra.mrb[0].mxu0 %v1317
        %v1371 = vpop.f32.mrb[0].mxu0
        %v1372 = vadd.f32 0.0, %v1371
        %v1373 = vpop.f32.mrb[0].mxu0
        %v1374 = vadd.f32 0.0, %v1373
        %v1375 = vpop.f32.mrb[0].mxu0
        %v1376 = vpop.f32.mrb[0].mxu0
        %1377 = vdwg.mxu0
        %1378 = vmatprep.subr.bf16.mxu0 %v1329
        %1379 = vmatpush1.bf16.msra.mxu0 %v1326
        %1380 = vmatprep.subr.bf16.mxu0 0
        %1381 = vmatpush1.bf16.msra.mxu0 0
        %1382 = vmatprep.subr.bf16.mxu0 0
        %1383 = vmatpush1.bf16.msra.mxu0 0
        %1384 = vmatprep.subr.bf16.mxu0 0
        %1385 = vmatpush1.bf16.msra.mxu0 0
        %1386 = vmatprep.subr.bf16.mxu0 0
        %1387 = vmatpush1.bf16.msra.mxu0 0
        %1388 = vmatprep.subr.bf16.mxu0 0
        %1389 = vmatpush1.bf16.msra.mxu0 0
        %1390 = vmatprep.subr.bf16.mxu0 0
        %1391 = vmatpush1.bf16.msra.mxu0 0
        %1392 = vmatprep.subr.bf16.mxu0 0
        %1393 = vmatpush1.bf16.msra.mxu0 0
        %1394 = vmatprep.subr.bf16.mxu0 0
        %1395 = vmatpush1.bf16.msra.mxu0 0
        %1396 = vmatprep.subr.bf16.mxu0 0
        %1397 = vmatpush1.bf16.msra.mxu0 0
        %1398 = vmatprep.subr.bf16.mxu0 0
        %1399 = vmatpush1.bf16.msra.mxu0 0
        %1400 = vmatprep.subr.bf16.mxu0 0
        %1401 = vmatpush1.bf16.msra.mxu0 0
        %1402 = vmatprep.subr.bf16.mxu0 0
        %1403 = vmatpush1.bf16.msra.mxu0 0
        %1404 = vmatprep.subr.bf16.mxu0 0
        %1405 = vmatpush1.bf16.msra.mxu0 0
        %1406 = vmatprep.subr.bf16.mxu0 0
        %1407 = vmatpush1.bf16.msra.mxu0 0
        %1408 = vmatprep.subr.bf16.mxu0 0
        %1409 = vmatpush1.bf16.msra.mxu0 0
        %1410 = vmatprep.mubr.bf16.mxu0 0
        %1411 = vmatmul.mubr.bf16.gmra.mrb[0].mxu0 %v1317
        %v1412 = vpop.f32.mrb[0].mxu0
        %v1413 = vadd.f32 0.0, %v1412
        %v1414 = vpop.f32.mrb[0].mxu0
        %v1415 = vadd.f32 0.0, %v1414
        %v1416 = vpop.f32.mrb[0].mxu0
        %v1417 = vpop.f32.mrb[0].mxu0
        %1418 = vdwg.mxu0
        %1419 = vmatprep.subr.bf16.mxu0 %v1335
        %1420 = vmatpush1.bf16.msra.mxu0 %v1332
        %1421 = vmatprep.subr.bf16.mxu0 0
        %1422 = vmatpush1.bf16.msra.mxu0 0
        %1423 = vmatprep.subr.bf16.mxu0 0
        %1424 = vmatpush1.bf16.msra.mxu0 0
        %1425 = vmatprep.subr.bf16.mxu0 0
        %1426 = vmatpush1.bf16.msra.mxu0 0
        %1427 = vmatprep.subr.bf16.mxu0 0
        %1428 = vmatpush1.bf16.msra.mxu0 0
        %1429 = vmatprep.subr.bf16.mxu0 0
        %1430 = vmatpush1.bf16.msra.mxu0 0
        %1431 = vmatprep.subr.bf16.mxu0 0
        %1432 = vmatpush1.bf16.msra.mxu0 0
        %1433 = vmatprep.subr.bf16.mxu0 0
        %1434 = vmatpush1.bf16.msra.mxu0 0
        %1435 = vmatprep.subr.bf16.mxu0 0
        %1436 = vmatpush1.bf16.msra.mxu0 0
        %1437 = vmatprep.subr.bf16.mxu0 0
        %1438 = vmatpush1.bf16.msra.mxu0 0
        %1439 = vmatprep.subr.bf16.mxu0 0
        %1440 = vmatpush1.bf16.msra.mxu0 0
        %1441 = vmatprep.subr.bf16.mxu0 0
        %1442 = vmatpush1.bf16.msra.mxu0 0
        %1443 = vmatprep.subr.bf16.mxu0 0
        %1444 = vmatpush1.bf16.msra.mxu0 0
        %1445 = vmatprep.subr.bf16.mxu0 0
        %1446 = vmatpush1.bf16.msra.mxu0 0
        %1447 = vmatprep.subr.bf16.mxu0 0
        %1448 = vmatpush1.bf16.msra.mxu0 0
        %1449 = vmatprep.subr.bf16.mxu0 0
        %1450 = vmatpush1.bf16.msra.mxu0 0
        %1451 = vmatprep.mubr.bf16.mxu0 0
        %1452 = vmatmul.mubr.bf16.gmra.mrb[0].mxu0 %v1317
        %v1453 = vpop.f32.mrb[0].mxu0
        %v1454 = vadd.f32 0.0, %v1453
        %v1455 = vpop.f32.mrb[0].mxu0
        %v1456 = vadd.f32 0.0, %v1455
        %v1457 = vpop.f32.mrb[0].mxu0
        %v1458 = vpop.f32.mrb[0].mxu0
        %1459 = vdwg.mxu0
        %v1460 = vadd.f32 %v1250, %v1372
        %v1461 = vadd.f32 %v1251, %v1374
        %v1462 = vadd.f32 %v1252, %v1413
        %v1463 = vadd.f32 %v1253, %v1415
        %v1464 = vadd.f32 %v1254, %v1454
        %v1465 = vadd.f32 %v1255, %v1456
        %v1466 = vld [vmem:[#allocation2] sm:$0xff]
        %v1467 = vld [vmem:[#allocation2 + $0x8] sm:$0x3f]
        %s1468 = scalar_lea.vmem %s2, 24
        %v1469 = vld [vmem:[%s1468] sm:$0xf]
        %v1472 = vcombine.high %v1466, %v1466
        %v1474 = vunpack.c.l.s4 1983009808
        %v1475 = vunpack.c.0.s8 %v1474
        %v1476 = vlaneseq
        %v1477 = vshrl.u32 %v1476, 7
        %v1478 = vsub.s32 %v1475, %v1477
        %v1479 = vrot.slane %v1466, %v1478
        %v1481 = vunpack.c.l.s4 1983009808
        %v1482 = vunpack.c.0.s8 %v1481
        %v1483 = vlaneseq
        %v1484 = vshrl.u32 %v1483, 7
        %v1485 = vsub.s32 %v1482, %v1484
        %v1486 = vrot.slane %v1472, %v1485
        %v1487 = vcombine.high %v1479, %v1479
        %v1488 = vcombine.high %v1486, %v1486
        %v1489 = vcombine.high %v1467, %v1467
        %v1491 = vunpack.c.l.s4 1983009808
        %v1492 = vunpack.c.0.s8 %v1491
        %v1493 = vlaneseq
        %v1494 = vshrl.u32 %v1493, 7
        %v1495 = vsub.s32 %v1492, %v1494
        %v1496 = vrot.slane %v1467, %v1495
        %v1498 = vunpack.c.l.s4 1983009808
        %v1499 = vunpack.c.0.s8 %v1498
        %v1500 = vlaneseq
        %v1501 = vshrl.u32 %v1500, 7
        %v1502 = vsub.s32 %v1499, %v1501
        %v1503 = vrot.slane %v1489, %v1502
        %v1504 = vcombine.high %v1496, %v1496
        %1505 = vrot.lane.b32.xlu0 %v1479, 92
        %v1506 = vpop.permute.xlu0 %1505
        %1507 = vrot.lane.b32.xlu0 %v1487, 92
        %v1508 = vpop.permute.xlu0 %1507
        %1509 = vrot.lane.b32.xlu0 %v1486, 92
        %v1510 = vpop.permute.xlu0 %1509
        %1511 = vrot.lane.b32.xlu0 %v1488, 92
        %v1512 = vpop.permute.xlu0 %1511
        %1513 = vrot.lane.b32.xlu0 %v1496, 92
        %v1514 = vpop.permute.xlu0 %1513
        %1515 = vrot.lane.b32.xlu0 %v1504, 92
        %v1516 = vpop.permute.xlu0 %1515
        %1517 = vrot.lane.b32.xlu0 %v1503, 92
        %v1518 = vpop.permute.xlu0 %1517
        %vm1519 = vcmask 752640
        %v1520 = vsel %vm1519, %v1506, %v1508
        %v1521 = vsel %vm1519, %v1508, %v1510
        %v1522 = vsel %vm1519, %v1510, %v1512
        %v1523 = vsel %vm1519, %v1512, %v1514
        %v1524 = vsel %vm1519, %v1514, %v1516
        %v1525 = vsel %vm1519, %v1516, %v1518
        %v1527 = vsel %vm328, %v1469, 0
        %v1530 = vsel %vm262, %v1520, 0
        %v1533 = vsel %vm262, %v1521, 0
        %v1536 = vsel %vm262, %v1522, 0
        %v1539 = vsel %vm262, %v1523, 0
        %v1542 = vsel %vm262, %v1524, 0
        %v1545 = vsel %vm262, %v1525, 0
        %1547 = vmatprep.subr.bf16.mxu0 %v1533
        %1548 = vmatpush1.bf16.msra.mxu0 %v1530
        %1549 = vmatprep.subr.bf16.mxu0 0
        %1550 = vmatpush1.bf16.msra.mxu0 0
        %1551 = vmatprep.subr.bf16.mxu0 0
        %1552 = vmatpush1.bf16.msra.mxu0 0
        %1553 = vmatprep.subr.bf16.mxu0 0
        %1554 = vmatpush1.bf16.msra.mxu0 0
        %1555 = vmatprep.subr.bf16.mxu0 0
        %1556 = vmatpush1.bf16.msra.mxu0 0
        %1557 = vmatprep.subr.bf16.mxu0 0
        %1558 = vmatpush1.bf16.msra.mxu0 0
        %1559 = vmatprep.subr.bf16.mxu0 0
        %1560 = vmatpush1.bf16.msra.mxu0 0
        %1561 = vmatprep.subr.bf16.mxu0 0
        %1562 = vmatpush1.bf16.msra.mxu0 0
        %1563 = vmatprep.subr.bf16.mxu0 0
        %1564 = vmatpush1.bf16.msra.mxu0 0
        %1565 = vmatprep.subr.bf16.mxu0 0
        %1566 = vmatpush1.bf16.msra.mxu0 0
        %1567 = vmatprep.subr.bf16.mxu0 0
        %1568 = vmatpush1.bf16.msra.mxu0 0
        %1569 = vmatprep.subr.bf16.mxu0 0
        %1570 = vmatpush1.bf16.msra.mxu0 0
        %1571 = vmatprep.subr.bf16.mxu0 0
        %1572 = vmatpush1.bf16.msra.mxu0 0
        %1573 = vmatprep.subr.bf16.mxu0 0
        %1574 = vmatpush1.bf16.msra.mxu0 0
        %1575 = vmatprep.subr.bf16.mxu0 0
        %1576 = vmatpush1.bf16.msra.mxu0 0
        %1577 = vmatprep.subr.bf16.mxu0 0
        %1578 = vmatpush1.bf16.msra.mxu0 0
        %1579 = vmatprep.mubr.bf16.mxu0 0
        %1580 = vmatmul.mubr.bf16.gmra.mrb[0].mxu0 %v1527
        %v1581 = vpop.f32.mrb[0].mxu0
        %v1582 = vadd.f32 0.0, %v1581
        %v1583 = vpop.f32.mrb[0].mxu0
        %v1584 = vadd.f32 0.0, %v1583
        %v1585 = vpop.f32.mrb[0].mxu0
        %v1586 = vpop.f32.mrb[0].mxu0
        %1587 = vdwg.mxu0
        %1588 = vmatprep.subr.bf16.mxu0 %v1539
        %1589 = vmatpush1.bf16.msra.mxu0 %v1536
        %1590 = vmatprep.subr.bf16.mxu0 0
        %1591 = vmatpush1.bf16.msra.mxu0 0
        %1592 = vmatprep.subr.bf16.mxu0 0
        %1593 = vmatpush1.bf16.msra.mxu0 0
        %1594 = vmatprep.subr.bf16.mxu0 0
        %1595 = vmatpush1.bf16.msra.mxu0 0
        %1596 = vmatprep.subr.bf16.mxu0 0
        %1597 = vmatpush1.bf16.msra.mxu0 0
        %1598 = vmatprep.subr.bf16.mxu0 0
        %1599 = vmatpush1.bf16.msra.mxu0 0
        %1600 = vmatprep.subr.bf16.mxu0 0
        %1601 = vmatpush1.bf16.msra.mxu0 0
        %1602 = vmatprep.subr.bf16.mxu0 0
        %1603 = vmatpush1.bf16.msra.mxu0 0
        %1604 = vmatprep.subr.bf16.mxu0 0
        %1605 = vmatpush1.bf16.msra.mxu0 0
        %1606 = vmatprep.subr.bf16.mxu0 0
        %1607 = vmatpush1.bf16.msra.mxu0 0
        %1608 = vmatprep.subr.bf16.mxu0 0
        %1609 = vmatpush1.bf16.msra.mxu0 0
        %1610 = vmatprep.subr.bf16.mxu0 0
        %1611 = vmatpush1.bf16.msra.mxu0 0
        %1612 = vmatprep.subr.bf16.mxu0 0
        %1613 = vmatpush1.bf16.msra.mxu0 0
        %1614 = vmatprep.subr.bf16.mxu0 0
        %1615 = vmatpush1.bf16.msra.mxu0 0
        %1616 = vmatprep.subr.bf16.mxu0 0
        %1617 = vmatpush1.bf16.msra.mxu0 0
        %1618 = vmatprep.subr.bf16.mxu0 0
        %1619 = vmatpush1.bf16.msra.mxu0 0
        %1620 = vmatprep.mubr.bf16.mxu0 0
        %1621 = vmatmul.mubr.bf16.gmra.mrb[0].mxu0 %v1527
        %v1622 = vpop.f32.mrb[0].mxu0
        %v1623 = vadd.f32 0.0, %v1622
        %v1624 = vpop.f32.mrb[0].mxu0
        %v1625 = vadd.f32 0.0, %v1624
        %v1626 = vpop.f32.mrb[0].mxu0
        %v1627 = vpop.f32.mrb[0].mxu0
        %1628 = vdwg.mxu0
        %1629 = vmatprep.subr.bf16.mxu0 %v1545
        %1630 = vmatpush1.bf16.msra.mxu0 %v1542
        %1631 = vmatprep.subr.bf16.mxu0 0
        %1632 = vmatpush1.bf16.msra.mxu0 0
        %1633 = vmatprep.subr.bf16.mxu0 0
        %1634 = vmatpush1.bf16.msra.mxu0 0
        %1635 = vmatprep.subr.bf16.mxu0 0
        %1636 = vmatpush1.bf16.msra.mxu0 0
        %1637 = vmatprep.subr.bf16.mxu0 0
        %1638 = vmatpush1.bf16.msra.mxu0 0
        %1639 = vmatprep.subr.bf16.mxu0 0
        %1640 = vmatpush1.bf16.msra.mxu0 0
        %1641 = vmatprep.subr.bf16.mxu0 0
        %1642 = vmatpush1.bf16.msra.mxu0 0
        %1643 = vmatprep.subr.bf16.mxu0 0
        %1644 = vmatpush1.bf16.msra.mxu0 0
        %1645 = vmatprep.subr.bf16.mxu0 0
        %1646 = vmatpush1.bf16.msra.mxu0 0
        %1647 = vmatprep.subr.bf16.mxu0 0
        %1648 = vmatpush1.bf16.msra.mxu0 0
        %1649 = vmatprep.subr.bf16.mxu0 0
        %1650 = vmatpush1.bf16.msra.mxu0 0
        %1651 = vmatprep.subr.bf16.mxu0 0
        %1652 = vmatpush1.bf16.msra.mxu0 0
        %1653 = vmatprep.subr.bf16.mxu0 0
        %1654 = vmatpush1.bf16.msra.mxu0 0
        %1655 = vmatprep.subr.bf16.mxu0 0
        %1656 = vmatpush1.bf16.msra.mxu0 0
        %1657 = vmatprep.subr.bf16.mxu0 0
        %1658 = vmatpush1.bf16.msra.mxu0 0
        %1659 = vmatprep.subr.bf16.mxu0 0
        %1660 = vmatpush1.bf16.msra.mxu0 0
        %1661 = vmatprep.mubr.bf16.mxu0 0
        %1662 = vmatmul.mubr.bf16.gmra.mrb[0].mxu0 %v1527
        %v1663 = vpop.f32.mrb[0].mxu0
        %v1664 = vadd.f32 0.0, %v1663
        %v1665 = vpop.f32.mrb[0].mxu0
        %v1666 = vadd.f32 0.0, %v1665
        %v1667 = vpop.f32.mrb[0].mxu0
        %v1668 = vpop.f32.mrb[0].mxu0
        %1669 = vdwg.mxu0
        %v1670 = vadd.f32 %v1460, %v1582
        %v1671 = vadd.f32 %v1461, %v1584
        %v1672 = vadd.f32 %v1462, %v1623
        %v1673 = vadd.f32 %v1463, %v1625
        %v1674 = vadd.f32 %v1464, %v1664
        %v1675 = vadd.f32 %v1465, %v1666
        %v1676 = vld [vmem:[#allocation2] sm:$0xff]
        %v1677 = vld [vmem:[#allocation2 + $0x8] sm:$0x3f]
        %s1678 = scalar_lea.vmem %s2, 28
        %v1679 = vld [vmem:[%s1678] sm:$0xf]
        %v1682 = vcombine.high %v1676, %v1676
        %v1684 = vunpack.c.l.s4 1983009808
        %v1685 = vunpack.c.0.s8 %v1684
        %v1686 = vlaneseq
        %v1687 = vshrl.u32 %v1686, 7
        %v1688 = vsub.s32 %v1685, %v1687
        %v1689 = vrot.slane %v1676, %v1688
        %v1691 = vunpack.c.l.s4 1983009808
        %v1692 = vunpack.c.0.s8 %v1691
        %v1693 = vlaneseq
        %v1694 = vshrl.u32 %v1693, 7
        %v1695 = vsub.s32 %v1692, %v1694
        %v1696 = vrot.slane %v1682, %v1695
        %v1697 = vcombine.high %v1689, %v1689
        %v1698 = vcombine.high %v1696, %v1696
        %v1699 = vcombine.high %v1677, %v1677
        %v1701 = vunpack.c.l.s4 1983009808
        %v1702 = vunpack.c.0.s8 %v1701
        %v1703 = vlaneseq
        %v1704 = vshrl.u32 %v1703, 7
        %v1705 = vsub.s32 %v1702, %v1704
        %v1706 = vrot.slane %v1677, %v1705
        %v1708 = vunpack.c.l.s4 1983009808
        %v1709 = vunpack.c.0.s8 %v1708
        %v1710 = vlaneseq
        %v1711 = vshrl.u32 %v1710, 7
        %v1712 = vsub.s32 %v1709, %v1711
        %v1713 = vrot.slane %v1699, %v1712
        %v1714 = vcombine.high %v1706, %v1706
        %1715 = vrot.lane.b32.xlu0 %v1689, 91
        %v1716 = vpop.permute.xlu0 %1715
        %1717 = vrot.lane.b32.xlu0 %v1697, 91
        %v1718 = vpop.permute.xlu0 %1717
        %1719 = vrot.lane.b32.xlu0 %v1696, 91
        %v1720 = vpop.permute.xlu0 %1719
        %1721 = vrot.lane.b32.xlu0 %v1698, 91
        %v1722 = vpop.permute.xlu0 %1721
        %1723 = vrot.lane.b32.xlu0 %v1706, 91
        %v1724 = vpop.permute.xlu0 %1723
        %1725 = vrot.lane.b32.xlu0 %v1714, 91
        %v1726 = vpop.permute.xlu0 %1725
        %1727 = vrot.lane.b32.xlu0 %v1713, 91
        %v1728 = vpop.permute.xlu0 %1727
        %vm1729 = vcmask 744448
        %v1730 = vsel %vm1729, %v1716, %v1718
        %v1731 = vsel %vm1729, %v1718, %v1720
        %v1732 = vsel %vm1729, %v1720, %v1722
        %v1733 = vsel %vm1729, %v1722, %v1724
        %v1734 = vsel %vm1729, %v1724, %v1726
        %v1735 = vsel %vm1729, %v1726, %v1728
        %v1737 = vsel %vm328, %v1679, 0
        %v1740 = vsel %vm262, %v1730, 0
        %v1743 = vsel %vm262, %v1731, 0
        %v1746 = vsel %vm262, %v1732, 0
        %v1749 = vsel %vm262, %v1733, 0
        %v1752 = vsel %vm262, %v1734, 0
        %v1755 = vsel %vm262, %v1735, 0
        %1757 = vmatprep.subr.bf16.mxu0 %v1743
        %1758 = vmatpush1.bf16.msra.mxu0 %v1740
        %1759 = vmatprep.subr.bf16.mxu0 0
        %1760 = vmatpush1.bf16.msra.mxu0 0
        %1761 = vmatprep.subr.bf16.mxu0 0
        %1762 = vmatpush1.bf16.msra.mxu0 0
        %1763 = vmatprep.subr.bf16.mxu0 0
        %1764 = vmatpush1.bf16.msra.mxu0 0
        %1765 = vmatprep.subr.bf16.mxu0 0
        %1766 = vmatpush1.bf16.msra.mxu0 0
        %1767 = vmatprep.subr.bf16.mxu0 0
        %1768 = vmatpush1.bf16.msra.mxu0 0
        %1769 = vmatprep.subr.bf16.mxu0 0
        %1770 = vmatpush1.bf16.msra.mxu0 0
        %1771 = vmatprep.subr.bf16.mxu0 0
        %1772 = vmatpush1.bf16.msra.mxu0 0
        %1773 = vmatprep.subr.bf16.mxu0 0
        %1774 = vmatpush1.bf16.msra.mxu0 0
        %1775 = vmatprep.subr.bf16.mxu0 0
        %1776 = vmatpush1.bf16.msra.mxu0 0
        %1777 = vmatprep.subr.bf16.mxu0 0
        %1778 = vmatpush1.bf16.msra.mxu0 0
        %1779 = vmatprep.subr.bf16.mxu0 0
        %1780 = vmatpush1.bf16.msra.mxu0 0
        %1781 = vmatprep.subr.bf16.mxu0 0
        %1782 = vmatpush1.bf16.msra.mxu0 0
        %1783 = vmatprep.subr.bf16.mxu0 0
        %1784 = vmatpush1.bf16.msra.mxu0 0
        %1785 = vmatprep.subr.bf16.mxu0 0
        %1786 = vmatpush1.bf16.msra.mxu0 0
        %1787 = vmatprep.subr.bf16.mxu0 0
        %1788 = vmatpush1.bf16.msra.mxu0 0
        %1789 = vmatprep.mubr.bf16.mxu0 0
        %1790 = vmatmul.mubr.bf16.gmra.mrb[0].mxu0 %v1737
        %v1791 = vpop.f32.mrb[0].mxu0
        %v1792 = vadd.f32 0.0, %v1791
        %v1793 = vpop.f32.mrb[0].mxu0
        %v1794 = vadd.f32 0.0, %v1793
        %v1795 = vpop.f32.mrb[0].mxu0
        %v1796 = vpop.f32.mrb[0].mxu0
        %1797 = vdwg.mxu0
        %1798 = vmatprep.subr.bf16.mxu0 %v1749
        %1799 = vmatpush1.bf16.msra.mxu0 %v1746
        %1800 = vmatprep.subr.bf16.mxu0 0
        %1801 = vmatpush1.bf16.msra.mxu0 0
        %1802 = vmatprep.subr.bf16.mxu0 0
        %1803 = vmatpush1.bf16.msra.mxu0 0
        %1804 = vmatprep.subr.bf16.mxu0 0
        %1805 = vmatpush1.bf16.msra.mxu0 0
        %1806 = vmatprep.subr.bf16.mxu0 0
        %1807 = vmatpush1.bf16.msra.mxu0 0
        %1808 = vmatprep.subr.bf16.mxu0 0
        %1809 = vmatpush1.bf16.msra.mxu0 0
        %1810 = vmatprep.subr.bf16.mxu0 0
        %1811 = vmatpush1.bf16.msra.mxu0 0
        %1812 = vmatprep.subr.bf16.mxu0 0
        %1813 = vmatpush1.bf16.msra.mxu0 0
        %1814 = vmatprep.subr.bf16.mxu0 0
        %1815 = vmatpush1.bf16.msra.mxu0 0
        %1816 = vmatprep.subr.bf16.mxu0 0
        %1817 = vmatpush1.bf16.msra.mxu0 0
        %1818 = vmatprep.subr.bf16.mxu0 0
        %1819 = vmatpush1.bf16.msra.mxu0 0
        %1820 = vmatprep.subr.bf16.mxu0 0
        %1821 = vmatpush1.bf16.msra.mxu0 0
        %1822 = vmatprep.subr.bf16.mxu0 0
        %1823 = vmatpush1.bf16.msra.mxu0 0
        %1824 = vmatprep.subr.bf16.mxu0 0
        %1825 = vmatpush1.bf16.msra.mxu0 0
        %1826 = vmatprep.subr.bf16.mxu0 0
        %1827 = vmatpush1.bf16.msra.mxu0 0
        %1828 = vmatprep.subr.bf16.mxu0 0
        %1829 = vmatpush1.bf16.msra.mxu0 0
        %1830 = vmatprep.mubr.bf16.mxu0 0
        %1831 = vmatmul.mubr.bf16.gmra.mrb[0].mxu0 %v1737
        %v1832 = vpop.f32.mrb[0].mxu0
        %v1833 = vadd.f32 0.0, %v1832
        %v1834 = vpop.f32.mrb[0].mxu0
        %v1835 = vadd.f32 0.0, %v1834
        %v1836 = vpop.f32.mrb[0].mxu0
        %v1837 = vpop.f32.mrb[0].mxu0
        %1838 = vdwg.mxu0
        %1839 = vmatprep.subr.bf16.mxu0 %v1755
        %1840 = vmatpush1.bf16.msra.mxu0 %v1752
        %1841 = vmatprep.subr.bf16.mxu0 0
        %1842 = vmatpush1.bf16.msra.mxu0 0
        %1843 = vmatprep.subr.bf16.mxu0 0
        %1844 = vmatpush1.bf16.msra.mxu0 0
        %1845 = vmatprep.subr.bf16.mxu0 0
        %1846 = vmatpush1.bf16.msra.mxu0 0
        %1847 = vmatprep.subr.bf16.mxu0 0
        %1848 = vmatpush1.bf16.msra.mxu0 0
        %1849 = vmatprep.subr.bf16.mxu0 0
        %1850 = vmatpush1.bf16.msra.mxu0 0
        %1851 = vmatprep.subr.bf16.mxu0 0
        %1852 = vmatpush1.bf16.msra.mxu0 0
        %1853 = vmatprep.subr.bf16.mxu0 0
        %1854 = vmatpush1.bf16.msra.mxu0 0
        %1855 = vmatprep.subr.bf16.mxu0 0
        %1856 = vmatpush1.bf16.msra.mxu0 0
        %1857 = vmatprep.subr.bf16.mxu0 0
        %1858 = vmatpush1.bf16.msra.mxu0 0
        %1859 = vmatprep.subr.bf16.mxu0 0
        %1860 = vmatpush1.bf16.msra.mxu0 0
        %1861 = vmatprep.subr.bf16.mxu0 0
        %1862 = vmatpush1.bf16.msra.mxu0 0
        %1863 = vmatprep.subr.bf16.mxu0 0
        %1864 = vmatpush1.bf16.msra.mxu0 0
        %1865 = vmatprep.subr.bf16.mxu0 0
        %1866 = vmatpush1.bf16.msra.mxu0 0
        %1867 = vmatprep.subr.bf16.mxu0 0
        %1868 = vmatpush1.bf16.msra.mxu0 0
        %1869 = vmatprep.subr.bf16.mxu0 0
        %1870 = vmatpush1.bf16.msra.mxu0 0
        %1871 = vmatprep.mubr.bf16.mxu0 0
        %1872 = vmatmul.mubr.bf16.gmra.mrb[0].mxu0 %v1737
        %v1873 = vpop.f32.mrb[0].mxu0
        %v1874 = vadd.f32 0.0, %v1873
        %v1875 = vpop.f32.mrb[0].mxu0
        %v1876 = vadd.f32 0.0, %v1875
        %v1877 = vpop.f32.mrb[0].mxu0
        %v1878 = vpop.f32.mrb[0].mxu0
        %1879 = vdwg.mxu0
        %v1880 = vadd.f32 %v1670, %v1792
        %v1881 = vadd.f32 %v1671, %v1794
        %v1882 = vadd.f32 %v1672, %v1833
        %v1883 = vadd.f32 %v1673, %v1835
        %v1884 = vadd.f32 %v1674, %v1874
        %v1885 = vadd.f32 %v1675, %v1876
        %v1886 = vld [vmem:[#allocation2] sm:$0xff]
        %v1887 = vld [vmem:[#allocation2 + $0x8] sm:$0x3f]
        %s1888 = scalar_lea.vmem %s2, 32
        %v1889 = vld [vmem:[%s1888] sm:$0xf]
        %v1892 = vcombine.high %v1886, %v1886
        %v1894 = vunpack.c.l.s4 1983009808
        %v1895 = vunpack.c.0.s8 %v1894
        %v1896 = vlaneseq
        %v1897 = vshrl.u32 %v1896, 7
        %v1898 = vsub.s32 %v1895, %v1897
        %v1899 = vrot.slane %v1886, %v1898
        %v1901 = vunpack.c.l.s4 1983009808
        %v1902 = vunpack.c.0.s8 %v1901
        %v1903 = vlaneseq
        %v1904 = vshrl.u32 %v1903, 7
        %v1905 = vsub.s32 %v1902, %v1904
        %v1906 = vrot.slane %v1892, %v1905
        %v1907 = vcombine.high %v1899, %v1899
        %v1908 = vcombine.high %v1906, %v1906
        %v1909 = vcombine.high %v1887, %v1887
        %v1911 = vunpack.c.l.s4 1983009808
        %v1912 = vunpack.c.0.s8 %v1911
        %v1913 = vlaneseq
        %v1914 = vshrl.u32 %v1913, 7
        %v1915 = vsub.s32 %v1912, %v1914
        %v1916 = vrot.slane %v1887, %v1915
        %v1918 = vunpack.c.l.s4 1983009808
        %v1919 = vunpack.c.0.s8 %v1918
        %v1920 = vlaneseq
        %v1921 = vshrl.u32 %v1920, 7
        %v1922 = vsub.s32 %v1919, %v1921
        %v1923 = vrot.slane %v1909, %v1922
        %v1924 = vcombine.high %v1916, %v1916
        %1925 = vrot.lane.b32.xlu0 %v1899, 90
        %v1926 = vpop.permute.xlu0 %1925
        %1927 = vrot.lane.b32.xlu0 %v1907, 90
        %v1928 = vpop.permute.xlu0 %1927
        %1929 = vrot.lane.b32.xlu0 %v1906, 90
        %v1930 = vpop.permute.xlu0 %1929
        %1931 = vrot.lane.b32.xlu0 %v1908, 90
        %v1932 = vpop.permute.xlu0 %1931
        %1933 = vrot.lane.b32.xlu0 %v1916, 90
        %v1934 = vpop.permute.xlu0 %1933
        %1935 = vrot.lane.b32.xlu0 %v1924, 90
        %v1936 = vpop.permute.xlu0 %1935
        %1937 = vrot.lane.b32.xlu0 %v1923, 90
        %v1938 = vpop.permute.xlu0 %1937
        %vm1939 = vcmask 736256
        %v1940 = vsel %vm1939, %v1926, %v1928
        %v1941 = vsel %vm1939, %v1928, %v1930
        %v1942 = vsel %vm1939, %v1930, %v1932
        %v1943 = vsel %vm1939, %v1932, %v1934
        %v1944 = vsel %vm1939, %v1934, %v1936
        %v1945 = vsel %vm1939, %v1936, %v1938
        %v1947 = vsel %vm328, %v1889, 0
        %v1950 = vsel %vm262, %v1940, 0
        %v1953 = vsel %vm262, %v1941, 0
        %v1956 = vsel %vm262, %v1942, 0
        %v1959 = vsel %vm262, %v1943, 0
        %v1962 = vsel %vm262, %v1944, 0
        %v1965 = vsel %vm262, %v1945, 0
        %1967 = vmatprep.subr.bf16.mxu0 %v1953
        %1968 = vmatpush1.bf16.msra.mxu0 %v1950
        %1969 = vmatprep.subr.bf16.mxu0 0
        %1970 = vmatpush1.bf16.msra.mxu0 0
        %1971 = vmatprep.subr.bf16.mxu0 0
        %1972 = vmatpush1.bf16.msra.mxu0 0
        %1973 = vmatprep.subr.bf16.mxu0 0
        %1974 = vmatpush1.bf16.msra.mxu0 0
        %1975 = vmatprep.subr.bf16.mxu0 0
        %1976 = vmatpush1.bf16.msra.mxu0 0
        %1977 = vmatprep.subr.bf16.mxu0 0
        %1978 = vmatpush1.bf16.msra.mxu0 0
        %1979 = vmatprep.subr.bf16.mxu0 0
        %1980 = vmatpush1.bf16.msra.mxu0 0
        %1981 = vmatprep.subr.bf16.mxu0 0
        %1982 = vmatpush1.bf16.msra.mxu0 0
        %1983 = vmatprep.subr.bf16.mxu0 0
        %1984 = vmatpush1.bf16.msra.mxu0 0
        %1985 = vmatprep.subr.bf16.mxu0 0
        %1986 = vmatpush1.bf16.msra.mxu0 0
        %1987 = vmatprep.subr.bf16.mxu0 0
        %1988 = vmatpush1.bf16.msra.mxu0 0
        %1989 = vmatprep.subr.bf16.mxu0 0
        %1990 = vmatpush1.bf16.msra.mxu0 0
        %1991 = vmatprep.subr.bf16.mxu0 0
        %1992 = vmatpush1.bf16.msra.mxu0 0
        %1993 = vmatprep.subr.bf16.mxu0 0
        %1994 = vmatpush1.bf16.msra.mxu0 0
        %1995 = vmatprep.subr.bf16.mxu0 0
        %1996 = vmatpush1.bf16.msra.mxu0 0
        %1997 = vmatprep.subr.bf16.mxu0 0
        %1998 = vmatpush1.bf16.msra.mxu0 0
        %1999 = vmatprep.mubr.bf16.mxu0 0
        %2000 = vmatmul.mubr.bf16.gmra.mrb[0].mxu0 %v1947
        %v2001 = vpop.f32.mrb[0].mxu0
        %v2002 = vadd.f32 0.0, %v2001
        %v2003 = vpop.f32.mrb[0].mxu0
        %v2004 = vadd.f32 0.0, %v2003
        %v2005 = vpop.f32.mrb[0].mxu0
        %v2006 = vpop.f32.mrb[0].mxu0
        %2007 = vdwg.mxu0
        %2008 = vmatprep.subr.bf16.mxu0 %v1959
        %2009 = vmatpush1.bf16.msra.mxu0 %v1956
        %2010 = vmatprep.subr.bf16.mxu0 0
        %2011 = vmatpush1.bf16.msra.mxu0 0
        %2012 = vmatprep.subr.bf16.mxu0 0
        %2013 = vmatpush1.bf16.msra.mxu0 0
        %2014 = vmatprep.subr.bf16.mxu0 0
        %2015 = vmatpush1.bf16.msra.mxu0 0
        %2016 = vmatprep.subr.bf16.mxu0 0
        %2017 = vmatpush1.bf16.msra.mxu0 0
        %2018 = vmatprep.subr.bf16.mxu0 0
        %2019 = vmatpush1.bf16.msra.mxu0 0
        %2020 = vmatprep.subr.bf16.mxu0 0
        %2021 = vmatpush1.bf16.msra.mxu0 0
        %2022 = vmatprep.subr.bf16.mxu0 0
        %2023 = vmatpush1.bf16.msra.mxu0 0
        %2024 = vmatprep.subr.bf16.mxu0 0
        %2025 = vmatpush1.bf16.msra.mxu0 0
        %2026 = vmatprep.subr.bf16.mxu0 0
        %2027 = vmatpush1.bf16.msra.mxu0 0
        %2028 = vmatprep.subr.bf16.mxu0 0
        %2029 = vmatpush1.bf16.msra.mxu0 0
        %2030 = vmatprep.subr.bf16.mxu0 0
        %2031 = vmatpush1.bf16.msra.mxu0 0
        %2032 = vmatprep.subr.bf16.mxu0 0
        %2033 = vmatpush1.bf16.msra.mxu0 0
        %2034 = vmatprep.subr.bf16.mxu0 0
        %2035 = vmatpush1.bf16.msra.mxu0 0
        %2036 = vmatprep.subr.bf16.mxu0 0
        %2037 = vmatpush1.bf16.msra.mxu0 0
        %2038 = vmatprep.subr.bf16.mxu0 0
        %2039 = vmatpush1.bf16.msra.mxu0 0
        %2040 = vmatprep.mubr.bf16.mxu0 0
        %2041 = vmatmul.mubr.bf16.gmra.mrb[0].mxu0 %v1947
        %v2042 = vpop.f32.mrb[0].mxu0
        %v2043 = vadd.f32 0.0, %v2042
        %v2044 = vpop.f32.mrb[0].mxu0
        %v2045 = vadd.f32 0.0, %v2044
        %v2046 = vpop.f32.mrb[0].mxu0
        %v2047 = vpop.f32.mrb[0].mxu0
        %2048 = vdwg.mxu0
        %2049 = vmatprep.subr.bf16.mxu0 %v1965
        %2050 = vmatpush1.bf16.msra.mxu0 %v1962
        %2051 = vmatprep.subr.bf16.mxu0 0
        %2052 = vmatpush1.bf16.msra.mxu0 0
        %2053 = vmatprep.subr.bf16.mxu0 0
        %2054 = vmatpush1.bf16.msra.mxu0 0
        %2055 = vmatprep.subr.bf16.mxu0 0
        %2056 = vmatpush1.bf16.msra.mxu0 0
        %2057 = vmatprep.subr.bf16.mxu0 0
        %2058 = vmatpush1.bf16.msra.mxu0 0
        %2059 = vmatprep.subr.bf16.mxu0 0
        %2060 = vmatpush1.bf16.msra.mxu0 0
        %2061 = vmatprep.subr.bf16.mxu0 0
        %2062 = vmatpush1.bf16.msra.mxu0 0
        %2063 = vmatprep.subr.bf16.mxu0 0
        %2064 = vmatpush1.bf16.msra.mxu0 0
        %2065 = vmatprep.subr.bf16.mxu0 0
        %2066 = vmatpush1.bf16.msra.mxu0 0
        %2067 = vmatprep.subr.bf16.mxu0 0
        %2068 = vmatpush1.bf16.msra.mxu0 0
        %2069 = vmatprep.subr.bf16.mxu0 0
        %2070 = vmatpush1.bf16.msra.mxu0 0
        %2071 = vmatprep.subr.bf16.mxu0 0
        %2072 = vmatpush1.bf16.msra.mxu0 0
        %2073 = vmatprep.subr.bf16.mxu0 0
        %2074 = vmatpush1.bf16.msra.mxu0 0
        %2075 = vmatprep.subr.bf16.mxu0 0
        %2076 = vmatpush1.bf16.msra.mxu0 0
        %2077 = vmatprep.subr.bf16.mxu0 0
        %2078 = vmatpush1.bf16.msra.mxu0 0
        %2079 = vmatprep.subr.bf16.mxu0 0
        %2080 = vmatpush1.bf16.msra.mxu0 0
        %2081 = vmatprep.mubr.bf16.mxu0 0
        %2082 = vmatmul.mubr.bf16.gmra.mrb[0].mxu0 %v1947
        %v2083 = vpop.f32.mrb[0].mxu0
        %v2084 = vadd.f32 0.0, %v2083
        %v2085 = vpop.f32.mrb[0].mxu0
        %v2086 = vadd.f32 0.0, %v2085
        %v2087 = vpop.f32.mrb[0].mxu0
        %v2088 = vpop.f32.mrb[0].mxu0
        %2089 = vdwg.mxu0
        %v2090 = vadd.f32 %v1880, %v2002
        %v2091 = vadd.f32 %v1881, %v2004
        %v2092 = vadd.f32 %v1882, %v2043
        %v2093 = vadd.f32 %v1883, %v2045
        %v2094 = vadd.f32 %v1884, %v2084
        %v2095 = vadd.f32 %v1885, %v2086
        %v2096 = vld [vmem:[#allocation2 + $0x4] sm:$0xff]
        %v2097 = vld [vmem:[#allocation2 + $0xc] sm:$0x3f]
        %s2098 = scalar_lea.vmem %s2, 36
        %v2099 = vld [vmem:[%s2098] sm:$0xf]
        %v2102 = vcombine.high %v2096, %v2096
        %v2104 = vunpack.c.l.s4 1983009808
        %v2105 = vunpack.c.0.s8 %v2104
        %v2106 = vlaneseq
        %v2107 = vshrl.u32 %v2106, 7
        %v2108 = vsub.s32 %v2105, %v2107
        %v2109 = vrot.slane %v2096, %v2108
        %v2111 = vunpack.c.l.s4 1983009808
        %v2112 = vunpack.c.0.s8 %v2111
        %v2113 = vlaneseq
        %v2114 = vshrl.u32 %v2113, 7
        %v2115 = vsub.s32 %v2112, %v2114
        %v2116 = vrot.slane %v2102, %v2115
        %v2117 = vcombine.high %v2109, %v2109
        %v2118 = vcombine.high %v2116, %v2116
        %v2119 = vcombine.high %v2097, %v2097
        %v2121 = vunpack.c.l.s4 1983009808
        %v2122 = vunpack.c.0.s8 %v2121
        %v2123 = vlaneseq
        %v2124 = vshrl.u32 %v2123, 7
        %v2125 = vsub.s32 %v2122, %v2124
        %v2126 = vrot.slane %v2097, %v2125
        %v2128 = vunpack.c.l.s4 1983009808
        %v2129 = vunpack.c.0.s8 %v2128
        %v2130 = vlaneseq
        %v2131 = vshrl.u32 %v2130, 7
        %v2132 = vsub.s32 %v2129, %v2131
        %v2133 = vrot.slane %v2119, %v2132
        %v2134 = vcombine.high %v2126, %v2126
        %2135 = vrot.lane.b32.xlu0 %v2109, 60
        %v2136 = vpop.permute.xlu0 %2135
        %2137 = vrot.lane.b32.xlu0 %v2117, 60
        %v2138 = vpop.permute.xlu0 %2137
        %2139 = vrot.lane.b32.xlu0 %v2116, 60
        %v2140 = vpop.permute.xlu0 %2139
        %2141 = vrot.lane.b32.xlu0 %v2118, 60
        %v2142 = vpop.permute.xlu0 %2141
        %2143 = vrot.lane.b32.xlu0 %v2126, 60
        %v2144 = vpop.permute.xlu0 %2143
        %2145 = vrot.lane.b32.xlu0 %v2134, 60
        %v2146 = vpop.permute.xlu0 %2145
        %2147 = vrot.lane.b32.xlu0 %v2133, 60
        %v2148 = vpop.permute.xlu0 %2147
        %vm2149 = vcmask 490496
        %v2150 = vsel %vm2149, %v2136, %v2138
        %v2151 = vsel %vm2149, %v2138, %v2140
        %v2152 = vsel %vm2149, %v2140, %v2142
        %v2153 = vsel %vm2149, %v2142, %v2144
        %v2154 = vsel %vm2149, %v2144, %v2146
        %v2155 = vsel %vm2149, %v2146, %v2148
        %v2157 = vsel %vm328, %v2099, 0
        %v2160 = vsel %vm262, %v2150, 0
        %v2163 = vsel %vm262, %v2151, 0
        %v2166 = vsel %vm262, %v2152, 0
        %v2169 = vsel %vm262, %v2153, 0
        %v2172 = vsel %vm262, %v2154, 0
        %v2175 = vsel %vm262, %v2155, 0
        %2177 = vmatprep.subr.bf16.mxu0 %v2163
        %2178 = vmatpush1.bf16.msra.mxu0 %v2160
        %2179 = vmatprep.subr.bf16.mxu0 0
        %2180 = vmatpush1.bf16.msra.mxu0 0
        %2181 = vmatprep.subr.bf16.mxu0 0
        %2182 = vmatpush1.bf16.msra.mxu0 0
        %2183 = vmatprep.subr.bf16.mxu0 0
        %2184 = vmatpush1.bf16.msra.mxu0 0
        %2185 = vmatprep.subr.bf16.mxu0 0
        %2186 = vmatpush1.bf16.msra.mxu0 0
        %2187 = vmatprep.subr.bf16.mxu0 0
        %2188 = vmatpush1.bf16.msra.mxu0 0
        %2189 = vmatprep.subr.bf16.mxu0 0
        %2190 = vmatpush1.bf16.msra.mxu0 0
        %2191 = vmatprep.subr.bf16.mxu0 0
        %2192 = vmatpush1.bf16.msra.mxu0 0
        %2193 = vmatprep.subr.bf16.mxu0 0
        %2194 = vmatpush1.bf16.msra.mxu0 0
        %2195 = vmatprep.subr.bf16.mxu0 0
        %2196 = vmatpush1.bf16.msra.mxu0 0
        %2197 = vmatprep.subr.bf16.mxu0 0
        %2198 = vmatpush1.bf16.msra.mxu0 0
        %2199 = vmatprep.subr.bf16.mxu0 0
        %2200 = vmatpush1.bf16.msra.mxu0 0
        %2201 = vmatprep.subr.bf16.mxu0 0
        %2202 = vmatpush1.bf16.msra.mxu0 0
        %2203 = vmatprep.subr.bf16.mxu0 0
        %2204 = vmatpush1.bf16.msra.mxu0 0
        %2205 = vmatprep.subr.bf16.mxu0 0
        %2206 = vmatpush1.bf16.msra.mxu0 0
        %2207 = vmatprep.subr.bf16.mxu0 0
        %2208 = vmatpush1.bf16.msra.mxu0 0
        %2209 = vmatprep.mubr.bf16.mxu0 0
        %2210 = vmatmul.mubr.bf16.gmra.mrb[0].mxu0 %v2157
        %v2211 = vpop.f32.mrb[0].mxu0
        %v2212 = vadd.f32 0.0, %v2211
        %v2213 = vpop.f32.mrb[0].mxu0
        %v2214 = vadd.f32 0.0, %v2213
        %v2215 = vpop.f32.mrb[0].mxu0
        %v2216 = vpop.f32.mrb[0].mxu0
        %2217 = vdwg.mxu0
        %2218 = vmatprep.subr.bf16.mxu0 %v2169
        %2219 = vmatpush1.bf16.msra.mxu0 %v2166
        %2220 = vmatprep.subr.bf16.mxu0 0
        %2221 = vmatpush1.bf16.msra.mxu0 0
        %2222 = vmatprep.subr.bf16.mxu0 0
        %2223 = vmatpush1.bf16.msra.mxu0 0
        %2224 = vmatprep.subr.bf16.mxu0 0
        %2225 = vmatpush1.bf16.msra.mxu0 0
        %2226 = vmatprep.subr.bf16.mxu0 0
        %2227 = vmatpush1.bf16.msra.mxu0 0
        %2228 = vmatprep.subr.bf16.mxu0 0
        %2229 = vmatpush1.bf16.msra.mxu0 0
        %2230 = vmatprep.subr.bf16.mxu0 0
        %2231 = vmatpush1.bf16.msra.mxu0 0
        %2232 = vmatprep.subr.bf16.mxu0 0
        %2233 = vmatpush1.bf16.msra.mxu0 0
        %2234 = vmatprep.subr.bf16.mxu0 0
        %2235 = vmatpush1.bf16.msra.mxu0 0
        %2236 = vmatprep.subr.bf16.mxu0 0
        %2237 = vmatpush1.bf16.msra.mxu0 0
        %2238 = vmatprep.subr.bf16.mxu0 0
        %2239 = vmatpush1.bf16.msra.mxu0 0
        %2240 = vmatprep.subr.bf16.mxu0 0
        %2241 = vmatpush1.bf16.msra.mxu0 0
        %2242 = vmatprep.subr.bf16.mxu0 0
        %2243 = vmatpush1.bf16.msra.mxu0 0
        %2244 = vmatprep.subr.bf16.mxu0 0
        %2245 = vmatpush1.bf16.msra.mxu0 0
        %2246 = vmatprep.subr.bf16.mxu0 0
        %2247 = vmatpush1.bf16.msra.mxu0 0
        %2248 = vmatprep.subr.bf16.mxu0 0
        %2249 = vmatpush1.bf16.msra.mxu0 0
        %2250 = vmatprep.mubr.bf16.mxu0 0
        %2251 = vmatmul.mubr.bf16.gmra.mrb[0].mxu0 %v2157
        %v2252 = vpop.f32.mrb[0].mxu0
        %v2253 = vadd.f32 0.0, %v2252
        %v2254 = vpop.f32.mrb[0].mxu0
        %v2255 = vadd.f32 0.0, %v2254
        %v2256 = vpop.f32.mrb[0].mxu0
        %v2257 = vpop.f32.mrb[0].mxu0
        %2258 = vdwg.mxu0
        %2259 = vmatprep.subr.bf16.mxu0 %v2175
        %2260 = vmatpush1.bf16.msra.mxu0 %v2172
        %2261 = vmatprep.subr.bf16.mxu0 0
        %2262 = vmatpush1.bf16.msra.mxu0 0
        %2263 = vmatprep.subr.bf16.mxu0 0
        %2264 = vmatpush1.bf16.msra.mxu0 0
        %2265 = vmatprep.subr.bf16.mxu0 0
        %2266 = vmatpush1.bf16.msra.mxu0 0
        %2267 = vmatprep.subr.bf16.mxu0 0
        %2268 = vmatpush1.bf16.msra.mxu0 0
        %2269 = vmatprep.subr.bf16.mxu0 0
        %2270 = vmatpush1.bf16.msra.mxu0 0
        %2271 = vmatprep.subr.bf16.mxu0 0
        %2272 = vmatpush1.bf16.msra.mxu0 0
        %2273 = vmatprep.subr.bf16.mxu0 0
        %2274 = vmatpush1.bf16.msra.mxu0 0
        %2275 = vmatprep.subr.bf16.mxu0 0
        %2276 = vmatpush1.bf16.msra.mxu0 0
        %2277 = vmatprep.subr.bf16.mxu0 0
        %2278 = vmatpush1.bf16.msra.mxu0 0
        %2279 = vmatprep.subr.bf16.mxu0 0
        %2280 = vmatpush1.bf16.msra.mxu0 0
        %2281 = vmatprep.subr.bf16.mxu0 0
        %2282 = vmatpush1.bf16.msra.mxu0 0
        %2283 = vmatprep.subr.bf16.mxu0 0
        %2284 = vmatpush1.bf16.msra.mxu0 0
        %2285 = vmatprep.subr.bf16.mxu0 0
        %2286 = vmatpush1.bf16.msra.mxu0 0
        %2287 = vmatprep.subr.bf16.mxu0 0
        %2288 = vmatpush1.bf16.msra.mxu0 0
        %2289 = vmatprep.subr.bf16.mxu0 0
        %2290 = vmatpush1.bf16.msra.mxu0 0
        %2291 = vmatprep.mubr.bf16.mxu0 0
        %2292 = vmatmul.mubr.bf16.gmra.mrb[0].mxu0 %v2157
        %v2293 = vpop.f32.mrb[0].mxu0
        %v2294 = vadd.f32 0.0, %v2293
        %v2295 = vpop.f32.mrb[0].mxu0
        %v2296 = vadd.f32 0.0, %v2295
        %v2297 = vpop.f32.mrb[0].mxu0
        %v2298 = vpop.f32.mrb[0].mxu0
        %2299 = vdwg.mxu0
        %v2300 = vadd.f32 %v2090, %v2212
        %v2301 = vadd.f32 %v2091, %v2214
        %v2302 = vadd.f32 %v2092, %v2253
        %v2303 = vadd.f32 %v2093, %v2255
        %v2304 = vadd.f32 %v2094, %v2294
        %v2305 = vadd.f32 %v2095, %v2296
        %v2306 = vld [vmem:[#allocation2 + $0x4] sm:$0xff]
        %v2307 = vld [vmem:[#allocation2 + $0xc] sm:$0x3f]
        %s2308 = scalar_lea.vmem %s2, 40
        %v2309 = vld [vmem:[%s2308] sm:$0xf]
        %v2312 = vcombine.high %v2306, %v2306
        %v2314 = vunpack.c.l.s4 1983009808
        %v2315 = vunpack.c.0.s8 %v2314
        %v2316 = vlaneseq
        %v2317 = vshrl.u32 %v2316, 7
        %v2318 = vsub.s32 %v2315, %v2317
        %v2319 = vrot.slane %v2306, %v2318
        %v2321 = vunpack.c.l.s4 1983009808
        %v2322 = vunpack.c.0.s8 %v2321
        %v2323 = vlaneseq
        %v2324 = vshrl.u32 %v2323, 7
        %v2325 = vsub.s32 %v2322, %v2324
        %v2326 = vrot.slane %v2312, %v2325
        %v2327 = vcombine.high %v2319, %v2319
        %v2328 = vcombine.high %v2326, %v2326
        %v2329 = vcombine.high %v2307, %v2307
        %v2331 = vunpack.c.l.s4 1983009808
        %v2332 = vunpack.c.0.s8 %v2331
        %v2333 = vlaneseq
        %v2334 = vshrl.u32 %v2333, 7
        %v2335 = vsub.s32 %v2332, %v2334
        %v2336 = vrot.slane %v2307, %v2335
        %v2338 = vunpack.c.l.s4 1983009808
        %v2339 = vunpack.c.0.s8 %v2338
        %v2340 = vlaneseq
        %v2341 = vshrl.u32 %v2340, 7
        %v2342 = vsub.s32 %v2339, %v2341
        %v2343 = vrot.slane %v2329, %v2342
        %v2344 = vcombine.high %v2336, %v2336
        %2345 = vrot.lane.b32.xlu0 %v2319, 59
        %v2346 = vpop.permute.xlu0 %2345
        %2347 = vrot.lane.b32.xlu0 %v2327, 59
        %v2348 = vpop.permute.xlu0 %2347
        %2349 = vrot.lane.b32.xlu0 %v2326, 59
        %v2350 = vpop.permute.xlu0 %2349
        %2351 = vrot.lane.b32.xlu0 %v2328, 59
        %v2352 = vpop.permute.xlu0 %2351
        %2353 = vrot.lane.b32.xlu0 %v2336, 59
        %v2354 = vpop.permute.xlu0 %2353
        %2355 = vrot.lane.b32.xlu0 %v2344, 59
        %v2356 = vpop.permute.xlu0 %2355
        %2357 = vrot.lane.b32.xlu0 %v2343, 59
        %v2358 = vpop.permute.xlu0 %2357
        %vm2359 = vcmask 482304
        %v2360 = vsel %vm2359, %v2346, %v2348
        %v2361 = vsel %vm2359, %v2348, %v2350
        %v2362 = vsel %vm2359, %v2350, %v2352
        %v2363 = vsel %vm2359, %v2352, %v2354
        %v2364 = vsel %vm2359, %v2354, %v2356
        %v2365 = vsel %vm2359, %v2356, %v2358
        %v2367 = vsel %vm328, %v2309, 0
        %v2370 = vsel %vm262, %v2360, 0
        %v2373 = vsel %vm262, %v2361, 0
        %v2376 = vsel %vm262, %v2362, 0
        %v2379 = vsel %vm262, %v2363, 0
        %v2382 = vsel %vm262, %v2364, 0
        %v2385 = vsel %vm262, %v2365, 0
        %2387 = vmatprep.subr.bf16.mxu0 %v2373
        %2388 = vmatpush1.bf16.msra.mxu0 %v2370
        %2389 = vmatprep.subr.bf16.mxu0 0
        %2390 = vmatpush1.bf16.msra.mxu0 0
        %2391 = vmatprep.subr.bf16.mxu0 0
        %2392 = vmatpush1.bf16.msra.mxu0 0
        %2393 = vmatprep.subr.bf16.mxu0 0
        %2394 = vmatpush1.bf16.msra.mxu0 0
        %2395 = vmatprep.subr.bf16.mxu0 0
        %2396 = vmatpush1.bf16.msra.mxu0 0
        %2397 = vmatprep.subr.bf16.mxu0 0
        %2398 = vmatpush1.bf16.msra.mxu0 0
        %2399 = vmatprep.subr.bf16.mxu0 0
        %2400 = vmatpush1.bf16.msra.mxu0 0
        %2401 = vmatprep.subr.bf16.mxu0 0
        %2402 = vmatpush1.bf16.msra.mxu0 0
        %2403 = vmatprep.subr.bf16.mxu0 0
        %2404 = vmatpush1.bf16.msra.mxu0 0
        %2405 = vmatprep.subr.bf16.mxu0 0
        %2406 = vmatpush1.bf16.msra.mxu0 0
        %2407 = vmatprep.subr.bf16.mxu0 0
        %2408 = vmatpush1.bf16.msra.mxu0 0
        %2409 = vmatprep.subr.bf16.mxu0 0
        %2410 = vmatpush1.bf16.msra.mxu0 0
        %2411 = vmatprep.subr.bf16.mxu0 0
        %2412 = vmatpush1.bf16.msra.mxu0 0
        %2413 = vmatprep.subr.bf16.mxu0 0
        %2414 = vmatpush1.bf16.msra.mxu0 0
        %2415 = vmatprep.subr.bf16.mxu0 0
        %2416 = vmatpush1.bf16.msra.mxu0 0
        %2417 = vmatprep.subr.bf16.mxu0 0
        %2418 = vmatpush1.bf16.msra.mxu0 0
        %2419 = vmatprep.mubr.bf16.mxu0 0
        %2420 = vmatmul.mubr.bf16.gmra.mrb[0].mxu0 %v2367
        %v2421 = vpop.f32.mrb[0].mxu0
        %v2422 = vadd.f32 0.0, %v2421
        %v2423 = vpop.f32.mrb[0].mxu0
        %v2424 = vadd.f32 0.0, %v2423
        %v2425 = vpop.f32.mrb[0].mxu0
        %v2426 = vpop.f32.mrb[0].mxu0
        %2427 = vdwg.mxu0
        %2428 = vmatprep.subr.bf16.mxu0 %v2379
        %2429 = vmatpush1.bf16.msra.mxu0 %v2376
        %2430 = vmatprep.subr.bf16.mxu0 0
        %2431 = vmatpush1.bf16.msra.mxu0 0
        %2432 = vmatprep.subr.bf16.mxu0 0
        %2433 = vmatpush1.bf16.msra.mxu0 0
        %2434 = vmatprep.subr.bf16.mxu0 0
        %2435 = vmatpush1.bf16.msra.mxu0 0
        %2436 = vmatprep.subr.bf16.mxu0 0
        %2437 = vmatpush1.bf16.msra.mxu0 0
        %2438 = vmatprep.subr.bf16.mxu0 0
        %2439 = vmatpush1.bf16.msra.mxu0 0
        %2440 = vmatprep.subr.bf16.mxu0 0
        %2441 = vmatpush1.bf16.msra.mxu0 0
        %2442 = vmatprep.subr.bf16.mxu0 0
        %2443 = vmatpush1.bf16.msra.mxu0 0
        %2444 = vmatprep.subr.bf16.mxu0 0
        %2445 = vmatpush1.bf16.msra.mxu0 0
        %2446 = vmatprep.subr.bf16.mxu0 0
        %2447 = vmatpush1.bf16.msra.mxu0 0
        %2448 = vmatprep.subr.bf16.mxu0 0
        %2449 = vmatpush1.bf16.msra.mxu0 0
        %2450 = vmatprep.subr.bf16.mxu0 0
        %2451 = vmatpush1.bf16.msra.mxu0 0
        %2452 = vmatprep.subr.bf16.mxu0 0
        %2453 = vmatpush1.bf16.msra.mxu0 0
        %2454 = vmatprep.subr.bf16.mxu0 0
        %2455 = vmatpush1.bf16.msra.mxu0 0
        %2456 = vmatprep.subr.bf16.mxu0 0
        %2457 = vmatpush1.bf16.msra.mxu0 0
        %2458 = vmatprep.subr.bf16.mxu0 0
        %2459 = vmatpush1.bf16.msra.mxu0 0
        %2460 = vmatprep.mubr.bf16.mxu0 0
        %2461 = vmatmul.mubr.bf16.gmra.mrb[0].mxu0 %v2367
        %v2462 = vpop.f32.mrb[0].mxu0
        %v2463 = vadd.f32 0.0, %v2462
        %v2464 = vpop.f32.mrb[0].mxu0
        %v2465 = vadd.f32 0.0, %v2464
        %v2466 = vpop.f32.mrb[0].mxu0
        %v2467 = vpop.f32.mrb[0].mxu0
        %2468 = vdwg.mxu0
        %2469 = vmatprep.subr.bf16.mxu0 %v2385
        %2470 = vmatpush1.bf16.msra.mxu0 %v2382
        %2471 = vmatprep.subr.bf16.mxu0 0
        %2472 = vmatpush1.bf16.msra.mxu0 0
        %2473 = vmatprep.subr.bf16.mxu0 0
        %2474 = vmatpush1.bf16.msra.mxu0 0
        %2475 = vmatprep.subr.bf16.mxu0 0
        %2476 = vmatpush1.bf16.msra.mxu0 0
        %2477 = vmatprep.subr.bf16.mxu0 0
        %2478 = vmatpush1.bf16.msra.mxu0 0
        %2479 = vmatprep.subr.bf16.mxu0 0
        %2480 = vmatpush1.bf16.msra.mxu0 0
        %2481 = vmatprep.subr.bf16.mxu0 0
        %2482 = vmatpush1.bf16.msra.mxu0 0
        %2483 = vmatprep.subr.bf16.mxu0 0
        %2484 = vmatpush1.bf16.msra.mxu0 0
        %2485 = vmatprep.subr.bf16.mxu0 0
        %2486 = vmatpush1.bf16.msra.mxu0 0
        %2487 = vmatprep.subr.bf16.mxu0 0
        %2488 = vmatpush1.bf16.msra.mxu0 0
        %2489 = vmatprep.subr.bf16.mxu0 0
        %2490 = vmatpush1.bf16.msra.mxu0 0
        %2491 = vmatprep.subr.bf16.mxu0 0
        %2492 = vmatpush1.bf16.msra.mxu0 0
        %2493 = vmatprep.subr.bf16.mxu0 0
        %2494 = vmatpush1.bf16.msra.mxu0 0
        %2495 = vmatprep.subr.bf16.mxu0 0
        %2496 = vmatpush1.bf16.msra.mxu0 0
        %2497 = vmatprep.subr.bf16.mxu0 0
        %2498 = vmatpush1.bf16.msra.mxu0 0
        %2499 = vmatprep.subr.bf16.mxu0 0
        %2500 = vmatpush1.bf16.msra.mxu0 0
        %2501 = vmatprep.mubr.bf16.mxu0 0
        %2502 = vmatmul.mubr.bf16.gmra.mrb[0].mxu0 %v2367
        %v2503 = vpop.f32.mrb[0].mxu0
        %v2504 = vadd.f32 0.0, %v2503
        %v2505 = vpop.f32.mrb[0].mxu0
        %v2506 = vadd.f32 0.0, %v2505
        %v2507 = vpop.f32.mrb[0].mxu0
        %v2508 = vpop.f32.mrb[0].mxu0
        %2509 = vdwg.mxu0
        %v2510 = vadd.f32 %v2300, %v2422
        %v2511 = vadd.f32 %v2301, %v2424
        %v2512 = vadd.f32 %v2302, %v2463
        %v2513 = vadd.f32 %v2303, %v2465
        %v2514 = vadd.f32 %v2304, %v2504
        %v2515 = vadd.f32 %v2305, %v2506
        %v2516 = vld [vmem:[#allocation2 + $0x4] sm:$0xff]
        %v2517 = vld [vmem:[#allocation2 + $0xc] sm:$0x3f]
        %s2518 = scalar_lea.vmem %s2, 44
        %v2519 = vld [vmem:[%s2518] sm:$0xf]
        %v2522 = vcombine.high %v2516, %v2516
        %v2524 = vunpack.c.l.s4 1983009808
        %v2525 = vunpack.c.0.s8 %v2524
        %v2526 = vlaneseq
        %v2527 = vshrl.u32 %v2526, 7
        %v2528 = vsub.s32 %v2525, %v2527
        %v2529 = vrot.slane %v2516, %v2528
        %v2531 = vunpack.c.l.s4 1983009808
        %v2532 = vunpack.c.0.s8 %v2531
        %v2533 = vlaneseq
        %v2534 = vshrl.u32 %v2533, 7
        %v2535 = vsub.s32 %v2532, %v2534
        %v2536 = vrot.slane %v2522, %v2535
        %v2537 = vcombine.high %v2529, %v2529
        %v2538 = vcombine.high %v2536, %v2536
        %v2539 = vcombine.high %v2517, %v2517
        %v2541 = vunpack.c.l.s4 1983009808
        %v2542 = vunpack.c.0.s8 %v2541
        %v2543 = vlaneseq
        %v2544 = vshrl.u32 %v2543, 7
        %v2545 = vsub.s32 %v2542, %v2544
        %v2546 = vrot.slane %v2517, %v2545
        %v2548 = vunpack.c.l.s4 1983009808
        %v2549 = vunpack.c.0.s8 %v2548
        %v2550 = vlaneseq
        %v2551 = vshrl.u32 %v2550, 7
        %v2552 = vsub.s32 %v2549, %v2551
        %v2553 = vrot.slane %v2539, %v2552
        %v2554 = vcombine.high %v2546, %v2546
        %2555 = vrot.lane.b32.xlu0 %v2529, 58
        %v2556 = vpop.permute.xlu0 %2555
        %2557 = vrot.lane.b32.xlu0 %v2537, 58
        %v2558 = vpop.permute.xlu0 %2557
        %2559 = vrot.lane.b32.xlu0 %v2536, 58
        %v2560 = vpop.permute.xlu0 %2559
        %2561 = vrot.lane.b32.xlu0 %v2538, 58
        %v2562 = vpop.permute.xlu0 %2561
        %2563 = vrot.lane.b32.xlu0 %v2546, 58
        %v2564 = vpop.permute.xlu0 %2563
        %2565 = vrot.lane.b32.xlu0 %v2554, 58
        %v2566 = vpop.permute.xlu0 %2565
        %2567 = vrot.lane.b32.xlu0 %v2553, 58
        %v2568 = vpop.permute.xlu0 %2567
        %vm2569 = vcmask 474112
        %v2570 = vsel %vm2569, %v2556, %v2558
        %v2571 = vsel %vm2569, %v2558, %v2560
        %v2572 = vsel %vm2569, %v2560, %v2562
        %v2573 = vsel %vm2569, %v2562, %v2564
        %v2574 = vsel %vm2569, %v2564, %v2566
        %v2575 = vsel %vm2569, %v2566, %v2568
        %v2577 = vsel %vm328, %v2519, 0
        %v2580 = vsel %vm262, %v2570, 0
        %v2583 = vsel %vm262, %v2571, 0
        %v2586 = vsel %vm262, %v2572, 0
        %v2589 = vsel %vm262, %v2573, 0
        %v2592 = vsel %vm262, %v2574, 0
        %v2595 = vsel %vm262, %v2575, 0
        %2597 = vmatprep.subr.bf16.mxu0 %v2583
        %2598 = vmatpush1.bf16.msra.mxu0 %v2580
        %2599 = vmatprep.subr.bf16.mxu0 0
        %2600 = vmatpush1.bf16.msra.mxu0 0
        %2601 = vmatprep.subr.bf16.mxu0 0
        %2602 = vmatpush1.bf16.msra.mxu0 0
        %2603 = vmatprep.subr.bf16.mxu0 0
        %2604 = vmatpush1.bf16.msra.mxu0 0
        %2605 = vmatprep.subr.bf16.mxu0 0
        %2606 = vmatpush1.bf16.msra.mxu0 0
        %2607 = vmatprep.subr.bf16.mxu0 0
        %2608 = vmatpush1.bf16.msra.mxu0 0
        %2609 = vmatprep.subr.bf16.mxu0 0
        %2610 = vmatpush1.bf16.msra.mxu0 0
        %2611 = vmatprep.subr.bf16.mxu0 0
        %2612 = vmatpush1.bf16.msra.mxu0 0
        %2613 = vmatprep.subr.bf16.mxu0 0
        %2614 = vmatpush1.bf16.msra.mxu0 0
        %2615 = vmatprep.subr.bf16.mxu0 0
        %2616 = vmatpush1.bf16.msra.mxu0 0
        %2617 = vmatprep.subr.bf16.mxu0 0
        %2618 = vmatpush1.bf16.msra.mxu0 0
        %2619 = vmatprep.subr.bf16.mxu0 0
        %2620 = vmatpush1.bf16.msra.mxu0 0
        %2621 = vmatprep.subr.bf16.mxu0 0
        %2622 = vmatpush1.bf16.msra.mxu0 0
        %2623 = vmatprep.subr.bf16.mxu0 0
        %2624 = vmatpush1.bf16.msra.mxu0 0
        %2625 = vmatprep.subr.bf16.mxu0 0
        %2626 = vmatpush1.bf16.msra.mxu0 0
        %2627 = vmatprep.subr.bf16.mxu0 0
        %2628 = vmatpush1.bf16.msra.mxu0 0
        %2629 = vmatprep.mubr.bf16.mxu0 0
        %2630 = vmatmul.mubr.bf16.gmra.mrb[0].mxu0 %v2577
        %v2631 = vpop.f32.mrb[0].mxu0
        %v2632 = vadd.f32 0.0, %v2631
        %v2633 = vpop.f32.mrb[0].mxu0
        %v2634 = vadd.f32 0.0, %v2633
        %v2635 = vpop.f32.mrb[0].mxu0
        %v2636 = vpop.f32.mrb[0].mxu0
        %2637 = vdwg.mxu0
        %2638 = vmatprep.subr.bf16.mxu0 %v2589
        %2639 = vmatpush1.bf16.msra.mxu0 %v2586
        %2640 = vmatprep.subr.bf16.mxu0 0
        %2641 = vmatpush1.bf16.msra.mxu0 0
        %2642 = vmatprep.subr.bf16.mxu0 0
        %2643 = vmatpush1.bf16.msra.mxu0 0
        %2644 = vmatprep.subr.bf16.mxu0 0
        %2645 = vmatpush1.bf16.msra.mxu0 0
        %2646 = vmatprep.subr.bf16.mxu0 0
        %2647 = vmatpush1.bf16.msra.mxu0 0
        %2648 = vmatprep.subr.bf16.mxu0 0
        %2649 = vmatpush1.bf16.msra.mxu0 0
        %2650 = vmatprep.subr.bf16.mxu0 0
        %2651 = vmatpush1.bf16.msra.mxu0 0
        %2652 = vmatprep.subr.bf16.mxu0 0
        %2653 = vmatpush1.bf16.msra.mxu0 0
        %2654 = vmatprep.subr.bf16.mxu0 0
        %2655 = vmatpush1.bf16.msra.mxu0 0
        %2656 = vmatprep.subr.bf16.mxu0 0
        %2657 = vmatpush1.bf16.msra.mxu0 0
        %2658 = vmatprep.subr.bf16.mxu0 0
        %2659 = vmatpush1.bf16.msra.mxu0 0
        %2660 = vmatprep.subr.bf16.mxu0 0
        %2661 = vmatpush1.bf16.msra.mxu0 0
        %2662 = vmatprep.subr.bf16.mxu0 0
        %2663 = vmatpush1.bf16.msra.mxu0 0
        %2664 = vmatprep.subr.bf16.mxu0 0
        %2665 = vmatpush1.bf16.msra.mxu0 0
        %2666 = vmatprep.subr.bf16.mxu0 0
        %2667 = vmatpush1.bf16.msra.mxu0 0
        %2668 = vmatprep.subr.bf16.mxu0 0
        %2669 = vmatpush1.bf16.msra.mxu0 0
        %2670 = vmatprep.mubr.bf16.mxu0 0
        %2671 = vmatmul.mubr.bf16.gmra.mrb[0].mxu0 %v2577
        %v2672 = vpop.f32.mrb[0].mxu0
        %v2673 = vadd.f32 0.0, %v2672
        %v2674 = vpop.f32.mrb[0].mxu0
        %v2675 = vadd.f32 0.0, %v2674
        %v2676 = vpop.f32.mrb[0].mxu0
        %v2677 = vpop.f32.mrb[0].mxu0
        %2678 = vdwg.mxu0
        %2679 = vmatprep.subr.bf16.mxu0 %v2595
        %2680 = vmatpush1.bf16.msra.mxu0 %v2592
        %2681 = vmatprep.subr.bf16.mxu0 0
        %2682 = vmatpush1.bf16.msra.mxu0 0
        %2683 = vmatprep.subr.bf16.mxu0 0
        %2684 = vmatpush1.bf16.msra.mxu0 0
        %2685 = vmatprep.subr.bf16.mxu0 0
        %2686 = vmatpush1.bf16.msra.mxu0 0
        %2687 = vmatprep.subr.bf16.mxu0 0
        %2688 = vmatpush1.bf16.msra.mxu0 0
        %2689 = vmatprep.subr.bf16.mxu0 0
        %2690 = vmatpush1.bf16.msra.mxu0 0
        %2691 = vmatprep.subr.bf16.mxu0 0
        %2692 = vmatpush1.bf16.msra.mxu0 0
        %2693 = vmatprep.subr.bf16.mxu0 0
        %2694 = vmatpush1.bf16.msra.mxu0 0
        %2695 = vmatprep.subr.bf16.mxu0 0
        %2696 = vmatpush1.bf16.msra.mxu0 0
        %2697 = vmatprep.subr.bf16.mxu0 0
        %2698 = vmatpush1.bf16.msra.mxu0 0
        %2699 = vmatprep.subr.bf16.mxu0 0
        %2700 = vmatpush1.bf16.msra.mxu0 0
        %2701 = vmatprep.subr.bf16.mxu0 0
        %2702 = vmatpush1.bf16.msra.mxu0 0
        %2703 = vmatprep.subr.bf16.mxu0 0
        %2704 = vmatpush1.bf16.msra.mxu0 0
        %2705 = vmatprep.subr.bf16.mxu0 0
        %2706 = vmatpush1.bf16.msra.mxu0 0
        %2707 = vmatprep.subr.bf16.mxu0 0
        %2708 = vmatpush1.bf16.msra.mxu0 0
        %2709 = vmatprep.subr.bf16.mxu0 0
        %2710 = vmatpush1.bf16.msra.mxu0 0
        %2711 = vmatprep.mubr.bf16.mxu0 0
        %2712 = vmatmul.mubr.bf16.gmra.mrb[0].mxu0 %v2577
        %v2713 = vpop.f32.mrb[0].mxu0
        %v2714 = vadd.f32 0.0, %v2713
        %v2715 = vpop.f32.mrb[0].mxu0
        %v2716 = vadd.f32 0.0, %v2715
        %v2717 = vpop.f32.mrb[0].mxu0
        %v2718 = vpop.f32.mrb[0].mxu0
        %2719 = vdwg.mxu0
        %v2720 = vadd.f32 %v2510, %v2632
        %v2721 = vadd.f32 %v2511, %v2634
        %v2722 = vadd.f32 %v2512, %v2673
        %v2723 = vadd.f32 %v2513, %v2675
        %v2724 = vadd.f32 %v2514, %v2714
        %v2725 = vadd.f32 %v2515, %v2716
        %v2726 = vld [vmem:[#allocation2 + $0x4] sm:$0xff]
        %v2727 = vld [vmem:[#allocation2 + $0xc] sm:$0x3f]
        %s2728 = scalar_lea.vmem %s2, 48
        %v2729 = vld [vmem:[%s2728] sm:$0xf]
        %v2732 = vcombine.high %v2726, %v2726
        %v2734 = vunpack.c.l.s4 1983009808
        %v2735 = vunpack.c.0.s8 %v2734
        %v2736 = vlaneseq
        %v2737 = vshrl.u32 %v2736, 7
        %v2738 = vsub.s32 %v2735, %v2737
        %v2739 = vrot.slane %v2726, %v2738
        %v2741 = vunpack.c.l.s4 1983009808
        %v2742 = vunpack.c.0.s8 %v2741
        %v2743 = vlaneseq
        %v2744 = vshrl.u32 %v2743, 7
        %v2745 = vsub.s32 %v2742, %v2744
        %v2746 = vrot.slane %v2732, %v2745
        %v2747 = vcombine.high %v2739, %v2739
        %v2748 = vcombine.high %v2746, %v2746
        %v2749 = vcombine.high %v2727, %v2727
        %v2751 = vunpack.c.l.s4 1983009808
        %v2752 = vunpack.c.0.s8 %v2751
        %v2753 = vlaneseq
        %v2754 = vshrl.u32 %v2753, 7
        %v2755 = vsub.s32 %v2752, %v2754
        %v2756 = vrot.slane %v2727, %v2755
        %v2758 = vunpack.c.l.s4 1983009808
        %v2759 = vunpack.c.0.s8 %v2758
        %v2760 = vlaneseq
        %v2761 = vshrl.u32 %v2760, 7
        %v2762 = vsub.s32 %v2759, %v2761
        %v2763 = vrot.slane %v2749, %v2762
        %v2764 = vcombine.high %v2756, %v2756
        %2765 = vrot.lane.b32.xlu0 %v2739, 42
        %v2766 = vpop.permute.xlu0 %2765
        %2767 = vrot.lane.b32.xlu0 %v2747, 42
        %v2768 = vpop.permute.xlu0 %2767
        %2769 = vrot.lane.b32.xlu0 %v2746, 42
        %v2770 = vpop.permute.xlu0 %2769
        %2771 = vrot.lane.b32.xlu0 %v2748, 42
        %v2772 = vpop.permute.xlu0 %2771
        %2773 = vrot.lane.b32.xlu0 %v2756, 42
        %v2774 = vpop.permute.xlu0 %2773
        %2775 = vrot.lane.b32.xlu0 %v2764, 42
        %v2776 = vpop.permute.xlu0 %2775
        %2777 = vrot.lane.b32.xlu0 %v2763, 42
        %v2778 = vpop.permute.xlu0 %2777
        %vm2779 = vcmask 343040
        %v2780 = vsel %vm2779, %v2766, %v2768
        %v2781 = vsel %vm2779, %v2768, %v2770
        %v2782 = vsel %vm2779, %v2770, %v2772
        %v2783 = vsel %vm2779, %v2772, %v2774
        %v2784 = vsel %vm2779, %v2774, %v2776
        %v2785 = vsel %vm2779, %v2776, %v2778
        %v2787 = vsel %vm328, %v2729, 0
        %v2790 = vsel %vm262, %v2780, 0
        %v2793 = vsel %vm262, %v2781, 0
        %v2796 = vsel %vm262, %v2782, 0
        %v2799 = vsel %vm262, %v2783, 0
        %v2802 = vsel %vm262, %v2784, 0
        %v2805 = vsel %vm262, %v2785, 0
        %2807 = vmatprep.subr.bf16.mxu0 %v2793
        %2808 = vmatpush1.bf16.msra.mxu0 %v2790
        %2809 = vmatprep.subr.bf16.mxu0 0
        %2810 = vmatpush1.bf16.msra.mxu0 0
        %2811 = vmatprep.subr.bf16.mxu0 0
        %2812 = vmatpush1.bf16.msra.mxu0 0
        %2813 = vmatprep.subr.bf16.mxu0 0
        %2814 = vmatpush1.bf16.msra.mxu0 0
        %2815 = vmatprep.subr.bf16.mxu0 0
        %2816 = vmatpush1.bf16.msra.mxu0 0
        %2817 = vmatprep.subr.bf16.mxu0 0
        %2818 = vmatpush1.bf16.msra.mxu0 0
        %2819 = vmatprep.subr.bf16.mxu0 0
        %2820 = vmatpush1.bf16.msra.mxu0 0
        %2821 = vmatprep.subr.bf16.mxu0 0
        %2822 = vmatpush1.bf16.msra.mxu0 0
        %2823 = vmatprep.subr.bf16.mxu0 0
        %2824 = vmatpush1.bf16.msra.mxu0 0
        %2825 = vmatprep.subr.bf16.mxu0 0
        %2826 = vmatpush1.bf16.msra.mxu0 0
        %2827 = vmatprep.subr.bf16.mxu0 0
        %2828 = vmatpush1.bf16.msra.mxu0 0
        %2829 = vmatprep.subr.bf16.mxu0 0
        %2830 = vmatpush1.bf16.msra.mxu0 0
        %2831 = vmatprep.subr.bf16.mxu0 0
        %2832 = vmatpush1.bf16.msra.mxu0 0
        %2833 = vmatprep.subr.bf16.mxu0 0
        %2834 = vmatpush1.bf16.msra.mxu0 0
        %2835 = vmatprep.subr.bf16.mxu0 0
        %2836 = vmatpush1.bf16.msra.mxu0 0
        %2837 = vmatprep.subr.bf16.mxu0 0
        %2838 = vmatpush1.bf16.msra.mxu0 0
        %2839 = vmatprep.mubr.bf16.mxu0 0
        %2840 = vmatmul.mubr.bf16.gmra.mrb[0].mxu0 %v2787
        %v2841 = vpop.f32.mrb[0].mxu0
        %v2842 = vadd.f32 0.0, %v2841
        %v2843 = vpop.f32.mrb[0].mxu0
        %v2844 = vadd.f32 0.0, %v2843
        %v2845 = vpop.f32.mrb[0].mxu0
        %v2846 = vpop.f32.mrb[0].mxu0
        %2847 = vdwg.mxu0
        %2848 = vmatprep.subr.bf16.mxu0 %v2799
        %2849 = vmatpush1.bf16.msra.mxu0 %v2796
        %2850 = vmatprep.subr.bf16.mxu0 0
        %2851 = vmatpush1.bf16.msra.mxu0 0
        %2852 = vmatprep.subr.bf16.mxu0 0
        %2853 = vmatpush1.bf16.msra.mxu0 0
        %2854 = vmatprep.subr.bf16.mxu0 0
        %2855 = vmatpush1.bf16.msra.mxu0 0
        %2856 = vmatprep.subr.bf16.mxu0 0
        %2857 = vmatpush1.bf16.msra.mxu0 0
        %2858 = vmatprep.subr.bf16.mxu0 0
        %2859 = vmatpush1.bf16.msra.mxu0 0
        %2860 = vmatprep.subr.bf16.mxu0 0
        %2861 = vmatpush1.bf16.msra.mxu0 0
        %2862 = vmatprep.subr.bf16.mxu0 0
        %2863 = vmatpush1.bf16.msra.mxu0 0
        %2864 = vmatprep.subr.bf16.mxu0 0
        %2865 = vmatpush1.bf16.msra.mxu0 0
        %2866 = vmatprep.subr.bf16.mxu0 0
        %2867 = vmatpush1.bf16.msra.mxu0 0
        %2868 = vmatprep.subr.bf16.mxu0 0
        %2869 = vmatpush1.bf16.msra.mxu0 0
        %2870 = vmatprep.subr.bf16.mxu0 0
        %2871 = vmatpush1.bf16.msra.mxu0 0
        %2872 = vmatprep.subr.bf16.mxu0 0
        %2873 = vmatpush1.bf16.msra.mxu0 0
        %2874 = vmatprep.subr.bf16.mxu0 0
        %2875 = vmatpush1.bf16.msra.mxu0 0
        %2876 = vmatprep.subr.bf16.mxu0 0
        %2877 = vmatpush1.bf16.msra.mxu0 0
        %2878 = vmatprep.subr.bf16.mxu0 0
        %2879 = vmatpush1.bf16.msra.mxu0 0
        %2880 = vmatprep.mubr.bf16.mxu0 0
        %2881 = vmatmul.mubr.bf16.gmra.mrb[0].mxu0 %v2787
        %v2882 = vpop.f32.mrb[0].mxu0
        %v2883 = vadd.f32 0.0, %v2882
        %v2884 = vpop.f32.mrb[0].mxu0
        %v2885 = vadd.f32 0.0, %v2884
        %v2886 = vpop.f32.mrb[0].mxu0
        %v2887 = vpop.f32.mrb[0].mxu0
        %2888 = vdwg.mxu0
        %2889 = vmatprep.subr.bf16.mxu0 %v2805
        %2890 = vmatpush1.bf16.msra.mxu0 %v2802
        %2891 = vmatprep.subr.bf16.mxu0 0
        %2892 = vmatpush1.bf16.msra.mxu0 0
        %2893 = vmatprep.subr.bf16.mxu0 0
        %2894 = vmatpush1.bf16.msra.mxu0 0
        %2895 = vmatprep.subr.bf16.mxu0 0
        %2896 = vmatpush1.bf16.msra.mxu0 0
        %2897 = vmatprep.subr.bf16.mxu0 0
        %2898 = vmatpush1.bf16.msra.mxu0 0
        %2899 = vmatprep.subr.bf16.mxu0 0
        %2900 = vmatpush1.bf16.msra.mxu0 0
        %2901 = vmatprep.subr.bf16.mxu0 0
        %2902 = vmatpush1.bf16.msra.mxu0 0
        %2903 = vmatprep.subr.bf16.mxu0 0
        %2904 = vmatpush1.bf16.msra.mxu0 0
        %2905 = vmatprep.subr.bf16.mxu0 0
        %2906 = vmatpush1.bf16.msra.mxu0 0
        %2907 = vmatprep.subr.bf16.mxu0 0
        %2908 = vmatpush1.bf16.msra.mxu0 0
        %2909 = vmatprep.subr.bf16.mxu0 0
        %2910 = vmatpush1.bf16.msra.mxu0 0
        %2911 = vmatprep.subr.bf16.mxu0 0
        %2912 = vmatpush1.bf16.msra.mxu0 0
        %2913 = vmatprep.subr.bf16.mxu0 0
        %2914 = vmatpush1.bf16.msra.mxu0 0
        %2915 = vmatprep.subr.bf16.mxu0 0
        %2916 = vmatpush1.bf16.msra.mxu0 0
        %2917 = vmatprep.subr.bf16.mxu0 0
        %2918 = vmatpush1.bf16.msra.mxu0 0
        %2919 = vmatprep.subr.bf16.mxu0 0
        %2920 = vmatpush1.bf16.msra.mxu0 0
        %2921 = vmatprep.mubr.bf16.mxu0 0
        %2922 = vmatmul.mubr.bf16.gmra.mrb[0].mxu0 %v2787
        %v2923 = vpop.f32.mrb[0].mxu0
        %v2924 = vadd.f32 0.0, %v2923
        %v2925 = vpop.f32.mrb[0].mxu0
        %v2926 = vadd.f32 0.0, %v2925
        %v2927 = vpop.f32.mrb[0].mxu0
        %v2928 = vpop.f32.mrb[0].mxu0
        %2929 = vdwg.mxu0
        %v2930 = vadd.f32 %v2720, %v2842
        %v2931 = vadd.f32 %v2721, %v2844
        %v2932 = vadd.f32 %v2722, %v2883
        %v2933 = vadd.f32 %v2723, %v2885
        %v2934 = vadd.f32 %v2724, %v2924
        %v2935 = vadd.f32 %v2725, %v2926
        %v2936 = vld [vmem:[#allocation2 + $0x4] sm:$0xff]
        %v2937 = vld [vmem:[#allocation2 + $0xc] sm:$0x3f]
        %s2938 = scalar_lea.vmem %s2, 52
        %v2939 = vld [vmem:[%s2938] sm:$0xf]
        %v2942 = vcombine.high %v2936, %v2936
        %v2944 = vunpack.c.l.s4 1983009808
        %v2945 = vunpack.c.0.s8 %v2944
        %v2946 = vlaneseq
        %v2947 = vshrl.u32 %v2946, 7
        %v2948 = vsub.s32 %v2945, %v2947
        %v2949 = vrot.slane %v2936, %v2948
        %v2951 = vunpack.c.l.s4 1983009808
        %v2952 = vunpack.c.0.s8 %v2951
        %v2953 = vlaneseq
        %v2954 = vshrl.u32 %v2953, 7
        %v2955 = vsub.s32 %v2952, %v2954
        %v2956 = vrot.slane %v2942, %v2955
        %v2957 = vcombine.high %v2949, %v2949
        %v2958 = vcombine.high %v2956, %v2956
        %v2959 = vcombine.high %v2937, %v2937
        %v2961 = vunpack.c.l.s4 1983009808
        %v2962 = vunpack.c.0.s8 %v2961
        %v2963 = vlaneseq
        %v2964 = vshrl.u32 %v2963, 7
        %v2965 = vsub.s32 %v2962, %v2964
        %v2966 = vrot.slane %v2937, %v2965
        %v2968 = vunpack.c.l.s4 1983009808
        %v2969 = vunpack.c.0.s8 %v2968
        %v2970 = vlaneseq
        %v2971 = vshrl.u32 %v2970, 7
        %v2972 = vsub.s32 %v2969, %v2971
        %v2973 = vrot.slane %v2959, %v2972
        %v2974 = vcombine.high %v2966, %v2966
        %2975 = vrot.lane.b32.xlu0 %v2949, 41
        %v2976 = vpop.permute.xlu0 %2975
        %2977 = vrot.lane.b32.xlu0 %v2957, 41
        %v2978 = vpop.permute.xlu0 %2977
        %2979 = vrot.lane.b32.xlu0 %v2956, 41
        %v2980 = vpop.permute.xlu0 %2979
        %2981 = vrot.lane.b32.xlu0 %v2958, 41
        %v2982 = vpop.permute.xlu0 %2981
        %2983 = vrot.lane.b32.xlu0 %v2966, 41
        %v2984 = vpop.permute.xlu0 %2983
        %2985 = vrot.lane.b32.xlu0 %v2974, 41
        %v2986 = vpop.permute.xlu0 %2985
        %2987 = vrot.lane.b32.xlu0 %v2973, 41
        %v2988 = vpop.permute.xlu0 %2987
        %vm2989 = vcmask 334848
        %v2990 = vsel %vm2989, %v2976, %v2978
        %v2991 = vsel %vm2989, %v2978, %v2980
        %v2992 = vsel %vm2989, %v2980, %v2982
        %v2993 = vsel %vm2989, %v2982, %v2984
        %v2994 = vsel %vm2989, %v2984, %v2986
        %v2995 = vsel %vm2989, %v2986, %v2988
        %v2997 = vsel %vm328, %v2939, 0
        %v3000 = vsel %vm262, %v2990, 0
        %v3003 = vsel %vm262, %v2991, 0
        %v3006 = vsel %vm262, %v2992, 0
        %v3009 = vsel %vm262, %v2993, 0
        %v3012 = vsel %vm262, %v2994, 0
        %v3015 = vsel %vm262, %v2995, 0
        %3017 = vmatprep.subr.bf16.mxu0 %v3003
        %3018 = vmatpush1.bf16.msra.mxu0 %v3000
        %3019 = vmatprep.subr.bf16.mxu0 0
        %3020 = vmatpush1.bf16.msra.mxu0 0
        %3021 = vmatprep.subr.bf16.mxu0 0
        %3022 = vmatpush1.bf16.msra.mxu0 0
        %3023 = vmatprep.subr.bf16.mxu0 0
        %3024 = vmatpush1.bf16.msra.mxu0 0
        %3025 = vmatprep.subr.bf16.mxu0 0
        %3026 = vmatpush1.bf16.msra.mxu0 0
        %3027 = vmatprep.subr.bf16.mxu0 0
        %3028 = vmatpush1.bf16.msra.mxu0 0
        %3029 = vmatprep.subr.bf16.mxu0 0
        %3030 = vmatpush1.bf16.msra.mxu0 0
        %3031 = vmatprep.subr.bf16.mxu0 0
        %3032 = vmatpush1.bf16.msra.mxu0 0
        %3033 = vmatprep.subr.bf16.mxu0 0
        %3034 = vmatpush1.bf16.msra.mxu0 0
        %3035 = vmatprep.subr.bf16.mxu0 0
        %3036 = vmatpush1.bf16.msra.mxu0 0
        %3037 = vmatprep.subr.bf16.mxu0 0
        %3038 = vmatpush1.bf16.msra.mxu0 0
        %3039 = vmatprep.subr.bf16.mxu0 0
        %3040 = vmatpush1.bf16.msra.mxu0 0
        %3041 = vmatprep.subr.bf16.mxu0 0
        %3042 = vmatpush1.bf16.msra.mxu0 0
        %3043 = vmatprep.subr.bf16.mxu0 0
        %3044 = vmatpush1.bf16.msra.mxu0 0
        %3045 = vmatprep.subr.bf16.mxu0 0
        %3046 = vmatpush1.bf16.msra.mxu0 0
        %3047 = vmatprep.subr.bf16.mxu0 0
        %3048 = vmatpush1.bf16.msra.mxu0 0
        %3049 = vmatprep.mubr.bf16.mxu0 0
        %3050 = vmatmul.mubr.bf16.gmra.mrb[0].mxu0 %v2997
        %v3051 = vpop.f32.mrb[0].mxu0
        %v3052 = vadd.f32 0.0, %v3051
        %v3053 = vpop.f32.mrb[0].mxu0
        %v3054 = vadd.f32 0.0, %v3053
        %v3055 = vpop.f32.mrb[0].mxu0
        %v3056 = vpop.f32.mrb[0].mxu0
        %3057 = vdwg.mxu0
        %3058 = vmatprep.subr.bf16.mxu0 %v3009
        %3059 = vmatpush1.bf16.msra.mxu0 %v3006
        %3060 = vmatprep.subr.bf16.mxu0 0
        %3061 = vmatpush1.bf16.msra.mxu0 0
        %3062 = vmatprep.subr.bf16.mxu0 0
        %3063 = vmatpush1.bf16.msra.mxu0 0
        %3064 = vmatprep.subr.bf16.mxu0 0
        %3065 = vmatpush1.bf16.msra.mxu0 0
        %3066 = vmatprep.subr.bf16.mxu0 0
        %3067 = vmatpush1.bf16.msra.mxu0 0
        %3068 = vmatprep.subr.bf16.mxu0 0
        %3069 = vmatpush1.bf16.msra.mxu0 0
        %3070 = vmatprep.subr.bf16.mxu0 0
        %3071 = vmatpush1.bf16.msra.mxu0 0
        %3072 = vmatprep.subr.bf16.mxu0 0
        %3073 = vmatpush1.bf16.msra.mxu0 0
        %3074 = vmatprep.subr.bf16.mxu0 0
        %3075 = vmatpush1.bf16.msra.mxu0 0
        %3076 = vmatprep.subr.bf16.mxu0 0
        %3077 = vmatpush1.bf16.msra.mxu0 0
        %3078 = vmatprep.subr.bf16.mxu0 0
        %3079 = vmatpush1.bf16.msra.mxu0 0
        %3080 = vmatprep.subr.bf16.mxu0 0
        %3081 = vmatpush1.bf16.msra.mxu0 0
        %3082 = vmatprep.subr.bf16.mxu0 0
        %3083 = vmatpush1.bf16.msra.mxu0 0
        %3084 = vmatprep.subr.bf16.mxu0 0
        %3085 = vmatpush1.bf16.msra.mxu0 0
        %3086 = vmatprep.subr.bf16.mxu0 0
        %3087 = vmatpush1.bf16.msra.mxu0 0
        %3088 = vmatprep.subr.bf16.mxu0 0
        %3089 = vmatpush1.bf16.msra.mxu0 0
        %3090 = vmatprep.mubr.bf16.mxu0 0
        %3091 = vmatmul.mubr.bf16.gmra.mrb[0].mxu0 %v2997
        %v3092 = vpop.f32.mrb[0].mxu0
        %v3093 = vadd.f32 0.0, %v3092
        %v3094 = vpop.f32.mrb[0].mxu0
        %v3095 = vadd.f32 0.0, %v3094
        %v3096 = vpop.f32.mrb[0].mxu0
        %v3097 = vpop.f32.mrb[0].mxu0
        %3098 = vdwg.mxu0
        %3099 = vmatprep.subr.bf16.mxu0 %v3015
        %3100 = vmatpush1.bf16.msra.mxu0 %v3012
        %3101 = vmatprep.subr.bf16.mxu0 0
        %3102 = vmatpush1.bf16.msra.mxu0 0
        %3103 = vmatprep.subr.bf16.mxu0 0
        %3104 = vmatpush1.bf16.msra.mxu0 0
        %3105 = vmatprep.subr.bf16.mxu0 0
        %3106 = vmatpush1.bf16.msra.mxu0 0
        %3107 = vmatprep.subr.bf16.mxu0 0
        %3108 = vmatpush1.bf16.msra.mxu0 0
        %3109 = vmatprep.subr.bf16.mxu0 0
        %3110 = vmatpush1.bf16.msra.mxu0 0
        %3111 = vmatprep.subr.bf16.mxu0 0
        %3112 = vmatpush1.bf16.msra.mxu0 0
        %3113 = vmatprep.subr.bf16.mxu0 0
        %3114 = vmatpush1.bf16.msra.mxu0 0
        %3115 = vmatprep.subr.bf16.mxu0 0
        %3116 = vmatpush1.bf16.msra.mxu0 0
        %3117 = vmatprep.subr.bf16.mxu0 0
        %3118 = vmatpush1.bf16.msra.mxu0 0
        %3119 = vmatprep.subr.bf16.mxu0 0
        %3120 = vmatpush1.bf16.msra.mxu0 0
        %3121 = vmatprep.subr.bf16.mxu0 0
        %3122 = vmatpush1.bf16.msra.mxu0 0
        %3123 = vmatprep.subr.bf16.mxu0 0
        %3124 = vmatpush1.bf16.msra.mxu0 0
        %3125 = vmatprep.subr.bf16.mxu0 0
        %3126 = vmatpush1.bf16.msra.mxu0 0
        %3127 = vmatprep.subr.bf16.mxu0 0
        %3128 = vmatpush1.bf16.msra.mxu0 0
        %3129 = vmatprep.subr.bf16.mxu0 0
        %3130 = vmatpush1.bf16.msra.mxu0 0
        %3131 = vmatprep.mubr.bf16.mxu0 0
        %3132 = vmatmul.mubr.bf16.gmra.mrb[0].mxu0 %v2997
        %v3133 = vpop.f32.mrb[0].mxu0
        %v3134 = vadd.f32 0.0, %v3133
        %v3135 = vpop.f32.mrb[0].mxu0
        %v3136 = vadd.f32 0.0, %v3135
        %v3137 = vpop.f32.mrb[0].mxu0
        %v3138 = vpop.f32.mrb[0].mxu0
        %3139 = vdwg.mxu0
        %v3140 = vadd.f32 %v2930, %v3052
        %v3141 = vadd.f32 %v2931, %v3054
        %v3142 = vadd.f32 %v2932, %v3093
        %v3143 = vadd.f32 %v2933, %v3095
        %v3144 = vadd.f32 %v2934, %v3134
        %v3145 = vadd.f32 %v2935, %v3136
        %v3146 = vld [vmem:[#allocation2 + $0x4] sm:$0xff]
        %v3147 = vld [vmem:[#allocation2 + $0xc] sm:$0x3f]
        %s3148 = scalar_lea.vmem %s2, 56
        %v3149 = vld [vmem:[%s3148] sm:$0xf]
        %v3152 = vcombine.high %v3146, %v3146
        %v3154 = vunpack.c.l.s4 1983009808
        %v3155 = vunpack.c.0.s8 %v3154
        %v3156 = vlaneseq
        %v3157 = vshrl.u32 %v3156, 7
        %v3158 = vsub.s32 %v3155, %v3157
        %v3159 = vrot.slane %v3146, %v3158
        %v3161 = vunpack.c.l.s4 1983009808
        %v3162 = vunpack.c.0.s8 %v3161
        %v3163 = vlaneseq
        %v3164 = vshrl.u32 %v3163, 7
        %v3165 = vsub.s32 %v3162, %v3164
        %v3166 = vrot.slane %v3152, %v3165
        %v3167 = vcombine.high %v3159, %v3159
        %v3168 = vcombine.high %v3166, %v3166
        %v3169 = vcombine.high %v3147, %v3147
        %v3171 = vunpack.c.l.s4 1983009808
        %v3172 = vunpack.c.0.s8 %v3171
        %v3173 = vlaneseq
        %v3174 = vshrl.u32 %v3173, 7
        %v3175 = vsub.s32 %v3172, %v3174
        %v3176 = vrot.slane %v3147, %v3175
        %v3178 = vunpack.c.l.s4 1983009808
        %v3179 = vunpack.c.0.s8 %v3178
        %v3180 = vlaneseq
        %v3181 = vshrl.u32 %v3180, 7
        %v3182 = vsub.s32 %v3179, %v3181
        %v3183 = vrot.slane %v3169, %v3182
        %v3184 = vcombine.high %v3176, %v3176
        %3185 = vrot.lane.b32.xlu0 %v3159, 40
        %v3186 = vpop.permute.xlu0 %3185
        %3187 = vrot.lane.b32.xlu0 %v3167, 40
        %v3188 = vpop.permute.xlu0 %3187
        %3189 = vrot.lane.b32.xlu0 %v3166, 40
        %v3190 = vpop.permute.xlu0 %3189
        %3191 = vrot.lane.b32.xlu0 %v3168, 40
        %v3192 = vpop.permute.xlu0 %3191
        %3193 = vrot.lane.b32.xlu0 %v3176, 40
        %v3194 = vpop.permute.xlu0 %3193
        %3195 = vrot.lane.b32.xlu0 %v3184, 40
        %v3196 = vpop.permute.xlu0 %3195
        %3197 = vrot.lane.b32.xlu0 %v3183, 40
        %v3198 = vpop.permute.xlu0 %3197
        %vm3199 = vcmask 326656
        %v3200 = vsel %vm3199, %v3186, %v3188
        %v3201 = vsel %vm3199, %v3188, %v3190
        %v3202 = vsel %vm3199, %v3190, %v3192
        %v3203 = vsel %vm3199, %v3192, %v3194
        %v3204 = vsel %vm3199, %v3194, %v3196
        %v3205 = vsel %vm3199, %v3196, %v3198
        %v3207 = vsel %vm328, %v3149, 0
        %v3210 = vsel %vm262, %v3200, 0
        %v3213 = vsel %vm262, %v3201, 0
        %v3216 = vsel %vm262, %v3202, 0
        %v3219 = vsel %vm262, %v3203, 0
        %v3222 = vsel %vm262, %v3204, 0
        %v3225 = vsel %vm262, %v3205, 0
        %3227 = vmatprep.subr.bf16.mxu0 %v3213
        %3228 = vmatpush1.bf16.msra.mxu0 %v3210
        %3229 = vmatprep.subr.bf16.mxu0 0
        %3230 = vmatpush1.bf16.msra.mxu0 0
        %3231 = vmatprep.subr.bf16.mxu0 0
        %3232 = vmatpush1.bf16.msra.mxu0 0
        %3233 = vmatprep.subr.bf16.mxu0 0
        %3234 = vmatpush1.bf16.msra.mxu0 0
        %3235 = vmatprep.subr.bf16.mxu0 0
        %3236 = vmatpush1.bf16.msra.mxu0 0
        %3237 = vmatprep.subr.bf16.mxu0 0
        %3238 = vmatpush1.bf16.msra.mxu0 0
        %3239 = vmatprep.subr.bf16.mxu0 0
        %3240 = vmatpush1.bf16.msra.mxu0 0
        %3241 = vmatprep.subr.bf16.mxu0 0
        %3242 = vmatpush1.bf16.msra.mxu0 0
        %3243 = vmatprep.subr.bf16.mxu0 0
        %3244 = vmatpush1.bf16.msra.mxu0 0
        %3245 = vmatprep.subr.bf16.mxu0 0
        %3246 = vmatpush1.bf16.msra.mxu0 0
        %3247 = vmatprep.subr.bf16.mxu0 0
        %3248 = vmatpush1.bf16.msra.mxu0 0
        %3249 = vmatprep.subr.bf16.mxu0 0
        %3250 = vmatpush1.bf16.msra.mxu0 0
        %3251 = vmatprep.subr.bf16.mxu0 0
        %3252 = vmatpush1.bf16.msra.mxu0 0
        %3253 = vmatprep.subr.bf16.mxu0 0
        %3254 = vmatpush1.bf16.msra.mxu0 0
        %3255 = vmatprep.subr.bf16.mxu0 0
        %3256 = vmatpush1.bf16.msra.mxu0 0
        %3257 = vmatprep.subr.bf16.mxu0 0
        %3258 = vmatpush1.bf16.msra.mxu0 0
        %3259 = vmatprep.mubr.bf16.mxu0 0
        %3260 = vmatmul.mubr.bf16.gmra.mrb[0].mxu0 %v3207
        %v3261 = vpop.f32.mrb[0].mxu0
        %v3262 = vadd.f32 0.0, %v3261
        %v3263 = vpop.f32.mrb[0].mxu0
        %v3264 = vadd.f32 0.0, %v3263
        %v3265 = vpop.f32.mrb[0].mxu0
        %v3266 = vpop.f32.mrb[0].mxu0
        %3267 = vdwg.mxu0
        %3268 = vmatprep.subr.bf16.mxu0 %v3219
        %3269 = vmatpush1.bf16.msra.mxu0 %v3216
        %3270 = vmatprep.subr.bf16.mxu0 0
        %3271 = vmatpush1.bf16.msra.mxu0 0
        %3272 = vmatprep.subr.bf16.mxu0 0
        %3273 = vmatpush1.bf16.msra.mxu0 0
        %3274 = vmatprep.subr.bf16.mxu0 0
        %3275 = vmatpush1.bf16.msra.mxu0 0
        %3276 = vmatprep.subr.bf16.mxu0 0
        %3277 = vmatpush1.bf16.msra.mxu0 0
        %3278 = vmatprep.subr.bf16.mxu0 0
        %3279 = vmatpush1.bf16.msra.mxu0 0
        %3280 = vmatprep.subr.bf16.mxu0 0
        %3281 = vmatpush1.bf16.msra.mxu0 0
        %3282 = vmatprep.subr.bf16.mxu0 0
        %3283 = vmatpush1.bf16.msra.mxu0 0
        %3284 = vmatprep.subr.bf16.mxu0 0
        %3285 = vmatpush1.bf16.msra.mxu0 0
        %3286 = vmatprep.subr.bf16.mxu0 0
        %3287 = vmatpush1.bf16.msra.mxu0 0
        %3288 = vmatprep.subr.bf16.mxu0 0
        %3289 = vmatpush1.bf16.msra.mxu0 0
        %3290 = vmatprep.subr.bf16.mxu0 0
        %3291 = vmatpush1.bf16.msra.mxu0 0
        %3292 = vmatprep.subr.bf16.mxu0 0
        %3293 = vmatpush1.bf16.msra.mxu0 0
        %3294 = vmatprep.subr.bf16.mxu0 0
        %3295 = vmatpush1.bf16.msra.mxu0 0
        %3296 = vmatprep.subr.bf16.mxu0 0
        %3297 = vmatpush1.bf16.msra.mxu0 0
        %3298 = vmatprep.subr.bf16.mxu0 0
        %3299 = vmatpush1.bf16.msra.mxu0 0
        %3300 = vmatprep.mubr.bf16.mxu0 0
        %3301 = vmatmul.mubr.bf16.gmra.mrb[0].mxu0 %v3207
        %v3302 = vpop.f32.mrb[0].mxu0
        %v3303 = vadd.f32 0.0, %v3302
        %v3304 = vpop.f32.mrb[0].mxu0
        %v3305 = vadd.f32 0.0, %v3304
        %v3306 = vpop.f32.mrb[0].mxu0
        %v3307 = vpop.f32.mrb[0].mxu0
        %3308 = vdwg.mxu0
        %3309 = vmatprep.subr.bf16.mxu0 %v3225
        %3310 = vmatpush1.bf16.msra.mxu0 %v3222
        %3311 = vmatprep.subr.bf16.mxu0 0
        %3312 = vmatpush1.bf16.msra.mxu0 0
        %3313 = vmatprep.subr.bf16.mxu0 0
        %3314 = vmatpush1.bf16.msra.mxu0 0
        %3315 = vmatprep.subr.bf16.mxu0 0
        %3316 = vmatpush1.bf16.msra.mxu0 0
        %3317 = vmatprep.subr.bf16.mxu0 0
        %3318 = vmatpush1.bf16.msra.mxu0 0
        %3319 = vmatprep.subr.bf16.mxu0 0
        %3320 = vmatpush1.bf16.msra.mxu0 0
        %3321 = vmatprep.subr.bf16.mxu0 0
        %3322 = vmatpush1.bf16.msra.mxu0 0
        %3323 = vmatprep.subr.bf16.mxu0 0
        %3324 = vmatpush1.bf16.msra.mxu0 0
        %3325 = vmatprep.subr.bf16.mxu0 0
        %3326 = vmatpush1.bf16.msra.mxu0 0
        %3327 = vmatprep.subr.bf16.mxu0 0
        %3328 = vmatpush1.bf16.msra.mxu0 0
        %3329 = vmatprep.subr.bf16.mxu0 0
        %3330 = vmatpush1.bf16.msra.mxu0 0
        %3331 = vmatprep.subr.bf16.mxu0 0
        %3332 = vmatpush1.bf16.msra.mxu0 0
        %3333 = vmatprep.subr.bf16.mxu0 0
        %3334 = vmatpush1.bf16.msra.mxu0 0
        %3335 = vmatprep.subr.bf16.mxu0 0
        %3336 = vmatpush1.bf16.msra.mxu0 0
        %3337 = vmatprep.subr.bf16.mxu0 0
        %3338 = vmatpush1.bf16.msra.mxu0 0
        %3339 = vmatprep.subr.bf16.mxu0 0
        %3340 = vmatpush1.bf16.msra.mxu0 0
        %3341 = vmatprep.mubr.bf16.mxu0 0
        %3342 = vmatmul.mubr.bf16.gmra.mrb[0].mxu0 %v3207
        %v3343 = vpop.f32.mrb[0].mxu0
        %v3344 = vadd.f32 0.0, %v3343
        %v3345 = vpop.f32.mrb[0].mxu0
        %v3346 = vadd.f32 0.0, %v3345
        %v3347 = vpop.f32.mrb[0].mxu0
        %v3348 = vpop.f32.mrb[0].mxu0
        %3349 = vdwg.mxu0
        %v3350 = vadd.f32 %v3140, %v3262
        %v3351 = vadd.f32 %v3141, %v3264
        %v3352 = vadd.f32 %v3142, %v3303
        %v3353 = vadd.f32 %v3143, %v3305
        %v3354 = vadd.f32 %v3144, %v3344
        %v3355 = vadd.f32 %v3145, %v3346
        %v3356 = vld [vmem:[#allocation2 + $0x4] sm:$0xff]
        %v3357 = vld [vmem:[#allocation2 + $0xc] sm:$0x3f]
        %s3358 = scalar_lea.vmem %s2, 60
        %v3359 = vld [vmem:[%s3358] sm:$0xf]
        %v3362 = vcombine.high %v3356, %v3356
        %v3364 = vunpack.c.l.s4 1983009808
        %v3365 = vunpack.c.0.s8 %v3364
        %v3366 = vlaneseq
        %v3367 = vshrl.u32 %v3366, 7
        %v3368 = vsub.s32 %v3365, %v3367
        %v3369 = vrot.slane %v3356, %v3368
        %v3371 = vunpack.c.l.s4 1983009808
        %v3372 = vunpack.c.0.s8 %v3371
        %v3373 = vlaneseq
        %v3374 = vshrl.u32 %v3373, 7
        %v3375 = vsub.s32 %v3372, %v3374
        %v3376 = vrot.slane %v3362, %v3375
        %v3377 = vcombine.high %v3369, %v3369
        %v3378 = vcombine.high %v3376, %v3376
        %v3379 = vcombine.high %v3357, %v3357
        %v3381 = vunpack.c.l.s4 1983009808
        %v3382 = vunpack.c.0.s8 %v3381
        %v3383 = vlaneseq
        %v3384 = vshrl.u32 %v3383, 7
        %v3385 = vsub.s32 %v3382, %v3384
        %v3386 = vrot.slane %v3357, %v3385
        %v3388 = vunpack.c.l.s4 1983009808
        %v3389 = vunpack.c.0.s8 %v3388
        %v3390 = vlaneseq
        %v3391 = vshrl.u32 %v3390, 7
        %v3392 = vsub.s32 %v3389, %v3391
        %v3393 = vrot.slane %v3379, %v3392
        %v3394 = vcombine.high %v3386, %v3386
        %3395 = vrot.lane.b32.xlu0 %v3369, 24
        %v3396 = vpop.permute.xlu0 %3395
        %3397 = vrot.lane.b32.xlu0 %v3377, 24
        %v3398 = vpop.permute.xlu0 %3397
        %3399 = vrot.lane.b32.xlu0 %v3376, 24
        %v3400 = vpop.permute.xlu0 %3399
        %3401 = vrot.lane.b32.xlu0 %v3378, 24
        %v3402 = vpop.permute.xlu0 %3401
        %3403 = vrot.lane.b32.xlu0 %v3386, 24
        %v3404 = vpop.permute.xlu0 %3403
        %3405 = vrot.lane.b32.xlu0 %v3394, 24
        %v3406 = vpop.permute.xlu0 %3405
        %3407 = vrot.lane.b32.xlu0 %v3393, 24
        %v3408 = vpop.permute.xlu0 %3407
        %vm3409 = vcmask 195584
        %v3410 = vsel %vm3409, %v3396, %v3398
        %v3411 = vsel %vm3409, %v3398, %v3400
        %v3412 = vsel %vm3409, %v3400, %v3402
        %v3413 = vsel %vm3409, %v3402, %v3404
        %v3414 = vsel %vm3409, %v3404, %v3406
        %v3415 = vsel %vm3409, %v3406, %v3408
        %v3417 = vsel %vm328, %v3359, 0
        %v3420 = vsel %vm262, %v3410, 0
        %v3423 = vsel %vm262, %v3411, 0
        %v3426 = vsel %vm262, %v3412, 0
        %v3429 = vsel %vm262, %v3413, 0
        %v3432 = vsel %vm262, %v3414, 0
        %v3435 = vsel %vm262, %v3415, 0
        %3437 = vmatprep.subr.bf16.mxu0 %v3423
        %3438 = vmatpush1.bf16.msra.mxu0 %v3420
        %3439 = vmatprep.subr.bf16.mxu0 0
        %3440 = vmatpush1.bf16.msra.mxu0 0
        %3441 = vmatprep.subr.bf16.mxu0 0
        %3442 = vmatpush1.bf16.msra.mxu0 0
        %3443 = vmatprep.subr.bf16.mxu0 0
        %3444 = vmatpush1.bf16.msra.mxu0 0
        %3445 = vmatprep.subr.bf16.mxu0 0
        %3446 = vmatpush1.bf16.msra.mxu0 0
        %3447 = vmatprep.subr.bf16.mxu0 0
        %3448 = vmatpush1.bf16.msra.mxu0 0
        %3449 = vmatprep.subr.bf16.mxu0 0
        %3450 = vmatpush1.bf16.msra.mxu0 0
        %3451 = vmatprep.subr.bf16.mxu0 0
        %3452 = vmatpush1.bf16.msra.mxu0 0
        %3453 = vmatprep.subr.bf16.mxu0 0
        %3454 = vmatpush1.bf16.msra.mxu0 0
        %3455 = vmatprep.subr.bf16.mxu0 0
        %3456 = vmatpush1.bf16.msra.mxu0 0
        %3457 = vmatprep.subr.bf16.mxu0 0
        %3458 = vmatpush1.bf16.msra.mxu0 0
        %3459 = vmatprep.subr.bf16.mxu0 0
        %3460 = vmatpush1.bf16.msra.mxu0 0
        %3461 = vmatprep.subr.bf16.mxu0 0
        %3462 = vmatpush1.bf16.msra.mxu0 0
        %3463 = vmatprep.subr.bf16.mxu0 0
        %3464 = vmatpush1.bf16.msra.mxu0 0
        %3465 = vmatprep.subr.bf16.mxu0 0
        %3466 = vmatpush1.bf16.msra.mxu0 0
        %3467 = vmatprep.subr.bf16.mxu0 0
        %3468 = vmatpush1.bf16.msra.mxu0 0
        %3469 = vmatprep.mubr.bf16.mxu0 0
        %3470 = vmatmul.mubr.bf16.gmra.mrb[0].mxu0 %v3417
        %v3471 = vpop.f32.mrb[0].mxu0
        %v3472 = vadd.f32 0.0, %v3471
        %v3473 = vpop.f32.mrb[0].mxu0
        %v3474 = vadd.f32 0.0, %v3473
        %v3475 = vpop.f32.mrb[0].mxu0
        %v3476 = vpop.f32.mrb[0].mxu0
        %3477 = vdwg.mxu0
        %3478 = vmatprep.subr.bf16.mxu0 %v3429
        %3479 = vmatpush1.bf16.msra.mxu0 %v3426
        %3480 = vmatprep.subr.bf16.mxu0 0
        %3481 = vmatpush1.bf16.msra.mxu0 0
        %3482 = vmatprep.subr.bf16.mxu0 0
        %3483 = vmatpush1.bf16.msra.mxu0 0
        %3484 = vmatprep.subr.bf16.mxu0 0
        %3485 = vmatpush1.bf16.msra.mxu0 0
        %3486 = vmatprep.subr.bf16.mxu0 0
        %3487 = vmatpush1.bf16.msra.mxu0 0
        %3488 = vmatprep.subr.bf16.mxu0 0
        %3489 = vmatpush1.bf16.msra.mxu0 0
        %3490 = vmatprep.subr.bf16.mxu0 0
        %3491 = vmatpush1.bf16.msra.mxu0 0
        %3492 = vmatprep.subr.bf16.mxu0 0
        %3493 = vmatpush1.bf16.msra.mxu0 0
        %3494 = vmatprep.subr.bf16.mxu0 0
        %3495 = vmatpush1.bf16.msra.mxu0 0
        %3496 = vmatprep.subr.bf16.mxu0 0
        %3497 = vmatpush1.bf16.msra.mxu0 0
        %3498 = vmatprep.subr.bf16.mxu0 0
        %3499 = vmatpush1.bf16.msra.mxu0 0
        %3500 = vmatprep.subr.bf16.mxu0 0
        %3501 = vmatpush1.bf16.msra.mxu0 0
        %3502 = vmatprep.subr.bf16.mxu0 0
        %3503 = vmatpush1.bf16.msra.mxu0 0
        %3504 = vmatprep.subr.bf16.mxu0 0
        %3505 = vmatpush1.bf16.msra.mxu0 0
        %3506 = vmatprep.subr.bf16.mxu0 0
        %3507 = vmatpush1.bf16.msra.mxu0 0
        %3508 = vmatprep.subr.bf16.mxu0 0
        %3509 = vmatpush1.bf16.msra.mxu0 0
        %3510 = vmatprep.mubr.bf16.mxu0 0
        %3511 = vmatmul.mubr.bf16.gmra.mrb[0].mxu0 %v3417
        %v3512 = vpop.f32.mrb[0].mxu0
        %v3513 = vadd.f32 0.0, %v3512
        %v3514 = vpop.f32.mrb[0].mxu0
        %v3515 = vadd.f32 0.0, %v3514
        %v3516 = vpop.f32.mrb[0].mxu0
        %v3517 = vpop.f32.mrb[0].mxu0
        %3518 = vdwg.mxu0
        %3519 = vmatprep.subr.bf16.mxu0 %v3435
        %3520 = vmatpush1.bf16.msra.mxu0 %v3432
        %3521 = vmatprep.subr.bf16.mxu0 0
        %3522 = vmatpush1.bf16.msra.mxu0 0
        %3523 = vmatprep.subr.bf16.mxu0 0
        %3524 = vmatpush1.bf16.msra.mxu0 0
        %3525 = vmatprep.subr.bf16.mxu0 0
        %3526 = vmatpush1.bf16.msra.mxu0 0
        %3527 = vmatprep.subr.bf16.mxu0 0
        %3528 = vmatpush1.bf16.msra.mxu0 0
        %3529 = vmatprep.subr.bf16.mxu0 0
        %3530 = vmatpush1.bf16.msra.mxu0 0
        %3531 = vmatprep.subr.bf16.mxu0 0
        %3532 = vmatpush1.bf16.msra.mxu0 0
        %3533 = vmatprep.subr.bf16.mxu0 0
        %3534 = vmatpush1.bf16.msra.mxu0 0
        %3535 = vmatprep.subr.bf16.mxu0 0
        %3536 = vmatpush1.bf16.msra.mxu0 0
        %3537 = vmatprep.subr.bf16.mxu0 0
        %3538 = vmatpush1.bf16.msra.mxu0 0
        %3539 = vmatprep.subr.bf16.mxu0 0
        %3540 = vmatpush1.bf16.msra.mxu0 0
        %3541 = vmatprep.subr.bf16.mxu0 0
        %3542 = vmatpush1.bf16.msra.mxu0 0
        %3543 = vmatprep.subr.bf16.mxu0 0
        %3544 = vmatpush1.bf16.msra.mxu0 0
        %3545 = vmatprep.subr.bf16.mxu0 0
        %3546 = vmatpush1.bf16.msra.mxu0 0
        %3547 = vmatprep.subr.bf16.mxu0 0
        %3548 = vmatpush1.bf16.msra.mxu0 0
        %3549 = vmatprep.subr.bf16.mxu0 0
        %3550 = vmatpush1.bf16.msra.mxu0 0
        %3551 = vmatprep.mubr.bf16.mxu0 0
        %3552 = vmatmul.mubr.bf16.gmra.mrb[0].mxu0 %v3417
        %v3553 = vpop.f32.mrb[0].mxu0
        %v3554 = vadd.f32 0.0, %v3553
        %v3555 = vpop.f32.mrb[0].mxu0
        %v3556 = vadd.f32 0.0, %v3555
        %v3557 = vpop.f32.mrb[0].mxu0
        %v3558 = vpop.f32.mrb[0].mxu0
        %3559 = vdwg.mxu0
        %v3560 = vadd.f32 %v3350, %v3472
        %v3561 = vadd.f32 %v3351, %v3474
        %v3562 = vadd.f32 %v3352, %v3513
        %v3563 = vadd.f32 %v3353, %v3515
        %v3564 = vadd.f32 %v3354, %v3554
        %v3565 = vadd.f32 %v3355, %v3556
        %v3566 = vld [vmem:[#allocation2 + $0x4] sm:$0xff]
        %v3567 = vld [vmem:[#allocation2 + $0xc] sm:$0x3f]
        %s3568 = scalar_lea.vmem %s2, 64
        %v3569 = vld [vmem:[%s3568] sm:$0xf]
        %v3572 = vcombine.high %v3566, %v3566
        %v3574 = vunpack.c.l.s4 1983009808
        %v3575 = vunpack.c.0.s8 %v3574
        %v3576 = vlaneseq
        %v3577 = vshrl.u32 %v3576, 7
        %v3578 = vsub.s32 %v3575, %v3577
        %v3579 = vrot.slane %v3566, %v3578
        %v3581 = vunpack.c.l.s4 1983009808
        %v3582 = vunpack.c.0.s8 %v3581
        %v3583 = vlaneseq
        %v3584 = vshrl.u32 %v3583, 7
        %v3585 = vsub.s32 %v3582, %v3584
        %v3586 = vrot.slane %v3572, %v3585
        %v3587 = vcombine.high %v3579, %v3579
        %v3588 = vcombine.high %v3586, %v3586
        %v3589 = vcombine.high %v3567, %v3567
        %v3591 = vunpack.c.l.s4 1983009808
        %v3592 = vunpack.c.0.s8 %v3591
        %v3593 = vlaneseq
        %v3594 = vshrl.u32 %v3593, 7
        %v3595 = vsub.s32 %v3592, %v3594
        %v3596 = vrot.slane %v3567, %v3595
        %v3598 = vunpack.c.l.s4 1983009808
        %v3599 = vunpack.c.0.s8 %v3598
        %v3600 = vlaneseq
        %v3601 = vshrl.u32 %v3600, 7
        %v3602 = vsub.s32 %v3599, %v3601
        %v3603 = vrot.slane %v3589, %v3602
        %v3604 = vcombine.high %v3596, %v3596
        %3605 = vrot.lane.b32.xlu0 %v3579, 23
        %v3606 = vpop.permute.xlu0 %3605
        %3607 = vrot.lane.b32.xlu0 %v3587, 23
        %v3608 = vpop.permute.xlu0 %3607
        %3609 = vrot.lane.b32.xlu0 %v3586, 23
        %v3610 = vpop.permute.xlu0 %3609
        %3611 = vrot.lane.b32.xlu0 %v3588, 23
        %v3612 = vpop.permute.xlu0 %3611
        %3613 = vrot.lane.b32.xlu0 %v3596, 23
        %v3614 = vpop.permute.xlu0 %3613
        %3615 = vrot.lane.b32.xlu0 %v3604, 23
        %v3616 = vpop.permute.xlu0 %3615
        %3617 = vrot.lane.b32.xlu0 %v3603, 23
        %v3618 = vpop.permute.xlu0 %3617
        %vm3619 = vcmask 187392
        %v3620 = vsel %vm3619, %v3606, %v3608
        %v3621 = vsel %vm3619, %v3608, %v3610
        %v3622 = vsel %vm3619, %v3610, %v3612
        %v3623 = vsel %vm3619, %v3612, %v3614
        %v3624 = vsel %vm3619, %v3614, %v3616
        %v3625 = vsel %vm3619, %v3616, %v3618
        %v3627 = vsel %vm328, %v3569, 0
        %v3630 = vsel %vm262, %v3620, 0
        %v3633 = vsel %vm262, %v3621, 0
        %v3636 = vsel %vm262, %v3622, 0
        %v3639 = vsel %vm262, %v3623, 0
        %v3642 = vsel %vm262, %v3624, 0
        %v3645 = vsel %vm262, %v3625, 0
        %3647 = vmatprep.subr.bf16.mxu0 %v3633
        %3648 = vmatpush1.bf16.msra.mxu0 %v3630
        %3649 = vmatprep.subr.bf16.mxu0 0
        %3650 = vmatpush1.bf16.msra.mxu0 0
        %3651 = vmatprep.subr.bf16.mxu0 0
        %3652 = vmatpush1.bf16.msra.mxu0 0
        %3653 = vmatprep.subr.bf16.mxu0 0
        %3654 = vmatpush1.bf16.msra.mxu0 0
        %3655 = vmatprep.subr.bf16.mxu0 0
        %3656 = vmatpush1.bf16.msra.mxu0 0
        %3657 = vmatprep.subr.bf16.mxu0 0
        %3658 = vmatpush1.bf16.msra.mxu0 0
        %3659 = vmatprep.subr.bf16.mxu0 0
        %3660 = vmatpush1.bf16.msra.mxu0 0
        %3661 = vmatprep.subr.bf16.mxu0 0
        %3662 = vmatpush1.bf16.msra.mxu0 0
        %3663 = vmatprep.subr.bf16.mxu0 0
        %3664 = vmatpush1.bf16.msra.mxu0 0
        %3665 = vmatprep.subr.bf16.mxu0 0
        %3666 = vmatpush1.bf16.msra.mxu0 0
        %3667 = vmatprep.subr.bf16.mxu0 0
        %3668 = vmatpush1.bf16.msra.mxu0 0
        %3669 = vmatprep.subr.bf16.mxu0 0
        %3670 = vmatpush1.bf16.msra.mxu0 0
        %3671 = vmatprep.subr.bf16.mxu0 0
        %3672 = vmatpush1.bf16.msra.mxu0 0
        %3673 = vmatprep.subr.bf16.mxu0 0
        %3674 = vmatpush1.bf16.msra.mxu0 0
        %3675 = vmatprep.subr.bf16.mxu0 0
        %3676 = vmatpush1.bf16.msra.mxu0 0
        %3677 = vmatprep.subr.bf16.mxu0 0
        %3678 = vmatpush1.bf16.msra.mxu0 0
        %3679 = vmatprep.mubr.bf16.mxu0 0
        %3680 = vmatmul.mubr.bf16.gmra.mrb[0].mxu0 %v3627
        %v3681 = vpop.f32.mrb[0].mxu0
        %v3682 = vadd.f32 0.0, %v3681
        %v3683 = vpop.f32.mrb[0].mxu0
        %v3684 = vadd.f32 0.0, %v3683
        %v3685 = vpop.f32.mrb[0].mxu0
        %v3686 = vpop.f32.mrb[0].mxu0
        %3687 = vdwg.mxu0
        %3688 = vmatprep.subr.bf16.mxu0 %v3639
        %3689 = vmatpush1.bf16.msra.mxu0 %v3636
        %3690 = vmatprep.subr.bf16.mxu0 0
        %3691 = vmatpush1.bf16.msra.mxu0 0
        %3692 = vmatprep.subr.bf16.mxu0 0
        %3693 = vmatpush1.bf16.msra.mxu0 0
        %3694 = vmatprep.subr.bf16.mxu0 0
        %3695 = vmatpush1.bf16.msra.mxu0 0
        %3696 = vmatprep.subr.bf16.mxu0 0
        %3697 = vmatpush1.bf16.msra.mxu0 0
        %3698 = vmatprep.subr.bf16.mxu0 0
        %3699 = vmatpush1.bf16.msra.mxu0 0
        %3700 = vmatprep.subr.bf16.mxu0 0
        %3701 = vmatpush1.bf16.msra.mxu0 0
        %3702 = vmatprep.subr.bf16.mxu0 0
        %3703 = vmatpush1.bf16.msra.mxu0 0
        %3704 = vmatprep.subr.bf16.mxu0 0
        %3705 = vmatpush1.bf16.msra.mxu0 0
        %3706 = vmatprep.subr.bf16.mxu0 0
        %3707 = vmatpush1.bf16.msra.mxu0 0
        %3708 = vmatprep.subr.bf16.mxu0 0
        %3709 = vmatpush1.bf16.msra.mxu0 0
        %3710 = vmatprep.subr.bf16.mxu0 0
        %3711 = vmatpush1.bf16.msra.mxu0 0
        %3712 = vmatprep.subr.bf16.mxu0 0
        %3713 = vmatpush1.bf16.msra.mxu0 0
        %3714 = vmatprep.subr.bf16.mxu0 0
        %3715 = vmatpush1.bf16.msra.mxu0 0
        %3716 = vmatprep.subr.bf16.mxu0 0
        %3717 = vmatpush1.bf16.msra.mxu0 0
        %3718 = vmatprep.subr.bf16.mxu0 0
        %3719 = vmatpush1.bf16.msra.mxu0 0
        %3720 = vmatprep.mubr.bf16.mxu0 0
        %3721 = vmatmul.mubr.bf16.gmra.mrb[0].mxu0 %v3627
        %v3722 = vpop.f32.mrb[0].mxu0
        %v3723 = vadd.f32 0.0, %v3722
        %v3724 = vpop.f32.mrb[0].mxu0
        %v3725 = vadd.f32 0.0, %v3724
        %v3726 = vpop.f32.mrb[0].mxu0
        %v3727 = vpop.f32.mrb[0].mxu0
        %3728 = vdwg.mxu0
        %3729 = vmatprep.subr.bf16.mxu0 %v3645
        %3730 = vmatpush1.bf16.msra.mxu0 %v3642
        %3731 = vmatprep.subr.bf16.mxu0 0
        %3732 = vmatpush1.bf16.msra.mxu0 0
        %3733 = vmatprep.subr.bf16.mxu0 0
        %3734 = vmatpush1.bf16.msra.mxu0 0
        %3735 = vmatprep.subr.bf16.mxu0 0
        %3736 = vmatpush1.bf16.msra.mxu0 0
        %3737 = vmatprep.subr.bf16.mxu0 0
        %3738 = vmatpush1.bf16.msra.mxu0 0
        %3739 = vmatprep.subr.bf16.mxu0 0
        %3740 = vmatpush1.bf16.msra.mxu0 0
        %3741 = vmatprep.subr.bf16.mxu0 0
        %3742 = vmatpush1.bf16.msra.mxu0 0
        %3743 = vmatprep.subr.bf16.mxu0 0
        %3744 = vmatpush1.bf16.msra.mxu0 0
        %3745 = vmatprep.subr.bf16.mxu0 0
        %3746 = vmatpush1.bf16.msra.mxu0 0
        %3747 = vmatprep.subr.bf16.mxu0 0
        %3748 = vmatpush1.bf16.msra.mxu0 0
        %3749 = vmatprep.subr.bf16.mxu0 0
        %3750 = vmatpush1.bf16.msra.mxu0 0
        %3751 = vmatprep.subr.bf16.mxu0 0
        %3752 = vmatpush1.bf16.msra.mxu0 0
        %3753 = vmatprep.subr.bf16.mxu0 0
        %3754 = vmatpush1.bf16.msra.mxu0 0
        %3755 = vmatprep.subr.bf16.mxu0 0
        %3756 = vmatpush1.bf16.msra.mxu0 0
        %3757 = vmatprep.subr.bf16.mxu0 0
        %3758 = vmatpush1.bf16.msra.mxu0 0
        %3759 = vmatprep.subr.bf16.mxu0 0
        %3760 = vmatpush1.bf16.msra.mxu0 0
        %3761 = vmatprep.mubr.bf16.mxu0 0
        %3762 = vmatmul.mubr.bf16.gmra.mrb[0].mxu0 %v3627
        %v3763 = vpop.f32.mrb[0].mxu0
        %v3764 = vadd.f32 0.0, %v3763
        %v3765 = vpop.f32.mrb[0].mxu0
        %v3766 = vadd.f32 0.0, %v3765
        %v3767 = vpop.f32.mrb[0].mxu0
        %v3768 = vpop.f32.mrb[0].mxu0
        %3769 = vdwg.mxu0
        %v3770 = vadd.f32 %v3560, %v3682
        %v3771 = vadd.f32 %v3561, %v3684
        %v3772 = vadd.f32 %v3562, %v3723
        %v3773 = vadd.f32 %v3563, %v3725
        %v3774 = vadd.f32 %v3564, %v3764
        %v3775 = vadd.f32 %v3565, %v3766
        %v3776 = vld [vmem:[#allocation2 + $0x4] sm:$0xff]
        %v3777 = vld [vmem:[#allocation2 + $0xc] sm:$0x3f]
        %s3778 = scalar_lea.vmem %s2, 68
        %v3779 = vld [vmem:[%s3778] sm:$0xf]
        %v3782 = vcombine.high %v3776, %v3776
        %v3784 = vunpack.c.l.s4 1983009808
        %v3785 = vunpack.c.0.s8 %v3784
        %v3786 = vlaneseq
        %v3787 = vshrl.u32 %v3786, 7
        %v3788 = vsub.s32 %v3785, %v3787
        %v3789 = vrot.slane %v3776, %v3788
        %v3791 = vunpack.c.l.s4 1983009808
        %v3792 = vunpack.c.0.s8 %v3791
        %v3793 = vlaneseq
        %v3794 = vshrl.u32 %v3793, 7
        %v3795 = vsub.s32 %v3792, %v3794
        %v3796 = vrot.slane %v3782, %v3795
        %v3797 = vcombine.high %v3789, %v3789
        %v3798 = vcombine.high %v3796, %v3796
        %v3799 = vcombine.high %v3777, %v3777
        %v3801 = vunpack.c.l.s4 1983009808
        %v3802 = vunpack.c.0.s8 %v3801
        %v3803 = vlaneseq
        %v3804 = vshrl.u32 %v3803, 7
        %v3805 = vsub.s32 %v3802, %v3804
        %v3806 = vrot.slane %v3777, %v3805
        %v3808 = vunpack.c.l.s4 1983009808
        %v3809 = vunpack.c.0.s8 %v3808
        %v3810 = vlaneseq
        %v3811 = vshrl.u32 %v3810, 7
        %v3812 = vsub.s32 %v3809, %v3811
        %v3813 = vrot.slane %v3799, %v3812
        %v3814 = vcombine.high %v3806, %v3806
        %3815 = vrot.lane.b32.xlu0 %v3789, 22
        %v3816 = vpop.permute.xlu0 %3815
        %3817 = vrot.lane.b32.xlu0 %v3797, 22
        %v3818 = vpop.permute.xlu0 %3817
        %3819 = vrot.lane.b32.xlu0 %v3796, 22
        %v3820 = vpop.permute.xlu0 %3819
        %3821 = vrot.lane.b32.xlu0 %v3798, 22
        %v3822 = vpop.permute.xlu0 %3821
        %3823 = vrot.lane.b32.xlu0 %v3806, 22
        %v3824 = vpop.permute.xlu0 %3823
        %3825 = vrot.lane.b32.xlu0 %v3814, 22
        %v3826 = vpop.permute.xlu0 %3825
        %3827 = vrot.lane.b32.xlu0 %v3813, 22
        %v3828 = vpop.permute.xlu0 %3827
        %vm3829 = vcmask 179200
        %v3830 = vsel %vm3829, %v3816, %v3818
        %v3831 = vsel %vm3829, %v3818, %v3820
        %v3832 = vsel %vm3829, %v3820, %v3822
        %v3833 = vsel %vm3829, %v3822, %v3824
        %v3834 = vsel %vm3829, %v3824, %v3826
        %v3835 = vsel %vm3829, %v3826, %v3828
        %v3837 = vsel %vm328, %v3779, 0
        %v3840 = vsel %vm262, %v3830, 0
        %v3843 = vsel %vm262, %v3831, 0
        %v3846 = vsel %vm262, %v3832, 0
        %v3849 = vsel %vm262, %v3833, 0
        %v3852 = vsel %vm262, %v3834, 0
        %v3855 = vsel %vm262, %v3835, 0
        %3857 = vmatprep.subr.bf16.mxu0 %v3843
        %3858 = vmatpush1.bf16.msra.mxu0 %v3840
        %3859 = vmatprep.subr.bf16.mxu0 0
        %3860 = vmatpush1.bf16.msra.mxu0 0
        %3861 = vmatprep.subr.bf16.mxu0 0
        %3862 = vmatpush1.bf16.msra.mxu0 0
        %3863 = vmatprep.subr.bf16.mxu0 0
        %3864 = vmatpush1.bf16.msra.mxu0 0
        %3865 = vmatprep.subr.bf16.mxu0 0
        %3866 = vmatpush1.bf16.msra.mxu0 0
        %3867 = vmatprep.subr.bf16.mxu0 0
        %3868 = vmatpush1.bf16.msra.mxu0 0
        %3869 = vmatprep.subr.bf16.mxu0 0
        %3870 = vmatpush1.bf16.msra.mxu0 0
        %3871 = vmatprep.subr.bf16.mxu0 0
        %3872 = vmatpush1.bf16.msra.mxu0 0
        %3873 = vmatprep.subr.bf16.mxu0 0
        %3874 = vmatpush1.bf16.msra.mxu0 0
        %3875 = vmatprep.subr.bf16.mxu0 0
        %3876 = vmatpush1.bf16.msra.mxu0 0
        %3877 = vmatprep.subr.bf16.mxu0 0
        %3878 = vmatpush1.bf16.msra.mxu0 0
        %3879 = vmatprep.subr.bf16.mxu0 0
        %3880 = vmatpush1.bf16.msra.mxu0 0
        %3881 = vmatprep.subr.bf16.mxu0 0
        %3882 = vmatpush1.bf16.msra.mxu0 0
        %3883 = vmatprep.subr.bf16.mxu0 0
        %3884 = vmatpush1.bf16.msra.mxu0 0
        %3885 = vmatprep.subr.bf16.mxu0 0
        %3886 = vmatpush1.bf16.msra.mxu0 0
        %3887 = vmatprep.subr.bf16.mxu0 0
        %3888 = vmatpush1.bf16.msra.mxu0 0
        %3889 = vmatprep.mubr.bf16.mxu0 0
        %3890 = vmatmul.mubr.bf16.gmra.mrb[0].mxu0 %v3837
        %v3891 = vpop.f32.mrb[0].mxu0
        %v3892 = vadd.f32 0.0, %v3891
        %v3893 = vpop.f32.mrb[0].mxu0
        %v3894 = vadd.f32 0.0, %v3893
        %v3895 = vpop.f32.mrb[0].mxu0
        %v3896 = vpop.f32.mrb[0].mxu0
        %3897 = vdwg.mxu0
        %3898 = vmatprep.subr.bf16.mxu0 %v3849
        %3899 = vmatpush1.bf16.msra.mxu0 %v3846
        %3900 = vmatprep.subr.bf16.mxu0 0
        %3901 = vmatpush1.bf16.msra.mxu0 0
        %3902 = vmatprep.subr.bf16.mxu0 0
        %3903 = vmatpush1.bf16.msra.mxu0 0
        %3904 = vmatprep.subr.bf16.mxu0 0
        %3905 = vmatpush1.bf16.msra.mxu0 0
        %3906 = vmatprep.subr.bf16.mxu0 0
        %3907 = vmatpush1.bf16.msra.mxu0 0
        %3908 = vmatprep.subr.bf16.mxu0 0
        %3909 = vmatpush1.bf16.msra.mxu0 0
        %3910 = vmatprep.subr.bf16.mxu0 0
        %3911 = vmatpush1.bf16.msra.mxu0 0
        %3912 = vmatprep.subr.bf16.mxu0 0
        %3913 = vmatpush1.bf16.msra.mxu0 0
        %3914 = vmatprep.subr.bf16.mxu0 0
        %3915 = vmatpush1.bf16.msra.mxu0 0
        %3916 = vmatprep.subr.bf16.mxu0 0
        %3917 = vmatpush1.bf16.msra.mxu0 0
        %3918 = vmatprep.subr.bf16.mxu0 0
        %3919 = vmatpush1.bf16.msra.mxu0 0
        %3920 = vmatprep.subr.bf16.mxu0 0
        %3921 = vmatpush1.bf16.msra.mxu0 0
        %3922 = vmatprep.subr.bf16.mxu0 0
        %3923 = vmatpush1.bf16.msra.mxu0 0
        %3924 = vmatprep.subr.bf16.mxu0 0
        %3925 = vmatpush1.bf16.msra.mxu0 0
        %3926 = vmatprep.subr.bf16.mxu0 0
        %3927 = vmatpush1.bf16.msra.mxu0 0
        %3928 = vmatprep.subr.bf16.mxu0 0
        %3929 = vmatpush1.bf16.msra.mxu0 0
        %3930 = vmatprep.mubr.bf16.mxu0 0
        %3931 = vmatmul.mubr.bf16.gmra.mrb[0].mxu0 %v3837
        %v3932 = vpop.f32.mrb[0].mxu0
        %v3933 = vadd.f32 0.0, %v3932
        %v3934 = vpop.f32.mrb[0].mxu0
        %v3935 = vadd.f32 0.0, %v3934
        %v3936 = vpop.f32.mrb[0].mxu0
        %v3937 = vpop.f32.mrb[0].mxu0
        %3938 = vdwg.mxu0
        %3939 = vmatprep.subr.bf16.mxu0 %v3855
        %3940 = vmatpush1.bf16.msra.mxu0 %v3852
        %3941 = vmatprep.subr.bf16.mxu0 0
        %3942 = vmatpush1.bf16.msra.mxu0 0
        %3943 = vmatprep.subr.bf16.mxu0 0
        %3944 = vmatpush1.bf16.msra.mxu0 0
        %3945 = vmatprep.subr.bf16.mxu0 0
        %3946 = vmatpush1.bf16.msra.mxu0 0
        %3947 = vmatprep.subr.bf16.mxu0 0
        %3948 = vmatpush1.bf16.msra.mxu0 0
        %3949 = vmatprep.subr.bf16.mxu0 0
        %3950 = vmatpush1.bf16.msra.mxu0 0
        %3951 = vmatprep.subr.bf16.mxu0 0
        %3952 = vmatpush1.bf16.msra.mxu0 0
        %3953 = vmatprep.subr.bf16.mxu0 0
        %3954 = vmatpush1.bf16.msra.mxu0 0
        %3955 = vmatprep.subr.bf16.mxu0 0
        %3956 = vmatpush1.bf16.msra.mxu0 0
        %3957 = vmatprep.subr.bf16.mxu0 0
        %3958 = vmatpush1.bf16.msra.mxu0 0
        %3959 = vmatprep.subr.bf16.mxu0 0
        %3960 = vmatpush1.bf16.msra.mxu0 0
        %3961 = vmatprep.subr.bf16.mxu0 0
        %3962 = vmatpush1.bf16.msra.mxu0 0
        %3963 = vmatprep.subr.bf16.mxu0 0
        %3964 = vmatpush1.bf16.msra.mxu0 0
        %3965 = vmatprep.subr.bf16.mxu0 0
        %3966 = vmatpush1.bf16.msra.mxu0 0
        %3967 = vmatprep.subr.bf16.mxu0 0
        %3968 = vmatpush1.bf16.msra.mxu0 0
        %3969 = vmatprep.subr.bf16.mxu0 0
        %3970 = vmatpush1.bf16.msra.mxu0 0
        %3971 = vmatprep.mubr.bf16.mxu0 0
        %3972 = vmatmul.mubr.bf16.gmra.mrb[0].mxu0 %v3837
        %v3973 = vpop.f32.mrb[0].mxu0
        %v3974 = vadd.f32 0.0, %v3973
        %v3975 = vpop.f32.mrb[0].mxu0
        %v3976 = vadd.f32 0.0, %v3975
        %v3977 = vpop.f32.mrb[0].mxu0
        %v3978 = vpop.f32.mrb[0].mxu0
        %3979 = vdwg.mxu0
        %v3980 = vadd.f32 %v3770, %v3892
        %v3981 = vadd.f32 %v3771, %v3894
        %v3982 = vadd.f32 %v3772, %v3933
        %v3983 = vadd.f32 %v3773, %v3935
        %v3984 = vadd.f32 %v3774, %v3974
        %v3985 = vadd.f32 %v3775, %v3976
        %v3986 = vld [vmem:[#allocation2 + $0xa] sm:$0xff]
        %v3987 = vld [vmem:[#allocation2 + $0x12] sm:$0x3f]
        %s3988 = scalar_lea.vmem %s2, 72
        %v3989 = vld [vmem:[%s3988] sm:$0xf]
        %v3992 = vcombine.high %v3986, %v3986
        %v3994 = vunpack.c.l.s4 1983009808
        %v3995 = vunpack.c.0.s8 %v3994
        %v3996 = vlaneseq
        %v3997 = vshrl.u32 %v3996, 7
        %v3998 = vsub.s32 %v3995, %v3997
        %v3999 = vrot.slane %v3986, %v3998
        %v4001 = vunpack.c.l.s4 1983009808
        %v4002 = vunpack.c.0.s8 %v4001
        %v4003 = vlaneseq
        %v4004 = vshrl.u32 %v4003, 7
        %v4005 = vsub.s32 %v4002, %v4004
        %v4006 = vrot.slane %v3992, %v4005
        %v4007 = vcombine.high %v3999, %v3999
        %v4008 = vcombine.high %v4006, %v4006
        %v4009 = vcombine.high %v3987, %v3987
        %v4011 = vunpack.c.l.s4 1983009808
        %v4012 = vunpack.c.0.s8 %v4011
        %v4013 = vlaneseq
        %v4014 = vshrl.u32 %v4013, 7
        %v4015 = vsub.s32 %v4012, %v4014
        %v4016 = vrot.slane %v3987, %v4015
        %v4018 = vunpack.c.l.s4 1983009808
        %v4019 = vunpack.c.0.s8 %v4018
        %v4020 = vlaneseq
        %v4021 = vshrl.u32 %v4020, 7
        %v4022 = vsub.s32 %v4019, %v4021
        %v4023 = vrot.slane %v4009, %v4022
        %v4024 = vcombine.high %v4016, %v4016
        %4025 = vrot.lane.b32.xlu0 %v3999, 120
        %v4026 = vpop.permute.xlu0 %4025
        %4027 = vrot.lane.b32.xlu0 %v4007, 120
        %v4028 = vpop.permute.xlu0 %4027
        %4029 = vrot.lane.b32.xlu0 %v4006, 120
        %v4030 = vpop.permute.xlu0 %4029
        %4031 = vrot.lane.b32.xlu0 %v4008, 120
        %v4032 = vpop.permute.xlu0 %4031
        %4033 = vrot.lane.b32.xlu0 %v4016, 120
        %v4034 = vpop.permute.xlu0 %4033
        %4035 = vrot.lane.b32.xlu0 %v4024, 120
        %v4036 = vpop.permute.xlu0 %4035
        %4037 = vrot.lane.b32.xlu0 %v4023, 120
        %v4038 = vpop.permute.xlu0 %4037
        %vm4039 = vcmask 982016
        %v4040 = vsel %vm4039, %v4026, %v4028
        %v4041 = vsel %vm4039, %v4028, %v4030
        %v4042 = vsel %vm4039, %v4030, %v4032
        %v4043 = vsel %vm4039, %v4032, %v4034
        %v4044 = vsel %vm4039, %v4034, %v4036
        %v4045 = vsel %vm4039, %v4036, %v4038
        %v4047 = vsel %vm328, %v3989, 0
        %v4050 = vsel %vm262, %v4040, 0
        %v4053 = vsel %vm262, %v4041, 0
        %v4056 = vsel %vm262, %v4042, 0
        %v4059 = vsel %vm262, %v4043, 0
        %v4062 = vsel %vm262, %v4044, 0
        %v4065 = vsel %vm262, %v4045, 0
        %4067 = vmatprep.subr.bf16.mxu0 %v4053
        %4068 = vmatpush1.bf16.msra.mxu0 %v4050
        %4069 = vmatprep.subr.bf16.mxu0 0
        %4070 = vmatpush1.bf16.msra.mxu0 0
        %4071 = vmatprep.subr.bf16.mxu0 0
        %4072 = vmatpush1.bf16.msra.mxu0 0
        %4073 = vmatprep.subr.bf16.mxu0 0
        %4074 = vmatpush1.bf16.msra.mxu0 0
        %4075 = vmatprep.subr.bf16.mxu0 0
        %4076 = vmatpush1.bf16.msra.mxu0 0
        %4077 = vmatprep.subr.bf16.mxu0 0
        %4078 = vmatpush1.bf16.msra.mxu0 0
        %4079 = vmatprep.subr.bf16.mxu0 0
        %4080 = vmatpush1.bf16.msra.mxu0 0
        %4081 = vmatprep.subr.bf16.mxu0 0
        %4082 = vmatpush1.bf16.msra.mxu0 0
        %4083 = vmatprep.subr.bf16.mxu0 0
        %4084 = vmatpush1.bf16.msra.mxu0 0
        %4085 = vmatprep.subr.bf16.mxu0 0
        %4086 = vmatpush1.bf16.msra.mxu0 0
        %4087 = vmatprep.subr.bf16.mxu0 0
        %4088 = vmatpush1.bf16.msra.mxu0 0
        %4089 = vmatprep.subr.bf16.mxu0 0
        %4090 = vmatpush1.bf16.msra.mxu0 0
        %4091 = vmatprep.subr.bf16.mxu0 0
        %4092 = vmatpush1.bf16.msra.mxu0 0
        %4093 = vmatprep.subr.bf16.mxu0 0
        %4094 = vmatpush1.bf16.msra.mxu0 0
        %4095 = vmatprep.subr.bf16.mxu0 0
        %4096 = vmatpush1.bf16.msra.mxu0 0
        %4097 = vmatprep.subr.bf16.mxu0 0
        %4098 = vmatpush1.bf16.msra.mxu0 0
        %4099 = vmatprep.mubr.bf16.mxu0 0
        %4100 = vmatmul.mubr.bf16.gmra.mrb[0].mxu0 %v4047
        %v4101 = vpop.f32.mrb[0].mxu0
        %v4102 = vadd.f32 0.0, %v4101
        %v4103 = vpop.f32.mrb[0].mxu0
        %v4104 = vadd.f32 0.0, %v4103
        %v4105 = vpop.f32.mrb[0].mxu0
        %v4106 = vpop.f32.mrb[0].mxu0
        %4107 = vdwg.mxu0
        %4108 = vmatprep.subr.bf16.mxu0 %v4059
        %4109 = vmatpush1.bf16.msra.mxu0 %v4056
        %4110 = vmatprep.subr.bf16.mxu0 0
        %4111 = vmatpush1.bf16.msra.mxu0 0
        %4112 = vmatprep.subr.bf16.mxu0 0
        %4113 = vmatpush1.bf16.msra.mxu0 0
        %4114 = vmatprep.subr.bf16.mxu0 0
        %4115 = vmatpush1.bf16.msra.mxu0 0
        %4116 = vmatprep.subr.bf16.mxu0 0
        %4117 = vmatpush1.bf16.msra.mxu0 0
        %4118 = vmatprep.subr.bf16.mxu0 0
        %4119 = vmatpush1.bf16.msra.mxu0 0
        %4120 = vmatprep.subr.bf16.mxu0 0
        %4121 = vmatpush1.bf16.msra.mxu0 0
        %4122 = vmatprep.subr.bf16.mxu0 0
        %4123 = vmatpush1.bf16.msra.mxu0 0
        %4124 = vmatprep.subr.bf16.mxu0 0
        %4125 = vmatpush1.bf16.msra.mxu0 0
        %4126 = vmatprep.subr.bf16.mxu0 0
        %4127 = vmatpush1.bf16.msra.mxu0 0
        %4128 = vmatprep.subr.bf16.mxu0 0
        %4129 = vmatpush1.bf16.msra.mxu0 0
        %4130 = vmatprep.subr.bf16.mxu0 0
        %4131 = vmatpush1.bf16.msra.mxu0 0
        %4132 = vmatprep.subr.bf16.mxu0 0
        %4133 = vmatpush1.bf16.msra.mxu0 0
        %4134 = vmatprep.subr.bf16.mxu0 0
        %4135 = vmatpush1.bf16.msra.mxu0 0
        %4136 = vmatprep.subr.bf16.mxu0 0
        %4137 = vmatpush1.bf16.msra.mxu0 0
        %4138 = vmatprep.subr.bf16.mxu0 0
        %4139 = vmatpush1.bf16.msra.mxu0 0
        %4140 = vmatprep.mubr.bf16.mxu0 0
        %4141 = vmatmul.mubr.bf16.gmra.mrb[0].mxu0 %v4047
        %v4142 = vpop.f32.mrb[0].mxu0
        %v4143 = vadd.f32 0.0, %v4142
        %v4144 = vpop.f32.mrb[0].mxu0
        %v4145 = vadd.f32 0.0, %v4144
        %v4146 = vpop.f32.mrb[0].mxu0
        %v4147 = vpop.f32.mrb[0].mxu0
        %4148 = vdwg.mxu0
        %4149 = vmatprep.subr.bf16.mxu0 %v4065
        %4150 = vmatpush1.bf16.msra.mxu0 %v4062
        %4151 = vmatprep.subr.bf16.mxu0 0
        %4152 = vmatpush1.bf16.msra.mxu0 0
        %4153 = vmatprep.subr.bf16.mxu0 0
        %4154 = vmatpush1.bf16.msra.mxu0 0
        %4155 = vmatprep.subr.bf16.mxu0 0
        %4156 = vmatpush1.bf16.msra.mxu0 0
        %4157 = vmatprep.subr.bf16.mxu0 0
        %4158 = vmatpush1.bf16.msra.mxu0 0
        %4159 = vmatprep.subr.bf16.mxu0 0
        %4160 = vmatpush1.bf16.msra.mxu0 0
        %4161 = vmatprep.subr.bf16.mxu0 0
        %4162 = vmatpush1.bf16.msra.mxu0 0
        %4163 = vmatprep.subr.bf16.mxu0 0
        %4164 = vmatpush1.bf16.msra.mxu0 0
        %4165 = vmatprep.subr.bf16.mxu0 0
        %4166 = vmatpush1.bf16.msra.mxu0 0
        %4167 = vmatprep.subr.bf16.mxu0 0
        %4168 = vmatpush1.bf16.msra.mxu0 0
        %4169 = vmatprep.subr.bf16.mxu0 0
        %4170 = vmatpush1.bf16.msra.mxu0 0
        %4171 = vmatprep.subr.bf16.mxu0 0
        %4172 = vmatpush1.bf16.msra.mxu0 0
        %4173 = vmatprep.subr.bf16.mxu0 0
        %4174 = vmatpush1.bf16.msra.mxu0 0
        %4175 = vmatprep.subr.bf16.mxu0 0
        %4176 = vmatpush1.bf16.msra.mxu0 0
        %4177 = vmatprep.subr.bf16.mxu0 0
        %4178 = vmatpush1.bf16.msra.mxu0 0
        %4179 = vmatprep.subr.bf16.mxu0 0
        %4180 = vmatpush1.bf16.msra.mxu0 0
        %4181 = vmatprep.mubr.bf16.mxu0 0
        %4182 = vmatmul.mubr.bf16.gmra.mrb[0].mxu0 %v4047
        %v4183 = vpop.f32.mrb[0].mxu0
        %v4184 = vadd.f32 0.0, %v4183
        %v4185 = vpop.f32.mrb[0].mxu0
        %v4186 = vadd.f32 0.0, %v4185
        %v4187 = vpop.f32.mrb[0].mxu0
        %v4188 = vpop.f32.mrb[0].mxu0
        %4189 = vdwg.mxu0
        %v4190 = vadd.f32 %v3980, %v4102
        %v4191 = vadd.f32 %v3981, %v4104
        %v4192 = vadd.f32 %v3982, %v4143
        %v4193 = vadd.f32 %v3983, %v4145
        %v4194 = vadd.f32 %v3984, %v4184
        %v4195 = vadd.f32 %v3985, %v4186
        %v4196 = vld [vmem:[#allocation2 + $0xa] sm:$0xff]
        %v4197 = vld [vmem:[#allocation2 + $0x12] sm:$0x3f]
        %s4198 = scalar_lea.vmem %s2, 76
        %v4199 = vld [vmem:[%s4198] sm:$0xf]
        %v4202 = vcombine.high %v4196, %v4196
        %v4204 = vunpack.c.l.s4 1983009808
        %v4205 = vunpack.c.0.s8 %v4204
        %v4206 = vlaneseq
        %v4207 = vshrl.u32 %v4206, 7
        %v4208 = vsub.s32 %v4205, %v4207
        %v4209 = vrot.slane %v4196, %v4208
        %v4211 = vunpack.c.l.s4 1983009808
        %v4212 = vunpack.c.0.s8 %v4211
        %v4213 = vlaneseq
        %v4214 = vshrl.u32 %v4213, 7
        %v4215 = vsub.s32 %v4212, %v4214
        %v4216 = vrot.slane %v4202, %v4215
        %v4217 = vcombine.high %v4209, %v4209
        %v4218 = vcombine.high %v4216, %v4216
        %v4219 = vcombine.high %v4197, %v4197
        %v4221 = vunpack.c.l.s4 1983009808
        %v4222 = vunpack.c.0.s8 %v4221
        %v4223 = vlaneseq
        %v4224 = vshrl.u32 %v4223, 7
        %v4225 = vsub.s32 %v4222, %v4224
        %v4226 = vrot.slane %v4197, %v4225
        %v4228 = vunpack.c.l.s4 1983009808
        %v4229 = vunpack.c.0.s8 %v4228
        %v4230 = vlaneseq
        %v4231 = vshrl.u32 %v4230, 7
        %v4232 = vsub.s32 %v4229, %v4231
        %v4233 = vrot.slane %v4219, %v4232
        %v4234 = vcombine.high %v4226, %v4226
        %4235 = vrot.lane.b32.xlu0 %v4209, 119
        %v4236 = vpop.permute.xlu0 %4235
        %4237 = vrot.lane.b32.xlu0 %v4217, 119
        %v4238 = vpop.permute.xlu0 %4237
        %4239 = vrot.lane.b32.xlu0 %v4216, 119
        %v4240 = vpop.permute.xlu0 %4239
        %4241 = vrot.lane.b32.xlu0 %v4218, 119
        %v4242 = vpop.permute.xlu0 %4241
        %4243 = vrot.lane.b32.xlu0 %v4226, 119
        %v4244 = vpop.permute.xlu0 %4243
        %4245 = vrot.lane.b32.xlu0 %v4234, 119
        %v4246 = vpop.permute.xlu0 %4245
        %4247 = vrot.lane.b32.xlu0 %v4233, 119
        %v4248 = vpop.permute.xlu0 %4247
        %vm4249 = vcmask 973824
        %v4250 = vsel %vm4249, %v4236, %v4238
        %v4251 = vsel %vm4249, %v4238, %v4240
        %v4252 = vsel %vm4249, %v4240, %v4242
        %v4253 = vsel %vm4249, %v4242, %v4244
        %v4254 = vsel %vm4249, %v4244, %v4246
        %v4255 = vsel %vm4249, %v4246, %v4248
        %v4257 = vsel %vm328, %v4199, 0
        %v4260 = vsel %vm262, %v4250, 0
        %v4263 = vsel %vm262, %v4251, 0
        %v4266 = vsel %vm262, %v4252, 0
        %v4269 = vsel %vm262, %v4253, 0
        %v4272 = vsel %vm262, %v4254, 0
        %v4275 = vsel %vm262, %v4255, 0
        %4277 = vmatprep.subr.bf16.mxu0 %v4263
        %4278 = vmatpush1.bf16.msra.mxu0 %v4260
        %4279 = vmatprep.subr.bf16.mxu0 0
        %4280 = vmatpush1.bf16.msra.mxu0 0
        %4281 = vmatprep.subr.bf16.mxu0 0
        %4282 = vmatpush1.bf16.msra.mxu0 0
        %4283 = vmatprep.subr.bf16.mxu0 0
        %4284 = vmatpush1.bf16.msra.mxu0 0
        %4285 = vmatprep.subr.bf16.mxu0 0
        %4286 = vmatpush1.bf16.msra.mxu0 0
        %4287 = vmatprep.subr.bf16.mxu0 0
        %4288 = vmatpush1.bf16.msra.mxu0 0
        %4289 = vmatprep.subr.bf16.mxu0 0
        %4290 = vmatpush1.bf16.msra.mxu0 0
        %4291 = vmatprep.subr.bf16.mxu0 0
        %4292 = vmatpush1.bf16.msra.mxu0 0
        %4293 = vmatprep.subr.bf16.mxu0 0
        %4294 = vmatpush1.bf16.msra.mxu0 0
        %4295 = vmatprep.subr.bf16.mxu0 0
        %4296 = vmatpush1.bf16.msra.mxu0 0
        %4297 = vmatprep.subr.bf16.mxu0 0
        %4298 = vmatpush1.bf16.msra.mxu0 0
        %4299 = vmatprep.subr.bf16.mxu0 0
        %4300 = vmatpush1.bf16.msra.mxu0 0
        %4301 = vmatprep.subr.bf16.mxu0 0
        %4302 = vmatpush1.bf16.msra.mxu0 0
        %4303 = vmatprep.subr.bf16.mxu0 0
        %4304 = vmatpush1.bf16.msra.mxu0 0
        %4305 = vmatprep.subr.bf16.mxu0 0
        %4306 = vmatpush1.bf16.msra.mxu0 0
        %4307 = vmatprep.subr.bf16.mxu0 0
        %4308 = vmatpush1.bf16.msra.mxu0 0
        %4309 = vmatprep.mubr.bf16.mxu0 0
        %4310 = vmatmul.mubr.bf16.gmra.mrb[0].mxu0 %v4257
        %v4311 = vpop.f32.mrb[0].mxu0
        %v4312 = vadd.f32 0.0, %v4311
        %v4313 = vpop.f32.mrb[0].mxu0
        %v4314 = vadd.f32 0.0, %v4313
        %v4315 = vpop.f32.mrb[0].mxu0
        %v4316 = vpop.f32.mrb[0].mxu0
        %4317 = vdwg.mxu0
        %4318 = vmatprep.subr.bf16.mxu0 %v4269
        %4319 = vmatpush1.bf16.msra.mxu0 %v4266
        %4320 = vmatprep.subr.bf16.mxu0 0
        %4321 = vmatpush1.bf16.msra.mxu0 0
        %4322 = vmatprep.subr.bf16.mxu0 0
        %4323 = vmatpush1.bf16.msra.mxu0 0
        %4324 = vmatprep.subr.bf16.mxu0 0
        %4325 = vmatpush1.bf16.msra.mxu0 0
        %4326 = vmatprep.subr.bf16.mxu0 0
        %4327 = vmatpush1.bf16.msra.mxu0 0
        %4328 = vmatprep.subr.bf16.mxu0 0
        %4329 = vmatpush1.bf16.msra.mxu0 0
        %4330 = vmatprep.subr.bf16.mxu0 0
        %4331 = vmatpush1.bf16.msra.mxu0 0
        %4332 = vmatprep.subr.bf16.mxu0 0
        %4333 = vmatpush1.bf16.msra.mxu0 0
        %4334 = vmatprep.subr.bf16.mxu0 0
        %4335 = vmatpush1.bf16.msra.mxu0 0
        %4336 = vmatprep.subr.bf16.mxu0 0
        %4337 = vmatpush1.bf16.msra.mxu0 0
        %4338 = vmatprep.subr.bf16.mxu0 0
        %4339 = vmatpush1.bf16.msra.mxu0 0
        %4340 = vmatprep.subr.bf16.mxu0 0
        %4341 = vmatpush1.bf16.msra.mxu0 0
        %4342 = vmatprep.subr.bf16.mxu0 0
        %4343 = vmatpush1.bf16.msra.mxu0 0
        %4344 = vmatprep.subr.bf16.mxu0 0
        %4345 = vmatpush1.bf16.msra.mxu0 0
        %4346 = vmatprep.subr.bf16.mxu0 0
        %4347 = vmatpush1.bf16.msra.mxu0 0
        %4348 = vmatprep.subr.bf16.mxu0 0
        %4349 = vmatpush1.bf16.msra.mxu0 0
        %4350 = vmatprep.mubr.bf16.mxu0 0
        %4351 = vmatmul.mubr.bf16.gmra.mrb[0].mxu0 %v4257
        %v4352 = vpop.f32.mrb[0].mxu0
        %v4353 = vadd.f32 0.0, %v4352
        %v4354 = vpop.f32.mrb[0].mxu0
        %v4355 = vadd.f32 0.0, %v4354
        %v4356 = vpop.f32.mrb[0].mxu0
        %v4357 = vpop.f32.mrb[0].mxu0
        %4358 = vdwg.mxu0
        %4359 = vmatprep.subr.bf16.mxu0 %v4275
        %4360 = vmatpush1.bf16.msra.mxu0 %v4272
        %4361 = vmatprep.subr.bf16.mxu0 0
        %4362 = vmatpush1.bf16.msra.mxu0 0
        %4363 = vmatprep.subr.bf16.mxu0 0
        %4364 = vmatpush1.bf16.msra.mxu0 0
        %4365 = vmatprep.subr.bf16.mxu0 0
        %4366 = vmatpush1.bf16.msra.mxu0 0
        %4367 = vmatprep.subr.bf16.mxu0 0
        %4368 = vmatpush1.bf16.msra.mxu0 0
        %4369 = vmatprep.subr.bf16.mxu0 0
        %4370 = vmatpush1.bf16.msra.mxu0 0
        %4371 = vmatprep.subr.bf16.mxu0 0
        %4372 = vmatpush1.bf16.msra.mxu0 0
        %4373 = vmatprep.subr.bf16.mxu0 0
        %4374 = vmatpush1.bf16.msra.mxu0 0
        %4375 = vmatprep.subr.bf16.mxu0 0
        %4376 = vmatpush1.bf16.msra.mxu0 0
        %4377 = vmatprep.subr.bf16.mxu0 0
        %4378 = vmatpush1.bf16.msra.mxu0 0
        %4379 = vmatprep.subr.bf16.mxu0 0
        %4380 = vmatpush1.bf16.msra.mxu0 0
        %4381 = vmatprep.subr.bf16.mxu0 0
        %4382 = vmatpush1.bf16.msra.mxu0 0
        %4383 = vmatprep.subr.bf16.mxu0 0
        %4384 = vmatpush1.bf16.msra.mxu0 0
        %4385 = vmatprep.subr.bf16.mxu0 0
        %4386 = vmatpush1.bf16.msra.mxu0 0
        %4387 = vmatprep.subr.bf16.mxu0 0
        %4388 = vmatpush1.bf16.msra.mxu0 0
        %4389 = vmatprep.subr.bf16.mxu0 0
        %4390 = vmatpush1.bf16.msra.mxu0 0
        %4391 = vmatprep.mubr.bf16.mxu0 0
        %4392 = vmatmul.mubr.bf16.gmra.mrb[0].mxu0 %v4257
        %v4393 = vpop.f32.mrb[0].mxu0
        %v4394 = vadd.f32 0.0, %v4393
        %v4395 = vpop.f32.mrb[0].mxu0
        %v4396 = vadd.f32 0.0, %v4395
        %v4397 = vpop.f32.mrb[0].mxu0
        %v4398 = vpop.f32.mrb[0].mxu0
        %4399 = vdwg.mxu0
        %v4400 = vadd.f32 %v4190, %v4312
        %v4401 = vadd.f32 %v4191, %v4314
        %v4402 = vadd.f32 %v4192, %v4353
        %v4403 = vadd.f32 %v4193, %v4355
        %v4404 = vadd.f32 %v4194, %v4394
        %v4405 = vadd.f32 %v4195, %v4396
        %v4406 = vld [vmem:[#allocation2 + $0xa] sm:$0xff]
        %v4407 = vld [vmem:[#allocation2 + $0x12] sm:$0x3f]
        %s4408 = scalar_lea.vmem %s2, 80
        %v4409 = vld [vmem:[%s4408] sm:$0xf]
        %v4412 = vcombine.high %v4406, %v4406
        %v4414 = vunpack.c.l.s4 1983009808
        %v4415 = vunpack.c.0.s8 %v4414
        %v4416 = vlaneseq
        %v4417 = vshrl.u32 %v4416, 7
        %v4418 = vsub.s32 %v4415, %v4417
        %v4419 = vrot.slane %v4406, %v4418
        %v4421 = vunpack.c.l.s4 1983009808
        %v4422 = vunpack.c.0.s8 %v4421
        %v4423 = vlaneseq
        %v4424 = vshrl.u32 %v4423, 7
        %v4425 = vsub.s32 %v4422, %v4424
        %v4426 = vrot.slane %v4412, %v4425
        %v4427 = vcombine.high %v4419, %v4419
        %v4428 = vcombine.high %v4426, %v4426
        %v4429 = vcombine.high %v4407, %v4407
        %v4431 = vunpack.c.l.s4 1983009808
        %v4432 = vunpack.c.0.s8 %v4431
        %v4433 = vlaneseq
        %v4434 = vshrl.u32 %v4433, 7
        %v4435 = vsub.s32 %v4432, %v4434
        %v4436 = vrot.slane %v4407, %v4435
        %v4438 = vunpack.c.l.s4 1983009808
        %v4439 = vunpack.c.0.s8 %v4438
        %v4440 = vlaneseq
        %v4441 = vshrl.u32 %v4440, 7
        %v4442 = vsub.s32 %v4439, %v4441
        %v4443 = vrot.slane %v4429, %v4442
        %v4444 = vcombine.high %v4436, %v4436
        %4445 = vrot.lane.b32.xlu0 %v4419, 118
        %v4446 = vpop.permute.xlu0 %4445
        %4447 = vrot.lane.b32.xlu0 %v4427, 118
        %v4448 = vpop.permute.xlu0 %4447
        %4449 = vrot.lane.b32.xlu0 %v4426, 118
        %v4450 = vpop.permute.xlu0 %4449
        %4451 = vrot.lane.b32.xlu0 %v4428, 118
        %v4452 = vpop.permute.xlu0 %4451
        %4453 = vrot.lane.b32.xlu0 %v4436, 118
        %v4454 = vpop.permute.xlu0 %4453
        %4455 = vrot.lane.b32.xlu0 %v4444, 118
        %v4456 = vpop.permute.xlu0 %4455
        %4457 = vrot.lane.b32.xlu0 %v4443, 118
        %v4458 = vpop.permute.xlu0 %4457
        %vm4459 = vcmask 965632
        %v4460 = vsel %vm4459, %v4446, %v4448
        %v4461 = vsel %vm4459, %v4448, %v4450
        %v4462 = vsel %vm4459, %v4450, %v4452
        %v4463 = vsel %vm4459, %v4452, %v4454
        %v4464 = vsel %vm4459, %v4454, %v4456
        %v4465 = vsel %vm4459, %v4456, %v4458
        %v4467 = vsel %vm328, %v4409, 0
        %v4470 = vsel %vm262, %v4460, 0
        %v4473 = vsel %vm262, %v4461, 0
        %v4476 = vsel %vm262, %v4462, 0
        %v4479 = vsel %vm262, %v4463, 0
        %v4482 = vsel %vm262, %v4464, 0
        %v4485 = vsel %vm262, %v4465, 0
        %4487 = vmatprep.subr.bf16.mxu0 %v4473
        %4488 = vmatpush1.bf16.msra.mxu0 %v4470
        %4489 = vmatprep.subr.bf16.mxu0 0
        %4490 = vmatpush1.bf16.msra.mxu0 0
        %4491 = vmatprep.subr.bf16.mxu0 0
        %4492 = vmatpush1.bf16.msra.mxu0 0
        %4493 = vmatprep.subr.bf16.mxu0 0
        %4494 = vmatpush1.bf16.msra.mxu0 0
        %4495 = vmatprep.subr.bf16.mxu0 0
        %4496 = vmatpush1.bf16.msra.mxu0 0
        %4497 = vmatprep.subr.bf16.mxu0 0
        %4498 = vmatpush1.bf16.msra.mxu0 0
        %4499 = vmatprep.subr.bf16.mxu0 0
        %4500 = vmatpush1.bf16.msra.mxu0 0
        %4501 = vmatprep.subr.bf16.mxu0 0
        %4502 = vmatpush1.bf16.msra.mxu0 0
        %4503 = vmatprep.subr.bf16.mxu0 0
        %4504 = vmatpush1.bf16.msra.mxu0 0
        %4505 = vmatprep.subr.bf16.mxu0 0
        %4506 = vmatpush1.bf16.msra.mxu0 0
        %4507 = vmatprep.subr.bf16.mxu0 0
        %4508 = vmatpush1.bf16.msra.mxu0 0
        %4509 = vmatprep.subr.bf16.mxu0 0
        %4510 = vmatpush1.bf16.msra.mxu0 0
        %4511 = vmatprep.subr.bf16.mxu0 0
        %4512 = vmatpush1.bf16.msra.mxu0 0
        %4513 = vmatprep.subr.bf16.mxu0 0
        %4514 = vmatpush1.bf16.msra.mxu0 0
        %4515 = vmatprep.subr.bf16.mxu0 0
        %4516 = vmatpush1.bf16.msra.mxu0 0
        %4517 = vmatprep.subr.bf16.mxu0 0
        %4518 = vmatpush1.bf16.msra.mxu0 0
        %4519 = vmatprep.mubr.bf16.mxu0 0
        %4520 = vmatmul.mubr.bf16.gmra.mrb[0].mxu0 %v4467
        %v4521 = vpop.f32.mrb[0].mxu0
        %v4522 = vadd.f32 0.0, %v4521
        %v4523 = vpop.f32.mrb[0].mxu0
        %v4524 = vadd.f32 0.0, %v4523
        %v4525 = vpop.f32.mrb[0].mxu0
        %v4526 = vpop.f32.mrb[0].mxu0
        %4527 = vdwg.mxu0
        %4528 = vmatprep.subr.bf16.mxu0 %v4479
        %4529 = vmatpush1.bf16.msra.mxu0 %v4476
        %4530 = vmatprep.subr.bf16.mxu0 0
        %4531 = vmatpush1.bf16.msra.mxu0 0
        %4532 = vmatprep.subr.bf16.mxu0 0
        %4533 = vmatpush1.bf16.msra.mxu0 0
        %4534 = vmatprep.subr.bf16.mxu0 0
        %4535 = vmatpush1.bf16.msra.mxu0 0
        %4536 = vmatprep.subr.bf16.mxu0 0
        %4537 = vmatpush1.bf16.msra.mxu0 0
        %4538 = vmatprep.subr.bf16.mxu0 0
        %4539 = vmatpush1.bf16.msra.mxu0 0
        %4540 = vmatprep.subr.bf16.mxu0 0
        %4541 = vmatpush1.bf16.msra.mxu0 0
        %4542 = vmatprep.subr.bf16.mxu0 0
        %4543 = vmatpush1.bf16.msra.mxu0 0
        %4544 = vmatprep.subr.bf16.mxu0 0
        %4545 = vmatpush1.bf16.msra.mxu0 0
        %4546 = vmatprep.subr.bf16.mxu0 0
        %4547 = vmatpush1.bf16.msra.mxu0 0
        %4548 = vmatprep.subr.bf16.mxu0 0
        %4549 = vmatpush1.bf16.msra.mxu0 0
        %4550 = vmatprep.subr.bf16.mxu0 0
        %4551 = vmatpush1.bf16.msra.mxu0 0
        %4552 = vmatprep.subr.bf16.mxu0 0
        %4553 = vmatpush1.bf16.msra.mxu0 0
        %4554 = vmatprep.subr.bf16.mxu0 0
        %4555 = vmatpush1.bf16.msra.mxu0 0
        %4556 = vmatprep.subr.bf16.mxu0 0
        %4557 = vmatpush1.bf16.msra.mxu0 0
        %4558 = vmatprep.subr.bf16.mxu0 0
        %4559 = vmatpush1.bf16.msra.mxu0 0
        %4560 = vmatprep.mubr.bf16.mxu0 0
        %4561 = vmatmul.mubr.bf16.gmra.mrb[0].mxu0 %v4467
        %v4562 = vpop.f32.mrb[0].mxu0
        %v4563 = vadd.f32 0.0, %v4562
        %v4564 = vpop.f32.mrb[0].mxu0
        %v4565 = vadd.f32 0.0, %v4564
        %v4566 = vpop.f32.mrb[0].mxu0
        %v4567 = vpop.f32.mrb[0].mxu0
        %4568 = vdwg.mxu0
        %4569 = vmatprep.subr.bf16.mxu0 %v4485
        %4570 = vmatpush1.bf16.msra.mxu0 %v4482
        %4571 = vmatprep.subr.bf16.mxu0 0
        %4572 = vmatpush1.bf16.msra.mxu0 0
        %4573 = vmatprep.subr.bf16.mxu0 0
        %4574 = vmatpush1.bf16.msra.mxu0 0
        %4575 = vmatprep.subr.bf16.mxu0 0
        %4576 = vmatpush1.bf16.msra.mxu0 0
        %4577 = vmatprep.subr.bf16.mxu0 0
        %4578 = vmatpush1.bf16.msra.mxu0 0
        %4579 = vmatprep.subr.bf16.mxu0 0
        %4580 = vmatpush1.bf16.msra.mxu0 0
        %4581 = vmatprep.subr.bf16.mxu0 0
        %4582 = vmatpush1.bf16.msra.mxu0 0
        %4583 = vmatprep.subr.bf16.mxu0 0
        %4584 = vmatpush1.bf16.msra.mxu0 0
        %4585 = vmatprep.subr.bf16.mxu0 0
        %4586 = vmatpush1.bf16.msra.mxu0 0
        %4587 = vmatprep.subr.bf16.mxu0 0
        %4588 = vmatpush1.bf16.msra.mxu0 0
        %4589 = vmatprep.subr.bf16.mxu0 0
        %4590 = vmatpush1.bf16.msra.mxu0 0
        %4591 = vmatprep.subr.bf16.mxu0 0
        %4592 = vmatpush1.bf16.msra.mxu0 0
        %4593 = vmatprep.subr.bf16.mxu0 0
        %4594 = vmatpush1.bf16.msra.mxu0 0
        %4595 = vmatprep.subr.bf16.mxu0 0
        %4596 = vmatpush1.bf16.msra.mxu0 0
        %4597 = vmatprep.subr.bf16.mxu0 0
        %4598 = vmatpush1.bf16.msra.mxu0 0
        %4599 = vmatprep.subr.bf16.mxu0 0
        %4600 = vmatpush1.bf16.msra.mxu0 0
        %4601 = vmatprep.mubr.bf16.mxu0 0
        %4602 = vmatmul.mubr.bf16.gmra.mrb[0].mxu0 %v4467
        %v4603 = vpop.f32.mrb[0].mxu0
        %v4604 = vadd.f32 0.0, %v4603
        %v4605 = vpop.f32.mrb[0].mxu0
        %v4606 = vadd.f32 0.0, %v4605
        %v4607 = vpop.f32.mrb[0].mxu0
        %v4608 = vpop.f32.mrb[0].mxu0
        %4609 = vdwg.mxu0
        %v4610 = vadd.f32 %v4400, %v4522
        %v4611 = vadd.f32 %v4401, %v4524
        %v4612 = vadd.f32 %v4402, %v4563
        %v4613 = vadd.f32 %v4403, %v4565
        %v4614 = vadd.f32 %v4404, %v4604
        %v4615 = vadd.f32 %v4405, %v4606
        %v4616 = vld [vmem:[#allocation2 + $0xa] sm:$0xff]
        %v4617 = vld [vmem:[#allocation2 + $0x12] sm:$0x3f]
        %s4618 = scalar_lea.vmem %s2, 84
        %v4619 = vld [vmem:[%s4618] sm:$0xf]
        %v4622 = vcombine.high %v4616, %v4616
        %v4624 = vunpack.c.l.s4 1983009808
        %v4625 = vunpack.c.0.s8 %v4624
        %v4626 = vlaneseq
        %v4627 = vshrl.u32 %v4626, 7
        %v4628 = vsub.s32 %v4625, %v4627
        %v4629 = vrot.slane %v4616, %v4628
        %v4631 = vunpack.c.l.s4 1983009808
        %v4632 = vunpack.c.0.s8 %v4631
        %v4633 = vlaneseq
        %v4634 = vshrl.u32 %v4633, 7
        %v4635 = vsub.s32 %v4632, %v4634
        %v4636 = vrot.slane %v4622, %v4635
        %v4637 = vcombine.high %v4629, %v4629
        %v4638 = vcombine.high %v4636, %v4636
        %v4639 = vcombine.high %v4617, %v4617
        %v4641 = vunpack.c.l.s4 1983009808
        %v4642 = vunpack.c.0.s8 %v4641
        %v4643 = vlaneseq
        %v4644 = vshrl.u32 %v4643, 7
        %v4645 = vsub.s32 %v4642, %v4644
        %v4646 = vrot.slane %v4617, %v4645
        %v4648 = vunpack.c.l.s4 1983009808
        %v4649 = vunpack.c.0.s8 %v4648
        %v4650 = vlaneseq
        %v4651 = vshrl.u32 %v4650, 7
        %v4652 = vsub.s32 %v4649, %v4651
        %v4653 = vrot.slane %v4639, %v4652
        %v4654 = vcombine.high %v4646, %v4646
        %4655 = vrot.lane.b32.xlu0 %v4629, 102
        %v4656 = vpop.permute.xlu0 %4655
        %4657 = vrot.lane.b32.xlu0 %v4637, 102
        %v4658 = vpop.permute.xlu0 %4657
        %4659 = vrot.lane.b32.xlu0 %v4636, 102
        %v4660 = vpop.permute.xlu0 %4659
        %4661 = vrot.lane.b32.xlu0 %v4638, 102
        %v4662 = vpop.permute.xlu0 %4661
        %4663 = vrot.lane.b32.xlu0 %v4646, 102
        %v4664 = vpop.permute.xlu0 %4663
        %4665 = vrot.lane.b32.xlu0 %v4654, 102
        %v4666 = vpop.permute.xlu0 %4665
        %4667 = vrot.lane.b32.xlu0 %v4653, 102
        %v4668 = vpop.permute.xlu0 %4667
        %vm4669 = vcmask 834560
        %v4670 = vsel %vm4669, %v4656, %v4658
        %v4671 = vsel %vm4669, %v4658, %v4660
        %v4672 = vsel %vm4669, %v4660, %v4662
        %v4673 = vsel %vm4669, %v4662, %v4664
        %v4674 = vsel %vm4669, %v4664, %v4666
        %v4675 = vsel %vm4669, %v4666, %v4668
        %v4677 = vsel %vm328, %v4619, 0
        %v4680 = vsel %vm262, %v4670, 0
        %v4683 = vsel %vm262, %v4671, 0
        %v4686 = vsel %vm262, %v4672, 0
        %v4689 = vsel %vm262, %v4673, 0
        %v4692 = vsel %vm262, %v4674, 0
        %v4695 = vsel %vm262, %v4675, 0
        %4697 = vmatprep.subr.bf16.mxu0 %v4683
        %4698 = vmatpush1.bf16.msra.mxu0 %v4680
        %4699 = vmatprep.subr.bf16.mxu0 0
        %4700 = vmatpush1.bf16.msra.mxu0 0
        %4701 = vmatprep.subr.bf16.mxu0 0
        %4702 = vmatpush1.bf16.msra.mxu0 0
        %4703 = vmatprep.subr.bf16.mxu0 0
        %4704 = vmatpush1.bf16.msra.mxu0 0
        %4705 = vmatprep.subr.bf16.mxu0 0
        %4706 = vmatpush1.bf16.msra.mxu0 0
        %4707 = vmatprep.subr.bf16.mxu0 0
        %4708 = vmatpush1.bf16.msra.mxu0 0
        %4709 = vmatprep.subr.bf16.mxu0 0
        %4710 = vmatpush1.bf16.msra.mxu0 0
        %4711 = vmatprep.subr.bf16.mxu0 0
        %4712 = vmatpush1.bf16.msra.mxu0 0
        %4713 = vmatprep.subr.bf16.mxu0 0
        %4714 = vmatpush1.bf16.msra.mxu0 0
        %4715 = vmatprep.subr.bf16.mxu0 0
        %4716 = vmatpush1.bf16.msra.mxu0 0
        %4717 = vmatprep.subr.bf16.mxu0 0
        %4718 = vmatpush1.bf16.msra.mxu0 0
        %4719 = vmatprep.subr.bf16.mxu0 0
        %4720 = vmatpush1.bf16.msra.mxu0 0
        %4721 = vmatprep.subr.bf16.mxu0 0
        %4722 = vmatpush1.bf16.msra.mxu0 0
        %4723 = vmatprep.subr.bf16.mxu0 0
        %4724 = vmatpush1.bf16.msra.mxu0 0
        %4725 = vmatprep.subr.bf16.mxu0 0
        %4726 = vmatpush1.bf16.msra.mxu0 0
        %4727 = vmatprep.subr.bf16.mxu0 0
        %4728 = vmatpush1.bf16.msra.mxu0 0
        %4729 = vmatprep.mubr.bf16.mxu0 0
        %4730 = vmatmul.mubr.bf16.gmra.mrb[0].mxu0 %v4677
        %v4731 = vpop.f32.mrb[0].mxu0
        %v4732 = vadd.f32 0.0, %v4731
        %v4733 = vpop.f32.mrb[0].mxu0
        %v4734 = vadd.f32 0.0, %v4733
        %v4735 = vpop.f32.mrb[0].mxu0
        %v4736 = vpop.f32.mrb[0].mxu0
        %4737 = vdwg.mxu0
        %4738 = vmatprep.subr.bf16.mxu0 %v4689
        %4739 = vmatpush1.bf16.msra.mxu0 %v4686
        %4740 = vmatprep.subr.bf16.mxu0 0
        %4741 = vmatpush1.bf16.msra.mxu0 0
        %4742 = vmatprep.subr.bf16.mxu0 0
        %4743 = vmatpush1.bf16.msra.mxu0 0
        %4744 = vmatprep.subr.bf16.mxu0 0
        %4745 = vmatpush1.bf16.msra.mxu0 0
        %4746 = vmatprep.subr.bf16.mxu0 0
        %4747 = vmatpush1.bf16.msra.mxu0 0
        %4748 = vmatprep.subr.bf16.mxu0 0
        %4749 = vmatpush1.bf16.msra.mxu0 0
        %4750 = vmatprep.subr.bf16.mxu0 0
        %4751 = vmatpush1.bf16.msra.mxu0 0
        %4752 = vmatprep.subr.bf16.mxu0 0
        %4753 = vmatpush1.bf16.msra.mxu0 0
        %4754 = vmatprep.subr.bf16.mxu0 0
        %4755 = vmatpush1.bf16.msra.mxu0 0
        %4756 = vmatprep.subr.bf16.mxu0 0
        %4757 = vmatpush1.bf16.msra.mxu0 0
        %4758 = vmatprep.subr.bf16.mxu0 0
        %4759 = vmatpush1.bf16.msra.mxu0 0
        %4760 = vmatprep.subr.bf16.mxu0 0
        %4761 = vmatpush1.bf16.msra.mxu0 0
        %4762 = vmatprep.subr.bf16.mxu0 0
        %4763 = vmatpush1.bf16.msra.mxu0 0
        %4764 = vmatprep.subr.bf16.mxu0 0
        %4765 = vmatpush1.bf16.msra.mxu0 0
        %4766 = vmatprep.subr.bf16.mxu0 0
        %4767 = vmatpush1.bf16.msra.mxu0 0
        %4768 = vmatprep.subr.bf16.mxu0 0
        %4769 = vmatpush1.bf16.msra.mxu0 0
        %4770 = vmatprep.mubr.bf16.mxu0 0
        %4771 = vmatmul.mubr.bf16.gmra.mrb[0].mxu0 %v4677
        %v4772 = vpop.f32.mrb[0].mxu0
        %v4773 = vadd.f32 0.0, %v4772
        %v4774 = vpop.f32.mrb[0].mxu0
        %v4775 = vadd.f32 0.0, %v4774
        %v4776 = vpop.f32.mrb[0].mxu0
        %v4777 = vpop.f32.mrb[0].mxu0
        %4778 = vdwg.mxu0
        %4779 = vmatprep.subr.bf16.mxu0 %v4695
        %4780 = vmatpush1.bf16.msra.mxu0 %v4692
        %4781 = vmatprep.subr.bf16.mxu0 0
        %4782 = vmatpush1.bf16.msra.mxu0 0
        %4783 = vmatprep.subr.bf16.mxu0 0
        %4784 = vmatpush1.bf16.msra.mxu0 0
        %4785 = vmatprep.subr.bf16.mxu0 0
        %4786 = vmatpush1.bf16.msra.mxu0 0
        %4787 = vmatprep.subr.bf16.mxu0 0
        %4788 = vmatpush1.bf16.msra.mxu0 0
        %4789 = vmatprep.subr.bf16.mxu0 0
        %4790 = vmatpush1.bf16.msra.mxu0 0
        %4791 = vmatprep.subr.bf16.mxu0 0
        %4792 = vmatpush1.bf16.msra.mxu0 0
        %4793 = vmatprep.subr.bf16.mxu0 0
        %4794 = vmatpush1.bf16.msra.mxu0 0
        %4795 = vmatprep.subr.bf16.mxu0 0
        %4796 = vmatpush1.bf16.msra.mxu0 0
        %4797 = vmatprep.subr.bf16.mxu0 0
        %4798 = vmatpush1.bf16.msra.mxu0 0
        %4799 = vmatprep.subr.bf16.mxu0 0
        %4800 = vmatpush1.bf16.msra.mxu0 0
        %4801 = vmatprep.subr.bf16.mxu0 0
        %4802 = vmatpush1.bf16.msra.mxu0 0
        %4803 = vmatprep.subr.bf16.mxu0 0
        %4804 = vmatpush1.bf16.msra.mxu0 0
        %4805 = vmatprep.subr.bf16.mxu0 0
        %4806 = vmatpush1.bf16.msra.mxu0 0
        %4807 = vmatprep.subr.bf16.mxu0 0
        %4808 = vmatpush1.bf16.msra.mxu0 0
        %4809 = vmatprep.subr.bf16.mxu0 0
        %4810 = vmatpush1.bf16.msra.mxu0 0
        %4811 = vmatprep.mubr.bf16.mxu0 0
        %4812 = vmatmul.mubr.bf16.gmra.mrb[0].mxu0 %v4677
        %v4813 = vpop.f32.mrb[0].mxu0
        %v4814 = vadd.f32 0.0, %v4813
        %v4815 = vpop.f32.mrb[0].mxu0
        %v4816 = vadd.f32 0.0, %v4815
        %v4817 = vpop.f32.mrb[0].mxu0
        %v4818 = vpop.f32.mrb[0].mxu0
        %4819 = vdwg.mxu0
        %v4820 = vadd.f32 %v4610, %v4732
        %v4821 = vadd.f32 %v4611, %v4734
        %v4822 = vadd.f32 %v4612, %v4773
        %v4823 = vadd.f32 %v4613, %v4775
        %v4824 = vadd.f32 %v4614, %v4814
        %v4825 = vadd.f32 %v4615, %v4816
        %v4826 = vld [vmem:[#allocation2 + $0xa] sm:$0xff]
        %v4827 = vld [vmem:[#allocation2 + $0x12] sm:$0x3f]
        %s4828 = scalar_lea.vmem %s2, 88
        %v4829 = vld [vmem:[%s4828] sm:$0xf]
        %v4832 = vcombine.high %v4826, %v4826
        %v4834 = vunpack.c.l.s4 1983009808
        %v4835 = vunpack.c.0.s8 %v4834
        %v4836 = vlaneseq
        %v4837 = vshrl.u32 %v4836, 7
        %v4838 = vsub.s32 %v4835, %v4837
        %v4839 = vrot.slane %v4826, %v4838
        %v4841 = vunpack.c.l.s4 1983009808
        %v4842 = vunpack.c.0.s8 %v4841
        %v4843 = vlaneseq
        %v4844 = vshrl.u32 %v4843, 7
        %v4845 = vsub.s32 %v4842, %v4844
        %v4846 = vrot.slane %v4832, %v4845
        %v4847 = vcombine.high %v4839, %v4839
        %v4848 = vcombine.high %v4846, %v4846
        %v4849 = vcombine.high %v4827, %v4827
        %v4851 = vunpack.c.l.s4 1983009808
        %v4852 = vunpack.c.0.s8 %v4851
        %v4853 = vlaneseq
        %v4854 = vshrl.u32 %v4853, 7
        %v4855 = vsub.s32 %v4852, %v4854
        %v4856 = vrot.slane %v4827, %v4855
        %v4858 = vunpack.c.l.s4 1983009808
        %v4859 = vunpack.c.0.s8 %v4858
        %v4860 = vlaneseq
        %v4861 = vshrl.u32 %v4860, 7
        %v4862 = vsub.s32 %v4859, %v4861
        %v4863 = vrot.slane %v4849, %v4862
        %v4864 = vcombine.high %v4856, %v4856
        %4865 = vrot.lane.b32.xlu0 %v4839, 101
        %v4866 = vpop.permute.xlu0 %4865
        %4867 = vrot.lane.b32.xlu0 %v4847, 101
        %v4868 = vpop.permute.xlu0 %4867
        %4869 = vrot.lane.b32.xlu0 %v4846, 101
        %v4870 = vpop.permute.xlu0 %4869
        %4871 = vrot.lane.b32.xlu0 %v4848, 101
        %v4872 = vpop.permute.xlu0 %4871
        %4873 = vrot.lane.b32.xlu0 %v4856, 101
        %v4874 = vpop.permute.xlu0 %4873
        %4875 = vrot.lane.b32.xlu0 %v4864, 101
        %v4876 = vpop.permute.xlu0 %4875
        %4877 = vrot.lane.b32.xlu0 %v4863, 101
        %v4878 = vpop.permute.xlu0 %4877
        %vm4879 = vcmask 826368
        %v4880 = vsel %vm4879, %v4866, %v4868
        %v4881 = vsel %vm4879, %v4868, %v4870
        %v4882 = vsel %vm4879, %v4870, %v4872
        %v4883 = vsel %vm4879, %v4872, %v4874
        %v4884 = vsel %vm4879, %v4874, %v4876
        %v4885 = vsel %vm4879, %v4876, %v4878
        %v4887 = vsel %vm328, %v4829, 0
        %v4890 = vsel %vm262, %v4880, 0
        %v4893 = vsel %vm262, %v4881, 0
        %v4896 = vsel %vm262, %v4882, 0
        %v4899 = vsel %vm262, %v4883, 0
        %v4902 = vsel %vm262, %v4884, 0
        %v4905 = vsel %vm262, %v4885, 0
        %4907 = vmatprep.subr.bf16.mxu0 %v4893
        %4908 = vmatpush1.bf16.msra.mxu0 %v4890
        %4909 = vmatprep.subr.bf16.mxu0 0
        %4910 = vmatpush1.bf16.msra.mxu0 0
        %4911 = vmatprep.subr.bf16.mxu0 0
        %4912 = vmatpush1.bf16.msra.mxu0 0
        %4913 = vmatprep.subr.bf16.mxu0 0
        %4914 = vmatpush1.bf16.msra.mxu0 0
        %4915 = vmatprep.subr.bf16.mxu0 0
        %4916 = vmatpush1.bf16.msra.mxu0 0
        %4917 = vmatprep.subr.bf16.mxu0 0
        %4918 = vmatpush1.bf16.msra.mxu0 0
        %4919 = vmatprep.subr.bf16.mxu0 0
        %4920 = vmatpush1.bf16.msra.mxu0 0
        %4921 = vmatprep.subr.bf16.mxu0 0
        %4922 = vmatpush1.bf16.msra.mxu0 0
        %4923 = vmatprep.subr.bf16.mxu0 0
        %4924 = vmatpush1.bf16.msra.mxu0 0
        %4925 = vmatprep.subr.bf16.mxu0 0
        %4926 = vmatpush1.bf16.msra.mxu0 0
        %4927 = vmatprep.subr.bf16.mxu0 0
        %4928 = vmatpush1.bf16.msra.mxu0 0
        %4929 = vmatprep.subr.bf16.mxu0 0
        %4930 = vmatpush1.bf16.msra.mxu0 0
        %4931 = vmatprep.subr.bf16.mxu0 0
        %4932 = vmatpush1.bf16.msra.mxu0 0
        %4933 = vmatprep.subr.bf16.mxu0 0
        %4934 = vmatpush1.bf16.msra.mxu0 0
        %4935 = vmatprep.subr.bf16.mxu0 0
        %4936 = vmatpush1.bf16.msra.mxu0 0
        %4937 = vmatprep.subr.bf16.mxu0 0
        %4938 = vmatpush1.bf16.msra.mxu0 0
        %4939 = vmatprep.mubr.bf16.mxu0 0
        %4940 = vmatmul.mubr.bf16.gmra.mrb[0].mxu0 %v4887
        %v4941 = vpop.f32.mrb[0].mxu0
        %v4942 = vadd.f32 0.0, %v4941
        %v4943 = vpop.f32.mrb[0].mxu0
        %v4944 = vadd.f32 0.0, %v4943
        %v4945 = vpop.f32.mrb[0].mxu0
        %v4946 = vpop.f32.mrb[0].mxu0
        %4947 = vdwg.mxu0
        %4948 = vmatprep.subr.bf16.mxu0 %v4899
        %4949 = vmatpush1.bf16.msra.mxu0 %v4896
        %4950 = vmatprep.subr.bf16.mxu0 0
        %4951 = vmatpush1.bf16.msra.mxu0 0
        %4952 = vmatprep.subr.bf16.mxu0 0
        %4953 = vmatpush1.bf16.msra.mxu0 0
        %4954 = vmatprep.subr.bf16.mxu0 0
        %4955 = vmatpush1.bf16.msra.mxu0 0
        %4956 = vmatprep.subr.bf16.mxu0 0
        %4957 = vmatpush1.bf16.msra.mxu0 0
        %4958 = vmatprep.subr.bf16.mxu0 0
        %4959 = vmatpush1.bf16.msra.mxu0 0
        %4960 = vmatprep.subr.bf16.mxu0 0
        %4961 = vmatpush1.bf16.msra.mxu0 0
        %4962 = vmatprep.subr.bf16.mxu0 0
        %4963 = vmatpush1.bf16.msra.mxu0 0
        %4964 = vmatprep.subr.bf16.mxu0 0
        %4965 = vmatpush1.bf16.msra.mxu0 0
        %4966 = vmatprep.subr.bf16.mxu0 0
        %4967 = vmatpush1.bf16.msra.mxu0 0
        %4968 = vmatprep.subr.bf16.mxu0 0
        %4969 = vmatpush1.bf16.msra.mxu0 0
        %4970 = vmatprep.subr.bf16.mxu0 0
        %4971 = vmatpush1.bf16.msra.mxu0 0
        %4972 = vmatprep.subr.bf16.mxu0 0
        %4973 = vmatpush1.bf16.msra.mxu0 0
        %4974 = vmatprep.subr.bf16.mxu0 0
        %4975 = vmatpush1.bf16.msra.mxu0 0
        %4976 = vmatprep.subr.bf16.mxu0 0
        %4977 = vmatpush1.bf16.msra.mxu0 0
        %4978 = vmatprep.subr.bf16.mxu0 0
        %4979 = vmatpush1.bf16.msra.mxu0 0
        %4980 = vmatprep.mubr.bf16.mxu0 0
        %4981 = vmatmul.mubr.bf16.gmra.mrb[0].mxu0 %v4887
        %v4982 = vpop.f32.mrb[0].mxu0
        %v4983 = vadd.f32 0.0, %v4982
        %v4984 = vpop.f32.mrb[0].mxu0
        %v4985 = vadd.f32 0.0, %v4984
        %v4986 = vpop.f32.mrb[0].mxu0
        %v4987 = vpop.f32.mrb[0].mxu0
        %4988 = vdwg.mxu0
        %4989 = vmatprep.subr.bf16.mxu0 %v4905
        %4990 = vmatpush1.bf16.msra.mxu0 %v4902
        %4991 = vmatprep.subr.bf16.mxu0 0
        %4992 = vmatpush1.bf16.msra.mxu0 0
        %4993 = vmatprep.subr.bf16.mxu0 0
        %4994 = vmatpush1.bf16.msra.mxu0 0
        %4995 = vmatprep.subr.bf16.mxu0 0
        %4996 = vmatpush1.bf16.msra.mxu0 0
        %4997 = vmatprep.subr.bf16.mxu0 0
        %4998 = vmatpush1.bf16.msra.mxu0 0
        %4999 = vmatprep.subr.bf16.mxu0 0
        %5000 = vmatpush1.bf16.msra.mxu0 0
        %5001 = vmatprep.subr.bf16.mxu0 0
        %5002 = vmatpush1.bf16.msra.mxu0 0
        %5003 = vmatprep.subr.bf16.mxu0 0
        %5004 = vmatpush1.bf16.msra.mxu0 0
        %5005 = vmatprep.subr.bf16.mxu0 0
        %5006 = vmatpush1.bf16.msra.mxu0 0
        %5007 = vmatprep.subr.bf16.mxu0 0
        %5008 = vmatpush1.bf16.msra.mxu0 0
        %5009 = vmatprep.subr.bf16.mxu0 0
        %5010 = vmatpush1.bf16.msra.mxu0 0
        %5011 = vmatprep.subr.bf16.mxu0 0
        %5012 = vmatpush1.bf16.msra.mxu0 0
        %5013 = vmatprep.subr.bf16.mxu0 0
        %5014 = vmatpush1.bf16.msra.mxu0 0
        %5015 = vmatprep.subr.bf16.mxu0 0
        %5016 = vmatpush1.bf16.msra.mxu0 0
        %5017 = vmatprep.subr.bf16.mxu0 0
        %5018 = vmatpush1.bf16.msra.mxu0 0
        %5019 = vmatprep.subr.bf16.mxu0 0
        %5020 = vmatpush1.bf16.msra.mxu0 0
        %5021 = vmatprep.mubr.bf16.mxu0 0
        %5022 = vmatmul.mubr.bf16.gmra.mrb[0].mxu0 %v4887
        %v5023 = vpop.f32.mrb[0].mxu0
        %v5024 = vadd.f32 0.0, %v5023
        %v5025 = vpop.f32.mrb[0].mxu0
        %v5026 = vadd.f32 0.0, %v5025
        %v5027 = vpop.f32.mrb[0].mxu0
        %v5028 = vpop.f32.mrb[0].mxu0
        %5029 = vdwg.mxu0
        %v5030 = vadd.f32 %v4820, %v4942
        %v5031 = vadd.f32 %v4821, %v4944
        %v5032 = vadd.f32 %v4822, %v4983
        %v5033 = vadd.f32 %v4823, %v4985
        %v5034 = vadd.f32 %v4824, %v5024
        %v5035 = vadd.f32 %v4825, %v5026
        %v5036 = vld [vmem:[#allocation2 + $0xa] sm:$0xff]
        %v5037 = vld [vmem:[#allocation2 + $0x12] sm:$0x3f]
        %s5038 = scalar_lea.vmem %s2, 92
        %v5039 = vld [vmem:[%s5038] sm:$0xf]
        %v5042 = vcombine.high %v5036, %v5036
        %v5044 = vunpack.c.l.s4 1983009808
        %v5045 = vunpack.c.0.s8 %v5044
        %v5046 = vlaneseq
        %v5047 = vshrl.u32 %v5046, 7
        %v5048 = vsub.s32 %v5045, %v5047
        %v5049 = vrot.slane %v5036, %v5048
        %v5051 = vunpack.c.l.s4 1983009808
        %v5052 = vunpack.c.0.s8 %v5051
        %v5053 = vlaneseq
        %v5054 = vshrl.u32 %v5053, 7
        %v5055 = vsub.s32 %v5052, %v5054
        %v5056 = vrot.slane %v5042, %v5055
        %v5057 = vcombine.high %v5049, %v5049
        %v5058 = vcombine.high %v5056, %v5056
        %v5059 = vcombine.high %v5037, %v5037
        %v5061 = vunpack.c.l.s4 1983009808
        %v5062 = vunpack.c.0.s8 %v5061
        %v5063 = vlaneseq
        %v5064 = vshrl.u32 %v5063, 7
        %v5065 = vsub.s32 %v5062, %v5064
        %v5066 = vrot.slane %v5037, %v5065
        %v5068 = vunpack.c.l.s4 1983009808
        %v5069 = vunpack.c.0.s8 %v5068
        %v5070 = vlaneseq
        %v5071 = vshrl.u32 %v5070, 7
        %v5072 = vsub.s32 %v5069, %v5071
        %v5073 = vrot.slane %v5059, %v5072
        %v5074 = vcombine.high %v5066, %v5066
        %5075 = vrot.lane.b32.xlu0 %v5049, 100
        %v5076 = vpop.permute.xlu0 %5075
        %5077 = vrot.lane.b32.xlu0 %v5057, 100
        %v5078 = vpop.permute.xlu0 %5077
        %5079 = vrot.lane.b32.xlu0 %v5056, 100
        %v5080 = vpop.permute.xlu0 %5079
        %5081 = vrot.lane.b32.xlu0 %v5058, 100
        %v5082 = vpop.permute.xlu0 %5081
        %5083 = vrot.lane.b32.xlu0 %v5066, 100
        %v5084 = vpop.permute.xlu0 %5083
        %5085 = vrot.lane.b32.xlu0 %v5074, 100
        %v5086 = vpop.permute.xlu0 %5085
        %5087 = vrot.lane.b32.xlu0 %v5073, 100
        %v5088 = vpop.permute.xlu0 %5087
        %vm5089 = vcmask 818176
        %v5090 = vsel %vm5089, %v5076, %v5078
        %v5091 = vsel %vm5089, %v5078, %v5080
        %v5092 = vsel %vm5089, %v5080, %v5082
        %v5093 = vsel %vm5089, %v5082, %v5084
        %v5094 = vsel %vm5089, %v5084, %v5086
        %v5095 = vsel %vm5089, %v5086, %v5088
        %v5097 = vsel %vm328, %v5039, 0
        %v5100 = vsel %vm262, %v5090, 0
        %v5103 = vsel %vm262, %v5091, 0
        %v5106 = vsel %vm262, %v5092, 0
        %v5109 = vsel %vm262, %v5093, 0
        %v5112 = vsel %vm262, %v5094, 0
        %v5115 = vsel %vm262, %v5095, 0
        %5117 = vmatprep.subr.bf16.mxu0 %v5103
        %5118 = vmatpush1.bf16.msra.mxu0 %v5100
        %5119 = vmatprep.subr.bf16.mxu0 0
        %5120 = vmatpush1.bf16.msra.mxu0 0
        %5121 = vmatprep.subr.bf16.mxu0 0
        %5122 = vmatpush1.bf16.msra.mxu0 0
        %5123 = vmatprep.subr.bf16.mxu0 0
        %5124 = vmatpush1.bf16.msra.mxu0 0
        %5125 = vmatprep.subr.bf16.mxu0 0
        %5126 = vmatpush1.bf16.msra.mxu0 0
        %5127 = vmatprep.subr.bf16.mxu0 0
        %5128 = vmatpush1.bf16.msra.mxu0 0
        %5129 = vmatprep.subr.bf16.mxu0 0
        %5130 = vmatpush1.bf16.msra.mxu0 0
        %5131 = vmatprep.subr.bf16.mxu0 0
        %5132 = vmatpush1.bf16.msra.mxu0 0
        %5133 = vmatprep.subr.bf16.mxu0 0
        %5134 = vmatpush1.bf16.msra.mxu0 0
        %5135 = vmatprep.subr.bf16.mxu0 0
        %5136 = vmatpush1.bf16.msra.mxu0 0
        %5137 = vmatprep.subr.bf16.mxu0 0
        %5138 = vmatpush1.bf16.msra.mxu0 0
        %5139 = vmatprep.subr.bf16.mxu0 0
        %5140 = vmatpush1.bf16.msra.mxu0 0
        %5141 = vmatprep.subr.bf16.mxu0 0
        %5142 = vmatpush1.bf16.msra.mxu0 0
        %5143 = vmatprep.subr.bf16.mxu0 0
        %5144 = vmatpush1.bf16.msra.mxu0 0
        %5145 = vmatprep.subr.bf16.mxu0 0
        %5146 = vmatpush1.bf16.msra.mxu0 0
        %5147 = vmatprep.subr.bf16.mxu0 0
        %5148 = vmatpush1.bf16.msra.mxu0 0
        %5149 = vmatprep.mubr.bf16.mxu0 0
        %5150 = vmatmul.mubr.bf16.gmra.mrb[0].mxu0 %v5097
        %v5151 = vpop.f32.mrb[0].mxu0
        %v5152 = vadd.f32 0.0, %v5151
        %v5153 = vpop.f32.mrb[0].mxu0
        %v5154 = vadd.f32 0.0, %v5153
        %v5155 = vpop.f32.mrb[0].mxu0
        %v5156 = vpop.f32.mrb[0].mxu0
        %5157 = vdwg.mxu0
        %5158 = vmatprep.subr.bf16.mxu0 %v5109
        %5159 = vmatpush1.bf16.msra.mxu0 %v5106
        %5160 = vmatprep.subr.bf16.mxu0 0
        %5161 = vmatpush1.bf16.msra.mxu0 0
        %5162 = vmatprep.subr.bf16.mxu0 0
        %5163 = vmatpush1.bf16.msra.mxu0 0
        %5164 = vmatprep.subr.bf16.mxu0 0
        %5165 = vmatpush1.bf16.msra.mxu0 0
        %5166 = vmatprep.subr.bf16.mxu0 0
        %5167 = vmatpush1.bf16.msra.mxu0 0
        %5168 = vmatprep.subr.bf16.mxu0 0
        %5169 = vmatpush1.bf16.msra.mxu0 0
        %5170 = vmatprep.subr.bf16.mxu0 0
        %5171 = vmatpush1.bf16.msra.mxu0 0
        %5172 = vmatprep.subr.bf16.mxu0 0
        %5173 = vmatpush1.bf16.msra.mxu0 0
        %5174 = vmatprep.subr.bf16.mxu0 0
        %5175 = vmatpush1.bf16.msra.mxu0 0
        %5176 = vmatprep.subr.bf16.mxu0 0
        %5177 = vmatpush1.bf16.msra.mxu0 0
        %5178 = vmatprep.subr.bf16.mxu0 0
        %5179 = vmatpush1.bf16.msra.mxu0 0
        %5180 = vmatprep.subr.bf16.mxu0 0
        %5181 = vmatpush1.bf16.msra.mxu0 0
        %5182 = vmatprep.subr.bf16.mxu0 0
        %5183 = vmatpush1.bf16.msra.mxu0 0
        %5184 = vmatprep.subr.bf16.mxu0 0
        %5185 = vmatpush1.bf16.msra.mxu0 0
        %5186 = vmatprep.subr.bf16.mxu0 0
        %5187 = vmatpush1.bf16.msra.mxu0 0
        %5188 = vmatprep.subr.bf16.mxu0 0
        %5189 = vmatpush1.bf16.msra.mxu0 0
        %5190 = vmatprep.mubr.bf16.mxu0 0
        %5191 = vmatmul.mubr.bf16.gmra.mrb[0].mxu0 %v5097
        %v5192 = vpop.f32.mrb[0].mxu0
        %v5193 = vadd.f32 0.0, %v5192
        %v5194 = vpop.f32.mrb[0].mxu0
        %v5195 = vadd.f32 0.0, %v5194
        %v5196 = vpop.f32.mrb[0].mxu0
        %v5197 = vpop.f32.mrb[0].mxu0
        %5198 = vdwg.mxu0
        %5199 = vmatprep.subr.bf16.mxu0 %v5115
        %5200 = vmatpush1.bf16.msra.mxu0 %v5112
        %5201 = vmatprep.subr.bf16.mxu0 0
        %5202 = vmatpush1.bf16.msra.mxu0 0
        %5203 = vmatprep.subr.bf16.mxu0 0
        %5204 = vmatpush1.bf16.msra.mxu0 0
        %5205 = vmatprep.subr.bf16.mxu0 0
        %5206 = vmatpush1.bf16.msra.mxu0 0
        %5207 = vmatprep.subr.bf16.mxu0 0
        %5208 = vmatpush1.bf16.msra.mxu0 0
        %5209 = vmatprep.subr.bf16.mxu0 0
        %5210 = vmatpush1.bf16.msra.mxu0 0
        %5211 = vmatprep.subr.bf16.mxu0 0
        %5212 = vmatpush1.bf16.msra.mxu0 0
        %5213 = vmatprep.subr.bf16.mxu0 0
        %5214 = vmatpush1.bf16.msra.mxu0 0
        %5215 = vmatprep.subr.bf16.mxu0 0
        %5216 = vmatpush1.bf16.msra.mxu0 0
        %5217 = vmatprep.subr.bf16.mxu0 0
        %5218 = vmatpush1.bf16.msra.mxu0 0
        %5219 = vmatprep.subr.bf16.mxu0 0
        %5220 = vmatpush1.bf16.msra.mxu0 0
        %5221 = vmatprep.subr.bf16.mxu0 0
        %5222 = vmatpush1.bf16.msra.mxu0 0
        %5223 = vmatprep.subr.bf16.mxu0 0
        %5224 = vmatpush1.bf16.msra.mxu0 0
        %5225 = vmatprep.subr.bf16.mxu0 0
        %5226 = vmatpush1.bf16.msra.mxu0 0
        %5227 = vmatprep.subr.bf16.mxu0 0
        %5228 = vmatpush1.bf16.msra.mxu0 0
        %5229 = vmatprep.subr.bf16.mxu0 0
        %5230 = vmatpush1.bf16.msra.mxu0 0
        %5231 = vmatprep.mubr.bf16.mxu0 0
        %5232 = vmatmul.mubr.bf16.gmra.mrb[0].mxu0 %v5097
        %v5233 = vpop.f32.mrb[0].mxu0
        %v5234 = vadd.f32 0.0, %v5233
        %v5235 = vpop.f32.mrb[0].mxu0
        %v5236 = vadd.f32 0.0, %v5235
        %v5237 = vpop.f32.mrb[0].mxu0
        %v5238 = vpop.f32.mrb[0].mxu0
        %5239 = vdwg.mxu0
        %v5240 = vadd.f32 %v5030, %v5152
        %v5241 = vadd.f32 %v5031, %v5154
        %v5242 = vadd.f32 %v5032, %v5193
        %v5243 = vadd.f32 %v5033, %v5195
        %v5244 = vadd.f32 %v5034, %v5234
        %v5245 = vadd.f32 %v5035, %v5236
        %v5246 = vld [vmem:[#allocation2 + $0xa] sm:$0xff]
        %v5247 = vld [vmem:[#allocation2 + $0x12] sm:$0x3f]
        %s5248 = scalar_lea.vmem %s2, 96
        %v5249 = vld [vmem:[%s5248] sm:$0xf]
        %v5252 = vcombine.high %v5246, %v5246
        %v5254 = vunpack.c.l.s4 1983009808
        %v5255 = vunpack.c.0.s8 %v5254
        %v5256 = vlaneseq
        %v5257 = vshrl.u32 %v5256, 7
        %v5258 = vsub.s32 %v5255, %v5257
        %v5259 = vrot.slane %v5246, %v5258
        %v5261 = vunpack.c.l.s4 1983009808
        %v5262 = vunpack.c.0.s8 %v5261
        %v5263 = vlaneseq
        %v5264 = vshrl.u32 %v5263, 7
        %v5265 = vsub.s32 %v5262, %v5264
        %v5266 = vrot.slane %v5252, %v5265
        %v5267 = vcombine.high %v5259, %v5259
        %v5268 = vcombine.high %v5266, %v5266
        %v5269 = vcombine.high %v5247, %v5247
        %v5271 = vunpack.c.l.s4 1983009808
        %v5272 = vunpack.c.0.s8 %v5271
        %v5273 = vlaneseq
        %v5274 = vshrl.u32 %v5273, 7
        %v5275 = vsub.s32 %v5272, %v5274
        %v5276 = vrot.slane %v5247, %v5275
        %v5278 = vunpack.c.l.s4 1983009808
        %v5279 = vunpack.c.0.s8 %v5278
        %v5280 = vlaneseq
        %v5281 = vshrl.u32 %v5280, 7
        %v5282 = vsub.s32 %v5279, %v5281
        %v5283 = vrot.slane %v5269, %v5282
        %v5284 = vcombine.high %v5276, %v5276
        %5285 = vrot.lane.b32.xlu0 %v5259, 84
        %v5286 = vpop.permute.xlu0 %5285
        %5287 = vrot.lane.b32.xlu0 %v5267, 84
        %v5288 = vpop.permute.xlu0 %5287
        %5289 = vrot.lane.b32.xlu0 %v5266, 84
        %v5290 = vpop.permute.xlu0 %5289
        %5291 = vrot.lane.b32.xlu0 %v5268, 84
        %v5292 = vpop.permute.xlu0 %5291
        %5293 = vrot.lane.b32.xlu0 %v5276, 84
        %v5294 = vpop.permute.xlu0 %5293
        %5295 = vrot.lane.b32.xlu0 %v5284, 84
        %v5296 = vpop.permute.xlu0 %5295
        %5297 = vrot.lane.b32.xlu0 %v5283, 84
        %v5298 = vpop.permute.xlu0 %5297
        %vm5299 = vcmask 687104
        %v5300 = vsel %vm5299, %v5286, %v5288
        %v5301 = vsel %vm5299, %v5288, %v5290
        %v5302 = vsel %vm5299, %v5290, %v5292
        %v5303 = vsel %vm5299, %v5292, %v5294
        %v5304 = vsel %vm5299, %v5294, %v5296
        %v5305 = vsel %vm5299, %v5296, %v5298
        %v5307 = vsel %vm328, %v5249, 0
        %v5310 = vsel %vm262, %v5300, 0
        %v5313 = vsel %vm262, %v5301, 0
        %v5316 = vsel %vm262, %v5302, 0
        %v5319 = vsel %vm262, %v5303, 0
        %v5322 = vsel %vm262, %v5304, 0
        %v5325 = vsel %vm262, %v5305, 0
        %5327 = vmatprep.subr.bf16.mxu0 %v5313
        %5328 = vmatpush1.bf16.msra.mxu0 %v5310
        %5329 = vmatprep.subr.bf16.mxu0 0
        %5330 = vmatpush1.bf16.msra.mxu0 0
        %5331 = vmatprep.subr.bf16.mxu0 0
        %5332 = vmatpush1.bf16.msra.mxu0 0
        %5333 = vmatprep.subr.bf16.mxu0 0
        %5334 = vmatpush1.bf16.msra.mxu0 0
        %5335 = vmatprep.subr.bf16.mxu0 0
        %5336 = vmatpush1.bf16.msra.mxu0 0
        %5337 = vmatprep.subr.bf16.mxu0 0
        %5338 = vmatpush1.bf16.msra.mxu0 0
        %5339 = vmatprep.subr.bf16.mxu0 0
        %5340 = vmatpush1.bf16.msra.mxu0 0
        %5341 = vmatprep.subr.bf16.mxu0 0
        %5342 = vmatpush1.bf16.msra.mxu0 0
        %5343 = vmatprep.subr.bf16.mxu0 0
        %5344 = vmatpush1.bf16.msra.mxu0 0
        %5345 = vmatprep.subr.bf16.mxu0 0
        %5346 = vmatpush1.bf16.msra.mxu0 0
        %5347 = vmatprep.subr.bf16.mxu0 0
        %5348 = vmatpush1.bf16.msra.mxu0 0
        %5349 = vmatprep.subr.bf16.mxu0 0
        %5350 = vmatpush1.bf16.msra.mxu0 0
        %5351 = vmatprep.subr.bf16.mxu0 0
        %5352 = vmatpush1.bf16.msra.mxu0 0
        %5353 = vmatprep.subr.bf16.mxu0 0
        %5354 = vmatpush1.bf16.msra.mxu0 0
        %5355 = vmatprep.subr.bf16.mxu0 0
        %5356 = vmatpush1.bf16.msra.mxu0 0
        %5357 = vmatprep.subr.bf16.mxu0 0
        %5358 = vmatpush1.bf16.msra.mxu0 0
        %5359 = vmatprep.mubr.bf16.mxu0 0
        %5360 = vmatmul.mubr.bf16.gmra.mrb[0].mxu0 %v5307
        %v5361 = vpop.f32.mrb[0].mxu0
        %v5362 = vadd.f32 0.0, %v5361
        %v5363 = vpop.f32.mrb[0].mxu0
        %v5364 = vadd.f32 0.0, %v5363
        %v5365 = vpop.f32.mrb[0].mxu0
        %v5366 = vpop.f32.mrb[0].mxu0
        %5367 = vdwg.mxu0
        %5368 = vmatprep.subr.bf16.mxu0 %v5319
        %5369 = vmatpush1.bf16.msra.mxu0 %v5316
        %5370 = vmatprep.subr.bf16.mxu0 0
        %5371 = vmatpush1.bf16.msra.mxu0 0
        %5372 = vmatprep.subr.bf16.mxu0 0
        %5373 = vmatpush1.bf16.msra.mxu0 0
        %5374 = vmatprep.subr.bf16.mxu0 0
        %5375 = vmatpush1.bf16.msra.mxu0 0
        %5376 = vmatprep.subr.bf16.mxu0 0
        %5377 = vmatpush1.bf16.msra.mxu0 0
        %5378 = vmatprep.subr.bf16.mxu0 0
        %5379 = vmatpush1.bf16.msra.mxu0 0
        %5380 = vmatprep.subr.bf16.mxu0 0
        %5381 = vmatpush1.bf16.msra.mxu0 0
        %5382 = vmatprep.subr.bf16.mxu0 0
        %5383 = vmatpush1.bf16.msra.mxu0 0
        %5384 = vmatprep.subr.bf16.mxu0 0
        %5385 = vmatpush1.bf16.msra.mxu0 0
        %5386 = vmatprep.subr.bf16.mxu0 0
        %5387 = vmatpush1.bf16.msra.mxu0 0
        %5388 = vmatprep.subr.bf16.mxu0 0
        %5389 = vmatpush1.bf16.msra.mxu0 0
        %5390 = vmatprep.subr.bf16.mxu0 0
        %5391 = vmatpush1.bf16.msra.mxu0 0
        %5392 = vmatprep.subr.bf16.mxu0 0
        %5393 = vmatpush1.bf16.msra.mxu0 0
        %5394 = vmatprep.subr.bf16.mxu0 0
        %5395 = vmatpush1.bf16.msra.mxu0 0
        %5396 = vmatprep.subr.bf16.mxu0 0
        %5397 = vmatpush1.bf16.msra.mxu0 0
        %5398 = vmatprep.subr.bf16.mxu0 0
        %5399 = vmatpush1.bf16.msra.mxu0 0
        %5400 = vmatprep.mubr.bf16.mxu0 0
        %5401 = vmatmul.mubr.bf16.gmra.mrb[0].mxu0 %v5307
        %v5402 = vpop.f32.mrb[0].mxu0
        %v5403 = vadd.f32 0.0, %v5402
        %v5404 = vpop.f32.mrb[0].mxu0
        %v5405 = vadd.f32 0.0, %v5404
        %v5406 = vpop.f32.mrb[0].mxu0
        %v5407 = vpop.f32.mrb[0].mxu0
        %5408 = vdwg.mxu0
        %5409 = vmatprep.subr.bf16.mxu0 %v5325
        %5410 = vmatpush1.bf16.msra.mxu0 %v5322
        %5411 = vmatprep.subr.bf16.mxu0 0
        %5412 = vmatpush1.bf16.msra.mxu0 0
        %5413 = vmatprep.subr.bf16.mxu0 0
        %5414 = vmatpush1.bf16.msra.mxu0 0
        %5415 = vmatprep.subr.bf16.mxu0 0
        %5416 = vmatpush1.bf16.msra.mxu0 0
        %5417 = vmatprep.subr.bf16.mxu0 0
        %5418 = vmatpush1.bf16.msra.mxu0 0
        %5419 = vmatprep.subr.bf16.mxu0 0
        %5420 = vmatpush1.bf16.msra.mxu0 0
        %5421 = vmatprep.subr.bf16.mxu0 0
        %5422 = vmatpush1.bf16.msra.mxu0 0
        %5423 = vmatprep.subr.bf16.mxu0 0
        %5424 = vmatpush1.bf16.msra.mxu0 0
        %5425 = vmatprep.subr.bf16.mxu0 0
        %5426 = vmatpush1.bf16.msra.mxu0 0
        %5427 = vmatprep.subr.bf16.mxu0 0
        %5428 = vmatpush1.bf16.msra.mxu0 0
        %5429 = vmatprep.subr.bf16.mxu0 0
        %5430 = vmatpush1.bf16.msra.mxu0 0
        %5431 = vmatprep.subr.bf16.mxu0 0
        %5432 = vmatpush1.bf16.msra.mxu0 0
        %5433 = vmatprep.subr.bf16.mxu0 0
        %5434 = vmatpush1.bf16.msra.mxu0 0
        %5435 = vmatprep.subr.bf16.mxu0 0
        %5436 = vmatpush1.bf16.msra.mxu0 0
        %5437 = vmatprep.subr.bf16.mxu0 0
        %5438 = vmatpush1.bf16.msra.mxu0 0
        %5439 = vmatprep.subr.bf16.mxu0 0
        %5440 = vmatpush1.bf16.msra.mxu0 0
        %5441 = vmatprep.mubr.bf16.mxu0 0
        %5442 = vmatmul.mubr.bf16.gmra.mrb[0].mxu0 %v5307
        %v5443 = vpop.f32.mrb[0].mxu0
        %v5444 = vadd.f32 0.0, %v5443
        %v5445 = vpop.f32.mrb[0].mxu0
        %v5446 = vadd.f32 0.0, %v5445
        %v5447 = vpop.f32.mrb[0].mxu0
        %v5448 = vpop.f32.mrb[0].mxu0
        %5449 = vdwg.mxu0
        %v5450 = vadd.f32 %v5240, %v5362
        %v5451 = vadd.f32 %v5241, %v5364
        %v5452 = vadd.f32 %v5242, %v5403
        %v5453 = vadd.f32 %v5243, %v5405
        %v5454 = vadd.f32 %v5244, %v5444
        %v5455 = vadd.f32 %v5245, %v5446
        %v5456 = vld [vmem:[#allocation2 + $0xa] sm:$0xff]
        %v5457 = vld [vmem:[#allocation2 + $0x12] sm:$0x3f]
        %s5458 = scalar_lea.vmem %s2, 100
        %v5459 = vld [vmem:[%s5458] sm:$0xf]
        %v5462 = vcombine.high %v5456, %v5456
        %v5464 = vunpack.c.l.s4 1983009808
        %v5465 = vunpack.c.0.s8 %v5464
        %v5466 = vlaneseq
        %v5467 = vshrl.u32 %v5466, 7
        %v5468 = vsub.s32 %v5465, %v5467
        %v5469 = vrot.slane %v5456, %v5468
        %v5471 = vunpack.c.l.s4 1983009808
        %v5472 = vunpack.c.0.s8 %v5471
        %v5473 = vlaneseq
        %v5474 = vshrl.u32 %v5473, 7
        %v5475 = vsub.s32 %v5472, %v5474
        %v5476 = vrot.slane %v5462, %v5475
        %v5477 = vcombine.high %v5469, %v5469
        %v5478 = vcombine.high %v5476, %v5476
        %v5479 = vcombine.high %v5457, %v5457
        %v5481 = vunpack.c.l.s4 1983009808
        %v5482 = vunpack.c.0.s8 %v5481
        %v5483 = vlaneseq
        %v5484 = vshrl.u32 %v5483, 7
        %v5485 = vsub.s32 %v5482, %v5484
        %v5486 = vrot.slane %v5457, %v5485
        %v5488 = vunpack.c.l.s4 1983009808
        %v5489 = vunpack.c.0.s8 %v5488
        %v5490 = vlaneseq
        %v5491 = vshrl.u32 %v5490, 7
        %v5492 = vsub.s32 %v5489, %v5491
        %v5493 = vrot.slane %v5479, %v5492
        %v5494 = vcombine.high %v5486, %v5486
        %5495 = vrot.lane.b32.xlu0 %v5469, 83
        %v5496 = vpop.permute.xlu0 %5495
        %5497 = vrot.lane.b32.xlu0 %v5477, 83
        %v5498 = vpop.permute.xlu0 %5497
        %5499 = vrot.lane.b32.xlu0 %v5476, 83
        %v5500 = vpop.permute.xlu0 %5499
        %5501 = vrot.lane.b32.xlu0 %v5478, 83
        %v5502 = vpop.permute.xlu0 %5501
        %5503 = vrot.lane.b32.xlu0 %v5486, 83
        %v5504 = vpop.permute.xlu0 %5503
        %5505 = vrot.lane.b32.xlu0 %v5494, 83
        %v5506 = vpop.permute.xlu0 %5505
        %5507 = vrot.lane.b32.xlu0 %v5493, 83
        %v5508 = vpop.permute.xlu0 %5507
        %vm5509 = vcmask 678912
        %v5510 = vsel %vm5509, %v5496, %v5498
        %v5511 = vsel %vm5509, %v5498, %v5500
        %v5512 = vsel %vm5509, %v5500, %v5502
        %v5513 = vsel %vm5509, %v5502, %v5504
        %v5514 = vsel %vm5509, %v5504, %v5506
        %v5515 = vsel %vm5509, %v5506, %v5508
        %v5517 = vsel %vm328, %v5459, 0
        %v5520 = vsel %vm262, %v5510, 0
        %v5523 = vsel %vm262, %v5511, 0
        %v5526 = vsel %vm262, %v5512, 0
        %v5529 = vsel %vm262, %v5513, 0
        %v5532 = vsel %vm262, %v5514, 0
        %v5535 = vsel %vm262, %v5515, 0
        %5537 = vmatprep.subr.bf16.mxu0 %v5523
        %5538 = vmatpush1.bf16.msra.mxu0 %v5520
        %5539 = vmatprep.subr.bf16.mxu0 0
        %5540 = vmatpush1.bf16.msra.mxu0 0
        %5541 = vmatprep.subr.bf16.mxu0 0
        %5542 = vmatpush1.bf16.msra.mxu0 0
        %5543 = vmatprep.subr.bf16.mxu0 0
        %5544 = vmatpush1.bf16.msra.mxu0 0
        %5545 = vmatprep.subr.bf16.mxu0 0
        %5546 = vmatpush1.bf16.msra.mxu0 0
        %5547 = vmatprep.subr.bf16.mxu0 0
        %5548 = vmatpush1.bf16.msra.mxu0 0
        %5549 = vmatprep.subr.bf16.mxu0 0
        %5550 = vmatpush1.bf16.msra.mxu0 0
        %5551 = vmatprep.subr.bf16.mxu0 0
        %5552 = vmatpush1.bf16.msra.mxu0 0
        %5553 = vmatprep.subr.bf16.mxu0 0
        %5554 = vmatpush1.bf16.msra.mxu0 0
        %5555 = vmatprep.subr.bf16.mxu0 0
        %5556 = vmatpush1.bf16.msra.mxu0 0
        %5557 = vmatprep.subr.bf16.mxu0 0
        %5558 = vmatpush1.bf16.msra.mxu0 0
        %5559 = vmatprep.subr.bf16.mxu0 0
        %5560 = vmatpush1.bf16.msra.mxu0 0
        %5561 = vmatprep.subr.bf16.mxu0 0
        %5562 = vmatpush1.bf16.msra.mxu0 0
        %5563 = vmatprep.subr.bf16.mxu0 0
        %5564 = vmatpush1.bf16.msra.mxu0 0
        %5565 = vmatprep.subr.bf16.mxu0 0
        %5566 = vmatpush1.bf16.msra.mxu0 0
        %5567 = vmatprep.subr.bf16.mxu0 0
        %5568 = vmatpush1.bf16.msra.mxu0 0
        %5569 = vmatprep.mubr.bf16.mxu0 0
        %5570 = vmatmul.mubr.bf16.gmra.mrb[0].mxu0 %v5517
        %v5571 = vpop.f32.mrb[0].mxu0
        %v5572 = vadd.f32 0.0, %v5571
        %v5573 = vpop.f32.mrb[0].mxu0
        %v5574 = vadd.f32 0.0, %v5573
        %v5575 = vpop.f32.mrb[0].mxu0
        %v5576 = vpop.f32.mrb[0].mxu0
        %5577 = vdwg.mxu0
        %5578 = vmatprep.subr.bf16.mxu0 %v5529
        %5579 = vmatpush1.bf16.msra.mxu0 %v5526
        %5580 = vmatprep.subr.bf16.mxu0 0
        %5581 = vmatpush1.bf16.msra.mxu0 0
        %5582 = vmatprep.subr.bf16.mxu0 0
        %5583 = vmatpush1.bf16.msra.mxu0 0
        %5584 = vmatprep.subr.bf16.mxu0 0
        %5585 = vmatpush1.bf16.msra.mxu0 0
        %5586 = vmatprep.subr.bf16.mxu0 0
        %5587 = vmatpush1.bf16.msra.mxu0 0
        %5588 = vmatprep.subr.bf16.mxu0 0
        %5589 = vmatpush1.bf16.msra.mxu0 0
        %5590 = vmatprep.subr.bf16.mxu0 0
        %5591 = vmatpush1.bf16.msra.mxu0 0
        %5592 = vmatprep.subr.bf16.mxu0 0
        %5593 = vmatpush1.bf16.msra.mxu0 0
        %5594 = vmatprep.subr.bf16.mxu0 0
        %5595 = vmatpush1.bf16.msra.mxu0 0
        %5596 = vmatprep.subr.bf16.mxu0 0
        %5597 = vmatpush1.bf16.msra.mxu0 0
        %5598 = vmatprep.subr.bf16.mxu0 0
        %5599 = vmatpush1.bf16.msra.mxu0 0
        %5600 = vmatprep.subr.bf16.mxu0 0
        %5601 = vmatpush1.bf16.msra.mxu0 0
        %5602 = vmatprep.subr.bf16.mxu0 0
        %5603 = vmatpush1.bf16.msra.mxu0 0
        %5604 = vmatprep.subr.bf16.mxu0 0
        %5605 = vmatpush1.bf16.msra.mxu0 0
        %5606 = vmatprep.subr.bf16.mxu0 0
        %5607 = vmatpush1.bf16.msra.mxu0 0
        %5608 = vmatprep.subr.bf16.mxu0 0
        %5609 = vmatpush1.bf16.msra.mxu0 0
        %5610 = vmatprep.mubr.bf16.mxu0 0
        %5611 = vmatmul.mubr.bf16.gmra.mrb[0].mxu0 %v5517
        %v5612 = vpop.f32.mrb[0].mxu0
        %v5613 = vadd.f32 0.0, %v5612
        %v5614 = vpop.f32.mrb[0].mxu0
        %v5615 = vadd.f32 0.0, %v5614
        %v5616 = vpop.f32.mrb[0].mxu0
        %v5617 = vpop.f32.mrb[0].mxu0
        %5618 = vdwg.mxu0
        %5619 = vmatprep.subr.bf16.mxu0 %v5535
        %5620 = vmatpush1.bf16.msra.mxu0 %v5532
        %5621 = vmatprep.subr.bf16.mxu0 0
        %5622 = vmatpush1.bf16.msra.mxu0 0
        %5623 = vmatprep.subr.bf16.mxu0 0
        %5624 = vmatpush1.bf16.msra.mxu0 0
        %5625 = vmatprep.subr.bf16.mxu0 0
        %5626 = vmatpush1.bf16.msra.mxu0 0
        %5627 = vmatprep.subr.bf16.mxu0 0
        %5628 = vmatpush1.bf16.msra.mxu0 0
        %5629 = vmatprep.subr.bf16.mxu0 0
        %5630 = vmatpush1.bf16.msra.mxu0 0
        %5631 = vmatprep.subr.bf16.mxu0 0
        %5632 = vmatpush1.bf16.msra.mxu0 0
        %5633 = vmatprep.subr.bf16.mxu0 0
        %5634 = vmatpush1.bf16.msra.mxu0 0
        %5635 = vmatprep.subr.bf16.mxu0 0
        %5636 = vmatpush1.bf16.msra.mxu0 0
        %5637 = vmatprep.subr.bf16.mxu0 0
        %5638 = vmatpush1.bf16.msra.mxu0 0
        %5639 = vmatprep.subr.bf16.mxu0 0
        %5640 = vmatpush1.bf16.msra.mxu0 0
        %5641 = vmatprep.subr.bf16.mxu0 0
        %5642 = vmatpush1.bf16.msra.mxu0 0
        %5643 = vmatprep.subr.bf16.mxu0 0
        %5644 = vmatpush1.bf16.msra.mxu0 0
        %5645 = vmatprep.subr.bf16.mxu0 0
        %5646 = vmatpush1.bf16.msra.mxu0 0
        %5647 = vmatprep.subr.bf16.mxu0 0
        %5648 = vmatpush1.bf16.msra.mxu0 0
        %5649 = vmatprep.subr.bf16.mxu0 0
        %5650 = vmatpush1.bf16.msra.mxu0 0
        %5651 = vmatprep.mubr.bf16.mxu0 0
        %5652 = vmatmul.mubr.bf16.gmra.mrb[0].mxu0 %v5517
        %v5653 = vpop.f32.mrb[0].mxu0
        %v5654 = vadd.f32 0.0, %v5653
        %v5655 = vpop.f32.mrb[0].mxu0
        %v5656 = vadd.f32 0.0, %v5655
        %v5657 = vpop.f32.mrb[0].mxu0
        %v5658 = vpop.f32.mrb[0].mxu0
        %5659 = vdwg.mxu0
        %v5660 = vadd.f32 %v5450, %v5572
        %v5661 = vadd.f32 %v5451, %v5574
        %v5662 = vadd.f32 %v5452, %v5613
        %v5663 = vadd.f32 %v5453, %v5615
        %v5664 = vadd.f32 %v5454, %v5654
        %v5665 = vadd.f32 %v5455, %v5656
        %v5666 = vld [vmem:[#allocation2 + $0xa] sm:$0xff]
        %v5667 = vld [vmem:[#allocation2 + $0x12] sm:$0x3f]
        %s5668 = scalar_lea.vmem %s2, 104
        %v5669 = vld [vmem:[%s5668] sm:$0xf]
        %v5672 = vcombine.high %v5666, %v5666
        %v5674 = vunpack.c.l.s4 1983009808
        %v5675 = vunpack.c.0.s8 %v5674
        %v5676 = vlaneseq
        %v5677 = vshrl.u32 %v5676, 7
        %v5678 = vsub.s32 %v5675, %v5677
        %v5679 = vrot.slane %v5666, %v5678
        %v5681 = vunpack.c.l.s4 1983009808
        %v5682 = vunpack.c.0.s8 %v5681
        %v5683 = vlaneseq
        %v5684 = vshrl.u32 %v5683, 7
        %v5685 = vsub.s32 %v5682, %v5684
        %v5686 = vrot.slane %v5672, %v5685
        %v5687 = vcombine.high %v5679, %v5679
        %v5688 = vcombine.high %v5686, %v5686
        %v5689 = vcombine.high %v5667, %v5667
        %v5691 = vunpack.c.l.s4 1983009808
        %v5692 = vunpack.c.0.s8 %v5691
        %v5693 = vlaneseq
        %v5694 = vshrl.u32 %v5693, 7
        %v5695 = vsub.s32 %v5692, %v5694
        %v5696 = vrot.slane %v5667, %v5695
        %v5698 = vunpack.c.l.s4 1983009808
        %v5699 = vunpack.c.0.s8 %v5698
        %v5700 = vlaneseq
        %v5701 = vshrl.u32 %v5700, 7
        %v5702 = vsub.s32 %v5699, %v5701
        %v5703 = vrot.slane %v5689, %v5702
        %v5704 = vcombine.high %v5696, %v5696
        %5705 = vrot.lane.b32.xlu0 %v5679, 82
        %v5706 = vpop.permute.xlu0 %5705
        %5707 = vrot.lane.b32.xlu0 %v5687, 82
        %v5708 = vpop.permute.xlu0 %5707
        %5709 = vrot.lane.b32.xlu0 %v5686, 82
        %v5710 = vpop.permute.xlu0 %5709
        %5711 = vrot.lane.b32.xlu0 %v5688, 82
        %v5712 = vpop.permute.xlu0 %5711
        %5713 = vrot.lane.b32.xlu0 %v5696, 82
        %v5714 = vpop.permute.xlu0 %5713
        %5715 = vrot.lane.b32.xlu0 %v5704, 82
        %v5716 = vpop.permute.xlu0 %5715
        %5717 = vrot.lane.b32.xlu0 %v5703, 82
        %v5718 = vpop.permute.xlu0 %5717
        %vm5719 = vcmask 670720
        %v5720 = vsel %vm5719, %v5706, %v5708
        %v5721 = vsel %vm5719, %v5708, %v5710
        %v5722 = vsel %vm5719, %v5710, %v5712
        %v5723 = vsel %vm5719, %v5712, %v5714
        %v5724 = vsel %vm5719, %v5714, %v5716
        %v5725 = vsel %vm5719, %v5716, %v5718
        %v5727 = vsel %vm328, %v5669, 0
        %v5730 = vsel %vm262, %v5720, 0
        %v5733 = vsel %vm262, %v5721, 0
        %v5736 = vsel %vm262, %v5722, 0
        %v5739 = vsel %vm262, %v5723, 0
        %v5742 = vsel %vm262, %v5724, 0
        %v5745 = vsel %vm262, %v5725, 0
        %5747 = vmatprep.subr.bf16.mxu0 %v5733
        %5748 = vmatpush1.bf16.msra.mxu0 %v5730
        %5749 = vmatprep.subr.bf16.mxu0 0
        %5750 = vmatpush1.bf16.msra.mxu0 0
        %5751 = vmatprep.subr.bf16.mxu0 0
        %5752 = vmatpush1.bf16.msra.mxu0 0
        %5753 = vmatprep.subr.bf16.mxu0 0
        %5754 = vmatpush1.bf16.msra.mxu0 0
        %5755 = vmatprep.subr.bf16.mxu0 0
        %5756 = vmatpush1.bf16.msra.mxu0 0
        %5757 = vmatprep.subr.bf16.mxu0 0
        %5758 = vmatpush1.bf16.msra.mxu0 0
        %5759 = vmatprep.subr.bf16.mxu0 0
        %5760 = vmatpush1.bf16.msra.mxu0 0
        %5761 = vmatprep.subr.bf16.mxu0 0
        %5762 = vmatpush1.bf16.msra.mxu0 0
        %5763 = vmatprep.subr.bf16.mxu0 0
        %5764 = vmatpush1.bf16.msra.mxu0 0
        %5765 = vmatprep.subr.bf16.mxu0 0
        %5766 = vmatpush1.bf16.msra.mxu0 0
        %5767 = vmatprep.subr.bf16.mxu0 0
        %5768 = vmatpush1.bf16.msra.mxu0 0
        %5769 = vmatprep.subr.bf16.mxu0 0
        %5770 = vmatpush1.bf16.msra.mxu0 0
        %5771 = vmatprep.subr.bf16.mxu0 0
        %5772 = vmatpush1.bf16.msra.mxu0 0
        %5773 = vmatprep.subr.bf16.mxu0 0
        %5774 = vmatpush1.bf16.msra.mxu0 0
        %5775 = vmatprep.subr.bf16.mxu0 0
        %5776 = vmatpush1.bf16.msra.mxu0 0
        %5777 = vmatprep.subr.bf16.mxu0 0
        %5778 = vmatpush1.bf16.msra.mxu0 0
        %5779 = vmatprep.mubr.bf16.mxu0 0
        %5780 = vmatmul.mubr.bf16.gmra.mrb[0].mxu0 %v5727
        %v5781 = vpop.f32.mrb[0].mxu0
        %v5782 = vadd.f32 0.0, %v5781
        %v5783 = vpop.f32.mrb[0].mxu0
        %v5784 = vadd.f32 0.0, %v5783
        %v5785 = vpop.f32.mrb[0].mxu0
        %v5786 = vpop.f32.mrb[0].mxu0
        %5787 = vdwg.mxu0
        %5788 = vmatprep.subr.bf16.mxu0 %v5739
        %5789 = vmatpush1.bf16.msra.mxu0 %v5736
        %5790 = vmatprep.subr.bf16.mxu0 0
        %5791 = vmatpush1.bf16.msra.mxu0 0
        %5792 = vmatprep.subr.bf16.mxu0 0
        %5793 = vmatpush1.bf16.msra.mxu0 0
        %5794 = vmatprep.subr.bf16.mxu0 0
        %5795 = vmatpush1.bf16.msra.mxu0 0
        %5796 = vmatprep.subr.bf16.mxu0 0
        %5797 = vmatpush1.bf16.msra.mxu0 0
        %5798 = vmatprep.subr.bf16.mxu0 0
        %5799 = vmatpush1.bf16.msra.mxu0 0
        %5800 = vmatprep.subr.bf16.mxu0 0
        %5801 = vmatpush1.bf16.msra.mxu0 0
        %5802 = vmatprep.subr.bf16.mxu0 0
        %5803 = vmatpush1.bf16.msra.mxu0 0
        %5804 = vmatprep.subr.bf16.mxu0 0
        %5805 = vmatpush1.bf16.msra.mxu0 0
        %5806 = vmatprep.subr.bf16.mxu0 0
        %5807 = vmatpush1.bf16.msra.mxu0 0
        %5808 = vmatprep.subr.bf16.mxu0 0
        %5809 = vmatpush1.bf16.msra.mxu0 0
        %5810 = vmatprep.subr.bf16.mxu0 0
        %5811 = vmatpush1.bf16.msra.mxu0 0
        %5812 = vmatprep.subr.bf16.mxu0 0
        %5813 = vmatpush1.bf16.msra.mxu0 0
        %5814 = vmatprep.subr.bf16.mxu0 0
        %5815 = vmatpush1.bf16.msra.mxu0 0
        %5816 = vmatprep.subr.bf16.mxu0 0
        %5817 = vmatpush1.bf16.msra.mxu0 0
        %5818 = vmatprep.subr.bf16.mxu0 0
        %5819 = vmatpush1.bf16.msra.mxu0 0
        %5820 = vmatprep.mubr.bf16.mxu0 0
        %5821 = vmatmul.mubr.bf16.gmra.mrb[0].mxu0 %v5727
        %v5822 = vpop.f32.mrb[0].mxu0
        %v5823 = vadd.f32 0.0, %v5822
        %v5824 = vpop.f32.mrb[0].mxu0
        %v5825 = vadd.f32 0.0, %v5824
        %v5826 = vpop.f32.mrb[0].mxu0
        %v5827 = vpop.f32.mrb[0].mxu0
        %5828 = vdwg.mxu0
        %5829 = vmatprep.subr.bf16.mxu0 %v5745
        %5830 = vmatpush1.bf16.msra.mxu0 %v5742
        %5831 = vmatprep.subr.bf16.mxu0 0
        %5832 = vmatpush1.bf16.msra.mxu0 0
        %5833 = vmatprep.subr.bf16.mxu0 0
        %5834 = vmatpush1.bf16.msra.mxu0 0
        %5835 = vmatprep.subr.bf16.mxu0 0
        %5836 = vmatpush1.bf16.msra.mxu0 0
        %5837 = vmatprep.subr.bf16.mxu0 0
        %5838 = vmatpush1.bf16.msra.mxu0 0
        %5839 = vmatprep.subr.bf16.mxu0 0
        %5840 = vmatpush1.bf16.msra.mxu0 0
        %5841 = vmatprep.subr.bf16.mxu0 0
        %5842 = vmatpush1.bf16.msra.mxu0 0
        %5843 = vmatprep.subr.bf16.mxu0 0
        %5844 = vmatpush1.bf16.msra.mxu0 0
        %5845 = vmatprep.subr.bf16.mxu0 0
        %5846 = vmatpush1.bf16.msra.mxu0 0
        %5847 = vmatprep.subr.bf16.mxu0 0
        %5848 = vmatpush1.bf16.msra.mxu0 0
        %5849 = vmatprep.subr.bf16.mxu0 0
        %5850 = vmatpush1.bf16.msra.mxu0 0
        %5851 = vmatprep.subr.bf16.mxu0 0
        %5852 = vmatpush1.bf16.msra.mxu0 0
        %5853 = vmatprep.subr.bf16.mxu0 0
        %5854 = vmatpush1.bf16.msra.mxu0 0
        %5855 = vmatprep.subr.bf16.mxu0 0
        %5856 = vmatpush1.bf16.msra.mxu0 0
        %5857 = vmatprep.subr.bf16.mxu0 0
        %5858 = vmatpush1.bf16.msra.mxu0 0
        %5859 = vmatprep.subr.bf16.mxu0 0
        %5860 = vmatpush1.bf16.msra.mxu0 0
        %5861 = vmatprep.mubr.bf16.mxu0 0
        %5862 = vmatmul.mubr.bf16.gmra.mrb[0].mxu0 %v5727
        %v5863 = vpop.f32.mrb[0].mxu0
        %v5864 = vadd.f32 0.0, %v5863
        %v5865 = vpop.f32.mrb[0].mxu0
        %v5866 = vadd.f32 0.0, %v5865
        %v5867 = vpop.f32.mrb[0].mxu0
        %v5868 = vpop.f32.mrb[0].mxu0
        %5869 = vdwg.mxu0
        %v5870 = vadd.f32 %v5660, %v5782
        %v5871 = vadd.f32 %v5661, %v5784
        %v5872 = vadd.f32 %v5662, %v5823
        %v5873 = vadd.f32 %v5663, %v5825
        %v5874 = vadd.f32 %v5664, %v5864
        %v5875 = vadd.f32 %v5665, %v5866
        %5876 = vst [vmem:[%s249] sm:$0xff] %v5870
        %5877 = vst [vmem:[%s249 + $0x8] sm:$0xff] %v5871
        %5878 = vst [vmem:[%s249 + $0x10] sm:$0xff] %v5872
        %5879 = vst [vmem:[%s249 + $0x18] sm:$0xff] %v5873
        %5880 = vst [vmem:[%s249 + $0x20] sm:$0xff] %v5874
        %5881 = vst [vmem:[%s249 + $0x28] sm:$0xff] %v5875
        %s5882 = sand.u32 %s124, 1
        %s5883 = scalar_lea.sflag [#allocation5], %s5882
        %s5884 = sand.u32 %s124, 1
        %s5885 = smul.addr %s5884, 48
        %s5886 = scalar_lea.vmem [#allocation8], %s5885
        // Predicated region
        $region41: #{tpu_custom_call.1} parent=31 // pred_check
          %p5887 = pneg %p134
        $region42: #{tpu_custom_call.1} parent=31 // pred_check_branch
          %5889 = sbr.rel (%p5887) target = $region44
        $region43: #{tpu_custom_call.1} parent=31 // pred_region
          %s5890 = smul.u32 6, %s28
          %s5892 = ssub.s32 768, 768
          %5893 = vsyncadd %s5883, %s5892
          %s5894 = smul.addr %s27, 30
          %s5895 = sadd.s32 %s5890, %s5894
          %s5896 = smul.addr %s5895, 128
          %s5897 = scalar_lea.hbm %s3, %s5896
          %s5899 = sshll.u32 %s5886, 4
          %s5900 = int_to_ptr.vmem [resolvable:$true] %s5899
          %5902 = dma.vmem_to_hbm [thread:$0]  %s5900, 768, %s5897, %s5883
        $region44: #{tpu_custom_call.1} parent=31 // pred_fallthru
          _
      $region32: #{tpu_custom_call.1} parent=5 // pred_fallthru
        _
      %p5903 = scmp.le.s32.totalorder 2, %s18
      // Predicated region
      $region45: #{tpu_custom_call.1} parent=5 // pred_check
        %p5904 = pneg %p5903
      $region46: #{tpu_custom_call.1} parent=5 // pred_check_branch
        %5906 = sbr.rel (%p5904) target = $region48
      $region47: #{tpu_custom_call.1} parent=5 // pred_region
        %s5907 = ssub.s32 %s18, 2
        // Predicated region
        $region49: #{tpu_custom_call.1} parent=47 // pred_check
          %p5908 = pneg %p140
        $region50: #{tpu_custom_call.1} parent=47 // pred_check_branch
          %5910 = sbr.rel (%p5908) target = $region52
        $region51: #{tpu_custom_call.1} parent=47 // pred_region
          %s5911 = sand.u32 %s125, 1
          %s5912 = scalar_lea.sflag [#allocation5], %s5911
          %s5913 = sand.u32 %s125, 1
          %s5914 = smul.addr %s5913, 48
          %s5915 = scalar_lea.vmem [#allocation8], %s5914
          %5916 = dma.done %s5912, 768
        $region52: #{tpu_custom_call.1} parent=47 // pred_fallthru
          _
      $region48: #{tpu_custom_call.1} parent=5 // pred_fallthru
        _
    $region6: #{tpu_custom_call.1} parent=1 // loop_footer
      %s22 = sadd.s32 1, %s18
    $region7: #{tpu_custom_call.1} parent=1 // loop_footer_branch
      %17 = sbr.rel target = $region3
    $region8: #{tpu_custom_call.1} parent=1 // loop_exit
      _
    %5917 = vsyncpa [#allocation4], 1
    %s5918 = scalar_lea.sflag [#allocation4], 1
    %5919 = vsyncpa %s5918, 1
    %5920 = vsyncpa [#allocation7], 1
    %s5921 = scalar_lea.sflag [#allocation7], 1
    %5922 = vsyncpa %s5921, 1
    %5923 = vsyncpa [#allocation5], 1
    %s5924 = scalar_lea.sflag [#allocation5], 1
    %5925 = vsyncpa %s5924, 1

</llo_original>
